<compile_context>
chip_gen: v7x
topology: tpu7x:2x2x1
jax: 0.10.0
libtpu: 0.0.40
codegen_flags: <defaults>
</compile_context>

<pallas_src>
import jax
import jax.numpy as jnp
from jax import lax
from jax.experimental import pallas as pl
from jax.experimental.pallas import tpu as pltpu

TOKENS_PER_STEP = 2048   # max tokens gathered per grid step (was 256)


def _round_up(x: int, m: int) -> int:
    return (x + m - 1) // m * m


def _embed_onehot_kernel(idx_ref, table_ref, out_ref):
    """One grid step: gather rt*pack embeddings via one-hot MXU matmuls.

    idx_ref:   (rt, pack) int32   -- token ids, `pack` tokens per output row.
    table_ref: (V, D)     float   -- full embedding table (VMEM resident).
    out_ref:   (rt, pack*D) float -- lane-dense packed output tile.
    """
    rt, pack = idx_ref.shape
    v = table_ref.shape[0]
    d = table_ref.shape[1]

    ids = idx_ref[...]                                     # (rt, pack)
    table = table_ref[...]                                 # (V, D), hoisted
    col = lax.broadcasted_iota(jnp.int32, (rt, v), 1)      # hoisted once

    for g in range(pack):                                  # small static loop
        onehot = (ids[:, g:g + 1] == col).astype(table.dtype)   # (rt, V)
        # One-hot rows are exact, so precision=HIGHEST makes the gathered rows
        # bit-exact copies of the stored embeddings (nn.Embedding semantics).
        row = jnp.dot(onehot, table,
                      preferred_element_type=jnp.float32,
                      precision=lax.Precision.HIGHEST)
        out_ref[:, g * d:(g + 1) * d] = row.astype(out_ref.dtype)


def _gather_call(idx2d, table, *, rt, pack, num_steps, vmem_limit,
                 single_buffer_table):
    V, D = table.shape
    rt_total = idx2d.shape[0]

    if single_buffer_table:
        # Constant index_map => the table is DMA'd once; one buffer suffices.
        table_spec = pl.BlockSpec((V, D), lambda i: (0, 0),
                                  pipeline_mode=pl.Buffered(1))
    else:
        table_spec = pl.BlockSpec((V, D), lambda i: (0, 0))

    return pl.pallas_call(
        _embed_onehot_kernel,
        out_shape=jax.ShapeDtypeStruct((rt_total, pack * D), table.dtype),
        grid=(num_steps,),
        in_specs=[
            pl.BlockSpec((rt, pack), lambda i: (i, 0)),
            table_spec,
        ],
        out_specs=pl.BlockSpec((rt, pack * D), lambda i: (i, 0)),
        compiler_params=pltpu.CompilerParams(
            dimension_semantics=("parallel",),
            vmem_limit_bytes=vmem_limit,
        ),
    )(idx2d, table)


def user_embedding_forward(user_inputs, table, *,
                           tokens_per_step=TOKENS_PER_STEP):
    """Equivalent of UserEmbeddingLayer.forward: table[user_inputs]."""
    V, D = table.shape
    idx_shape = user_inputs.shape
    n_tokens = int(user_inputs.size)
    N = max(n_tokens, 1)

    # Clamp so out-of-range ids cannot trigger silent OOB VMEM reads.
    # (PyTorch nn.Embedding would raise; here OOB ids map to row V-1.)
    flat_idx = jnp.clip(user_inputs.reshape(-1).astype(jnp.int32), 0, V - 1)

    # Pack `pack` tokens per 128-lane output row when D divides 128.
    pack = 128 // D if (D < 128 and 128 % D == 0) else 1
    min_tile = 8 * pack                      # keeps rt a multiple of 8 sublanes

    # Tile sizing: big enough to amortise per-step overhead (<= tokens_per_step),
    # small enough that tiny inputs don't pad to thousands of tokens, and large
    # inputs keep >= ~4 grid steps so v7x can split them across 2 TensorCores.
    tile = max(min_tile,
               min(tokens_per_step, _round_up(-(-N // 4), min_tile)))

    n_pad = _round_up(N, tile)
    pad = n_pad - n_tokens
    if pad:
        flat_idx = jnp.concatenate([flat_idx, jnp.zeros((pad,), jnp.int32)])

    rt = tile // pack                        # packed output rows per grid step
    rt_total = n_pad // pack
    num_steps = n_pad // tile

    # (rt_total, pack): token t lives at row t // pack, group t % pack, which
    # matches the row-major unpacking of the (rt_total, pack*D) output below.
    idx2d = flat_idx.reshape(rt_total, pack)

    # VMEM budget: 1x table (single-buffered) + 2x idx blocks + 2x out blocks,
    # each padded to (8, 128) layout tiles, plus headroom for compiler scratch.
    itemsize = jnp.dtype(table.dtype).itemsize
    table_vmem = _round_up(V, 8) * _round_up(D, 128) * itemsize
    idx_vmem = 2 * rt * 128 * 4
    out_vmem = 2 * rt * _round_up(pack * D, 128) * itemsize
    vmem_limit = int(min(max(table_vmem + idx_vmem + out_vmem + (8 << 20),
                             16 << 20), 100 << 20))
    # TODO(synk): if table_vmem alone approaches the per-core VMEM budget
    # (v7x: 64 MiB/TC) the one-hot path stops fitting; a large-V HBM-resident
    # DMA-gather path is needed and is not implemented here.

    try:
        out_packed = _gather_call(idx2d, table, rt=rt, pack=pack,
                                  num_steps=num_steps, vmem_limit=vmem_limit,
                                  single_buffer_table=True)
    except Exception:
        # pl.Buffered(1) rejected by this jax/Mosaic build: fall back to the
        # semantically identical default double-buffered table operand.
        out_packed = _gather_call(idx2d, table, rt=rt, pack=pack,
                                  num_steps=num_steps, vmem_limit=vmem_limit,
                                  single_buffer_table=False)

    # (rt_total, pack*D) -> (n_pad, D) -> (..., D)
    out_flat = out_packed.reshape(n_pad, D)[:n_tokens]
    return out_flat.reshape(*idx_shape, D)


if __name__ == "__main__":
    key = jax.random.PRNGKey(0)
    k_table, k_idx = jax.random.split(key)

    # nn.Embedding(num_users, embedding_dim) with deterministic weights.
    num_users, embedding_dim = 64, 32
    B, S = 2, 8

    table = jax.random.normal(k_table, (num_users, embedding_dim),
                              dtype=jnp.float32)
    user_inputs = jax.random.randint(k_idx, (B, S), 0, num_users,
                                     dtype=jnp.int32)

    out = user_embedding_forward(user_inputs, table)
    jax.block_until_ready(out)

    # Reference: plain-JAX gather, same semantics as nn.Embedding lookup.
    ref = table[user_inputs]
    assert out.shape == (B, S, embedding_dim)
    assert out.dtype == jnp.float32
    assert jnp.allclose(out, ref)

    print("KERNEL_OK")
</pallas_src>

<mosaic_0001>
module attributes {stable_mosaic.version = 11 : i64} {
  func.func @_embed_onehot_kernel(%arg0: i32, %arg1: memref<8x4xi32, #tpu.memory_space<vmem>>, %arg2: memref<64x32xf32, #tpu.memory_space<vmem>>, %arg3: memref<8x128xf32, #tpu.memory_space<vmem>>) attributes {dimension_semantics = [#tpu.dimension_semantics<parallel>], iteration_bounds = array<i64: 1>, scalar_prefetch = 0 : i64, scratch_operands = 0 : i64, tpu.core_type = #tpu.core_type<tc>, window_params = [{transform_indices = @transform_0, window_bounds = array<i64: 8, 4>}, {pipeline_mode = #tpu.pipeline_mode<synchronous>, transform_indices = @transform_1, window_bounds = array<i64: 64, 32>}, {transform_indices = @transform_2, window_bounds = array<i64: 8, 128>}]} {
    %c0 = arith.constant 0 : index
    %c0_0 = arith.constant 0 : index
    %0 = vector.load %arg1[%c0, %c0_0] : memref<8x4xi32, #tpu.memory_space<vmem>>, vector<8x4xi32>
    %c0_1 = arith.constant 0 : index
    %c0_2 = arith.constant 0 : index
    %1 = vector.load %arg2[%c0_1, %c0_2] : memref<64x32xf32, #tpu.memory_space<vmem>>, vector<64x32xf32>
    %2 = tpu.iota {dimensions = array<i32: 1>} : vector<8x64xi32>
    %3 = vector.extract_strided_slice %0 {offsets = [0, 0], sizes = [8, 1], strides = [1, 1]} : vector<8x4xi32> to vector<8x1xi32>
    %4 = vector.broadcast %3 : vector<8x1xi32> to vector<8x64xi32>
    %5 = arith.cmpi eq, %4, %2 : vector<8x64xi32>
    %6 = arith.extui %5 : vector<8x64xi1> to vector<8x64xi32>
    %7 = arith.sitofp %6 : vector<8x64xi32> to vector<8x64xf32>
    %cst = arith.constant dense<0.000000e+00> : vector<8x32xf32>
    %8 = tpu.matmul %7, %1, %cst {dimension_numbers = #tpu.dot_dimension_numbers<[1], [0], [0], [1], [0, 0, 1, 1], [], []>, precision = #tpu.contract_precision<fp32>} : vector<8x64xf32>, vector<64x32xf32>, vector<8x32xf32> -> vector<8x32xf32>
    %c0_3 = arith.constant 0 : index
    %c0_4 = arith.constant 0 : index
    %9 = vector.load %arg3[%c0_3, %c0_4] : memref<8x128xf32, #tpu.memory_space<vmem>>, vector<8x32xf32>
    tpu.vector_store %arg3[%c0_3, %c0_4], %8 {strides = array<i32>} : memref<8x128xf32, #tpu.memory_space<vmem>>, vector<8x32xf32>,
    %10 = vector.extract_strided_slice %0 {offsets = [0, 1], sizes = [8, 1], strides = [1, 1]} : vector<8x4xi32> to vector<8x1xi32>
    %11 = vector.broadcast %10 : vector<8x1xi32> to vector<8x64xi32>
    %12 = arith.cmpi eq, %11, %2 : vector<8x64xi32>
    %13 = arith.extui %12 : vector<8x64xi1> to vector<8x64xi32>
    %14 = arith.sitofp %13 : vector<8x64xi32> to vector<8x64xf32>
    %cst_5 = arith.constant dense<0.000000e+00> : vector<8x32xf32>
    %15 = tpu.matmul %14, %1, %cst_5 {dimension_numbers = #tpu.dot_dimension_numbers<[1], [0], [0], [1], [0, 0, 1, 1], [], []>, precision = #tpu.contract_precision<fp32>} : vector<8x64xf32>, vector<64x32xf32>, vector<8x32xf32> -> vector<8x32xf32>
    %c0_6 = arith.constant 0 : index
    %c32 = arith.constant 32 : index
    %16 = vector.load %arg3[%c0_6, %c32] : memref<8x128xf32, #tpu.memory_space<vmem>>, vector<8x32xf32>
    tpu.vector_store %arg3[%c0_6, %c32], %15 {strides = array<i32>} : memref<8x128xf32, #tpu.memory_space<vmem>>, vector<8x32xf32>,
    %17 = vector.extract_strided_slice %0 {offsets = [0, 2], sizes = [8, 1], strides = [1, 1]} : vector<8x4xi32> to vector<8x1xi32>
    %18 = vector.broadcast %17 : vector<8x1xi32> to vector<8x64xi32>
    %19 = arith.cmpi eq, %18, %2 : vector<8x64xi32>
    %20 = arith.extui %19 : vector<8x64xi1> to vector<8x64xi32>
    %21 = arith.sitofp %20 : vector<8x64xi32> to vector<8x64xf32>
    %cst_7 = arith.constant dense<0.000000e+00> : vector<8x32xf32>
    %22 = tpu.matmul %21, %1, %cst_7 {dimension_numbers = #tpu.dot_dimension_numbers<[1], [0], [0], [1], [0, 0, 1, 1], [], []>, precision = #tpu.contract_precision<fp32>} : vector<8x64xf32>, vector<64x32xf32>, vector<8x32xf32> -> vector<8x32xf32>
    %c0_8 = arith.constant 0 : index
    %c64 = arith.constant 64 : index
    %23 = vector.load %arg3[%c0_8, %c64] : memref<8x128xf32, #tpu.memory_space<vmem>>, vector<8x32xf32>
    tpu.vector_store %arg3[%c0_8, %c64], %22 {strides = array<i32>} : memref<8x128xf32, #tpu.memory_space<vmem>>, vector<8x32xf32>,
    %24 = vector.extract_strided_slice %0 {offsets = [0, 3], sizes = [8, 1], strides = [1, 1]} : vector<8x4xi32> to vector<8x1xi32>
    %25 = vector.broadcast %24 : vector<8x1xi32> to vector<8x64xi32>
    %26 = arith.cmpi eq, %25, %2 : vector<8x64xi32>
    %27 = arith.extui %26 : vector<8x64xi1> to vector<8x64xi32>
    %28 = arith.sitofp %27 : vector<8x64xi32> to vector<8x64xf32>
    %cst_9 = arith.constant dense<0.000000e+00> : vector<8x32xf32>
    %29 = tpu.matmul %28, %1, %cst_9 {dimension_numbers = #tpu.dot_dimension_numbers<[1], [0], [0], [1], [0, 0, 1, 1], [], []>, precision = #tpu.contract_precision<fp32>} : vector<8x64xf32>, vector<64x32xf32>, vector<8x32xf32> -> vector<8x32xf32>
    %c0_10 = arith.constant 0 : index
    %c96 = arith.constant 96 : index
    %30 = vector.load %arg3[%c0_10, %c96] : memref<8x128xf32, #tpu.memory_space<vmem>>, vector<8x32xf32>
    tpu.vector_store %arg3[%c0_10, %c96], %29 {strides = array<i32>} : memref<8x128xf32, #tpu.memory_space<vmem>>, vector<8x32xf32>,
    return
  }
  func.func @transform_0(%arg0: i32) -> (i32, i32) {
    %c0_i32 = arith.constant 0 : i32
    %c0_i32_0 = arith.constant 0 : i32
    return %arg0, %c0_i32 : i32, i32
  }
  func.func @transform_1(%arg0: i32) -> (i32, i32) {
    %c0_i32 = arith.constant 0 : i32
    %c0_i32_0 = arith.constant 0 : i32
    %c0_i32_1 = arith.constant 0 : i32
    return %c0_i32, %c0_i32_0 : i32, i32
  }
  func.func @transform_2(%arg0: i32) -> (i32, i32) {
    %c0_i32 = arith.constant 0 : i32
    %c0_i32_0 = arith.constant 0 : i32
    return %arg0, %c0_i32 : i32, i32
  }
}

module attributes {stable_mosaic.version = 11 : i64} {
  func.func @_embed_onehot_kernel(%arg0: i32, %arg1: memref<8x4xi32, #tpu.memory_space<vmem>>, %arg2: memref<64x32xf32, #tpu.memory_space<vmem>>, %arg3: memref<8x128xf32, #tpu.memory_space<vmem>>) attributes {dimension_semantics = [#tpu.dimension_semantics<parallel>], iteration_bounds = array<i64: 1>, scalar_prefetch = 0 : i64, scratch_operands = 0 : i64, tpu.core_type = #tpu.core_type<tc>, window_params = [{transform_indices = @transform_0, window_bounds = array<i64: 8, 4>}, {pipeline_mode = #tpu.pipeline_mode<synchronous>, transform_indices = @transform_1, window_bounds = array<i64: 64, 32>}, {transform_indices = @transform_2, window_bounds = array<i64: 8, 128>}]} {
    %c0 = arith.constant 0 : index
    %c0_0 = arith.constant 0 : index
    %0 = vector.load %arg1[%c0, %c0_0] : memref<8x4xi32, #tpu.memory_space<vmem>>, vector<8x4xi32>
    %c0_1 = arith.constant 0 : index
    %c0_2 = arith.constant 0 : index
    %1 = vector.load %arg2[%c0_1, %c0_2] : memref<64x32xf32, #tpu.memory_space<vmem>>, vector<64x32xf32>
    %2 = tpu.iota {dimensions = array<i32: 1>} : vector<8x64xi32>
    %3 = vector.extract_strided_slice %0 {offsets = [0, 0], sizes = [8, 1], strides = [1, 1]} : vector<8x4xi32> to vector<8x1xi32>
    %4 = vector.broadcast %3 : vector<8x1xi32> to vector<8x64xi32>
    %5 = arith.cmpi eq, %4, %2 : vector<8x64xi32>
    %6 = arith.extui %5 : vector<8x64xi1> to vector<8x64xi32>
    %7 = arith.sitofp %6 : vector<8x64xi32> to vector<8x64xf32>
    %cst = arith.constant dense<0.000000e+00> : vector<8x32xf32>
    %8 = tpu.matmul %7, %1, %cst {dimension_numbers = #tpu.dot_dimension_numbers<[1], [0], [0], [1], [0, 0, 1, 1], [], []>, precision = #tpu.contract_precision<fp32>} : vector<8x64xf32>, vector<64x32xf32>, vector<8x32xf32> -> vector<8x32xf32>
    %c0_3 = arith.constant 0 : index
    %c0_4 = arith.constant 0 : index
    %9 = vector.load %arg3[%c0_3, %c0_4] : memref<8x128xf32, #tpu.memory_space<vmem>>, vector<8x32xf32>
    tpu.vector_store %arg3[%c0_3, %c0_4], %8 {strides = array<i32>} : memref<8x128xf32, #tpu.memory_space<vmem>>, vector<8x32xf32>,
    %10 = vector.extract_strided_slice %0 {offsets = [0, 1], sizes = [8, 1], strides = [1, 1]} : vector<8x4xi32> to vector<8x1xi32>
    %11 = vector.broadcast %10 : vector<8x1xi32> to vector<8x64xi32>
    %12 = arith.cmpi eq, %11, %2 : vector<8x64xi32>
    %13 = arith.extui %12 : vector<8x64xi1> to vector<8x64xi32>
    %14 = arith.sitofp %13 : vector<8x64xi32> to vector<8x64xf32>
    %cst_5 = arith.constant dense<0.000000e+00> : vector<8x32xf32>
    %15 = tpu.matmul %14, %1, %cst_5 {dimension_numbers = #tpu.dot_dimension_numbers<[1], [0], [0], [1], [0, 0, 1, 1], [], []>, precision = #tpu.contract_precision<fp32>} : vector<8x64xf32>, vector<64x32xf32>, vector<8x32xf32> -> vector<8x32xf32>
    %c0_6 = arith.constant 0 : index
    %c32 = arith.constant 32 : index
    %16 = vector.load %arg3[%c0_6, %c32] : memref<8x128xf32, #tpu.memory_space<vmem>>, vector<8x32xf32>
    tpu.vector_store %arg3[%c0_6, %c32], %15 {strides = array<i32>} : memref<8x128xf32, #tpu.memory_space<vmem>>, vector<8x32xf32>,
    %17 = vector.extract_strided_slice %0 {offsets = [0, 2], sizes = [8, 1], strides = [1, 1]} : vector<8x4xi32> to vector<8x1xi32>
    %18 = vector.broadcast %17 : vector<8x1xi32> to vector<8x64xi32>
    %19 = arith.cmpi eq, %18, %2 : vector<8x64xi32>
    %20 = arith.extui %19 : vector<8x64xi1> to vector<8x64xi32>
    %21 = arith.sitofp %20 : vector<8x64xi32> to vector<8x64xf32>
    %cst_7 = arith.constant dense<0.000000e+00> : vector<8x32xf32>
    %22 = tpu.matmul %21, %1, %cst_7 {dimension_numbers = #tpu.dot_dimension_numbers<[1], [0], [0], [1], [0, 0, 1, 1], [], []>, precision = #tpu.contract_precision<fp32>} : vector<8x64xf32>, vector<64x32xf32>, vector<8x32xf32> -> vector<8x32xf32>
    %c0_8 = arith.constant 0 : index
    %c64 = arith.constant 64 : index
    %23 = vector.load %arg3[%c0_8, %c64] : memref<8x128xf32, #tpu.memory_space<vmem>>, vector<8x32xf32>
    tpu.vector_store %arg3[%c0_8, %c64], %22 {strides = array<i32>} : memref<8x128xf32, #tpu.memory_space<vmem>>, vector<8x32xf32>,
    %24 = vector.extract_strided_slice %0 {offsets = [0, 3], sizes = [8, 1], strides = [1, 1]} : vector<8x4xi32> to vector<8x1xi32>
    %25 = vector.broadcast %24 : vector<8x1xi32> to vector<8x64xi32>
    %26 = arith.cmpi eq, %25, %2 : vector<8x64xi32>
    %27 = arith.extui %26 : vector<8x64xi1> to vector<8x64xi32>
    %28 = arith.sitofp %27 : vector<8x64xi32> to vector<8x64xf32>
    %cst_9 = arith.constant dense<0.000000e+00> : vector<8x32xf32>
    %29 = tpu.matmul %28, %1, %cst_9 {dimension_numbers = #tpu.dot_dimension_numbers<[1], [0], [0], [1], [0, 0, 1, 1], [], []>, precision = #tpu.contract_precision<fp32>} : vector<8x64xf32>, vector<64x32xf32>, vector<8x32xf32> -> vector<8x32xf32>
    %c0_10 = arith.constant 0 : index
    %c96 = arith.constant 96 : index
    %30 = vector.load %arg3[%c0_10, %c96] : memref<8x128xf32, #tpu.memory_space<vmem>>, vector<8x32xf32>
    tpu.vector_store %arg3[%c0_10, %c96], %29 {strides = array<i32>} : memref<8x128xf32, #tpu.memory_space<vmem>>, vector<8x32xf32>,
    return
  }
  func.func @transform_0(%arg0: i32) -> (i32, i32) {
    %c0_i32 = arith.constant 0 : i32
    %c0_i32_0 = arith.constant 0 : i32
    return %arg0, %c0_i32 : i32, i32
  }
  func.func @transform_1(%arg0: i32) -> (i32, i32) {
    %c0_i32 = arith.constant 0 : i32
    %c0_i32_0 = arith.constant 0 : i32
    %c0_i32_1 = arith.constant 0 : i32
    return %c0_i32, %c0_i32_0 : i32, i32
  }
  func.func @transform_2(%arg0: i32) -> (i32, i32) {
    %c0_i32 = arith.constant 0 : i32
    %c0_i32_0 = arith.constant 0 : i32
    return %arg0, %c0_i32 : i32, i32
  }
}

</mosaic_0001>

<llo_original>
// kernel: tpu_custom_call.1
$region0: #{tpu_custom_call.1}
  #allocation0 [shape = 'u32[]', space=smem, size = 0x4, offset = 0x4, fixed_abs, tag = 'smem constant byte address 0x4 - core index']
  #allocation1 [shape = 'u32[144,128]{1,0:T(1,128)}', space=vmem, size = 0x12000, scoped, tag = 'internal scratch']
  %s0 = inlined_call_operand.vmem [shape: s32[8,4], index: 0, kind: input, shape index: {}]
  %s1 = inlined_call_operand.vmem [shape: f32[64,32], index: 1, kind: input, shape index: {}]
  %s2 = inlined_call_operand.hbm [shape: f32[8,128], index: 2, kind: output, shape index: {}]
  %s3 = sld [smem:[#allocation0]]
  $region18: #{tpu_custom_call.1} parent=0
    _
  %s5 = ssub.s32 1, %s3
  %s6 = scalar_select 0, %s5, %s3
  $region1: #{tpu_custom_call.1} parent=0
    #allocation2 [shape = 'u8[4096]{0}', space=vmem, size = 0x1000, scoped, tag = 'output window, operand 0, single buffered']
    #allocation3 [shape = 's32[1]{0}', space=sflag, size = 0x4, scoped, tag = 'scoped memory for tpu_custom_call.1']
    %7 = vsyncpa [#allocation3], 0
    // Predicated region
    $region2: #{tpu_custom_call.1} parent=1 // pred_check
      _
    $region3: #{tpu_custom_call.1} parent=1 // pred_check_branch
      %9 = sbr.rel (0) target = $region5
    $region4: #{tpu_custom_call.1} parent=1 // pred_region
      _
    $region5: #{tpu_custom_call.1} parent=1 // pred_fallthru
      _
    // Predicated region
    $region6: #{tpu_custom_call.1} parent=1 // pred_check
      _
    $region7: #{tpu_custom_call.1} parent=1 // pred_check_branch
      %11 = sbr.rel (0) target = $region9
    $region8: #{tpu_custom_call.1} parent=1 // pred_region
      _
    $region9: #{tpu_custom_call.1} parent=1 // pred_fallthru
      _
    %v12 = vld [vmem:[%s0] sm:$0xff]
    %v13 = vld [vmem:[%s1] sm:$0xff]
    %v14 = vld [vmem:[%s1 + $0x8] sm:$0xff]
    %v15 = vld [vmem:[%s1 + $0x10] sm:$0xff]
    %v16 = vld [vmem:[%s1 + $0x18] sm:$0xff]
    %v17 = vld [vmem:[%s1 + $0x20] sm:$0xff]
    %v18 = vld [vmem:[%s1 + $0x28] sm:$0xff]
    %v19 = vld [vmem:[%s1 + $0x30] sm:$0xff]
    %v20 = vld [vmem:[%s1 + $0x38] sm:$0xff]
    %v21 = vlaneseq
    %v22 = vand.u32 %v21, 127
    %23 = vset.pattern.permute.xlu0 0
    %24 = vperm.xlu0 %23, %v12
    %v25 = vpop.permute.xlu0 %24
    %vm26 = vcmp.eq.s32.totalorder %v25, %v22
    %v27 = vsel %vm26, 1, 0
    %v28 = vcvt.s32.f32 %v27
    %vm29 = vcmask 523264
    %v31 = vsel %vm29, %v28, 0
    %33 = vmatprep.subr.mxu0 0.0
    %v34 = vand.u32 %v13, 4294901760
    %35 = vmatpush1.msra.mxu0 %v34
    %36 = vmatprep.subr.mxu0 0.0
    %v37 = vand.u32 %v14, 4294901760
    %38 = vmatpush1.msra.mxu0 %v37
    %39 = vmatprep.subr.mxu0 0.0
    %v40 = vand.u32 %v15, 4294901760
    %41 = vmatpush1.msra.mxu0 %v40
    %42 = vmatprep.subr.mxu0 0.0
    %v43 = vand.u32 %v16, 4294901760
    %44 = vmatpush1.msra.mxu0 %v43
    %45 = vmatprep.subr.mxu0 0.0
    %v46 = vand.u32 %v17, 4294901760
    %47 = vmatpush1.msra.mxu0 %v46
    %48 = vmatprep.subr.mxu0 0.0
    %v49 = vand.u32 %v18, 4294901760
    %50 = vmatpush1.msra.mxu0 %v49
    %51 = vmatprep.subr.mxu0 0.0
    %v52 = vand.u32 %v19, 4294901760
    %53 = vmatpush1.msra.mxu0 %v52
    %54 = vmatprep.subr.mxu0 0.0
    %v55 = vand.u32 %v20, 4294901760
    %56 = vmatpush1.msra.mxu0 %v55
    %57 = vmatprep.subr.mxu0 0.0
    %58 = vmatpush1.msra.mxu0 0.0
    %59 = vmatprep.subr.mxu0 0.0
    %60 = vmatpush1.msra.mxu0 0.0
    %61 = vmatprep.subr.mxu0 0.0
    %62 = vmatpush1.msra.mxu0 0.0
    %63 = vmatprep.subr.mxu0 0.0
    %64 = vmatpush1.msra.mxu0 0.0
    %65 = vmatprep.subr.mxu0 0.0
    %66 = vmatpush1.msra.mxu0 0.0
    %67 = vmatprep.subr.mxu0 0.0
    %68 = vmatpush1.msra.mxu0 0.0
    %69 = vmatprep.subr.mxu0 0.0
    %70 = vmatpush1.msra.mxu0 0.0
    %71 = vmatprep.subr.mxu0 0.0
    %72 = vmatpush1.msra.mxu0 0.0
    %73 = vmatprep.subr.mxu0 0.0
    %74 = vmatpush1.msra.mxu0 0.0
    %75 = vmatprep.subr.mxu0 0.0
    %76 = vmatpush1.msra.mxu0 0.0
    %77 = vmatprep.subr.mxu0 0.0
    %78 = vmatpush1.msra.mxu0 0.0
    %79 = vmatprep.subr.mxu0 0.0
    %80 = vmatpush1.msra.mxu0 0.0
    %81 = vmatprep.subr.mxu0 0.0
    %82 = vmatpush1.msra.mxu0 0.0
    %83 = vmatprep.subr.mxu0 0.0
    %84 = vmatpush1.msra.mxu0 0.0
    %85 = vmatprep.subr.mxu0 0.0
    %86 = vmatpush1.msra.mxu0 0.0
    %87 = vmatprep.subr.mxu0 0.0
    %88 = vmatpush1.msra.mxu0 0.0
    %89 = vmatprep.subr.mxu0 0.0
    %90 = vmatpush1.msra.mxu0 0.0
    %91 = vmatprep.subr.mxu0 0.0
    %92 = vmatpush1.msra.mxu0 0.0
    %93 = vmatprep.subr.mxu0 0.0
    %94 = vmatpush1.msra.mxu0 0.0
    %95 = vmatprep.subr.mxu0 0.0
    %96 = vmatpush1.msra.mxu0 0.0
    %97 = vmatprep.subr.mxu0 0.0
    %98 = vmatpush1.msra.mxu0 0.0
    %99 = vmatprep.subr.mxu0 0.0
    %100 = vmatpush1.msra.mxu0 0.0
    %101 = vmatprep.subr.mxu0 0.0
    %102 = vmatpush1.msra.mxu0 0.0
    %103 = vmatprep.subr.mxu0 0.0
    %104 = vmatpush1.msra.mxu0 0.0
    %105 = vmatprep.mubr.f32.mxu0 0.0
    %v106 = vand.u32 %v31, 4294901760
    %v107 = vsub.f32 %v31, %v106
    %v108 = vand.u32 %v107, 4294901760
    %v109 = vsub.f32 %v107, %v108
    %v110 = vand.u32 %v109, 4294901760
    %111 = vmatmul.mubr.f32.gmra.mrb[0].mxu0 %v110
    %v112 = vpop.f32.mrb[0].mxu0
    %v113 = vadd.f32 0.0, %v112
    %v114 = vpop.f32.mrb[0].mxu0
    %115 = vdwg.mxu0
    %116 = vmatprep.subr.mxu0 0.0
    %v117 = vand.u32 %v13, 4294901760
    %v118 = vsub.f32 %v13, %v117
    %v119 = vand.u32 %v118, 4294901760
    %v120 = vsub.f32 %v118, %v119
    %v121 = vand.u32 %v120, 4294901760
    %122 = vmatpush1.msra.mxu0 %v121
    %123 = vmatprep.subr.mxu0 0.0
    %v124 = vand.u32 %v14, 4294901760
    %v125 = vsub.f32 %v14, %v124
    %v126 = vand.u32 %v125, 4294901760
    %v127 = vsub.f32 %v125, %v126
    %v128 = vand.u32 %v127, 4294901760
    %129 = vmatpush1.msra.mxu0 %v128
    %130 = vmatprep.subr.mxu0 0.0
    %v131 = vand.u32 %v15, 4294901760
    %v132 = vsub.f32 %v15, %v131
    %v133 = vand.u32 %v132, 4294901760
    %v134 = vsub.f32 %v132, %v133
    %v135 = vand.u32 %v134, 4294901760
    %136 = vmatpush1.msra.mxu0 %v135
    %137 = vmatprep.subr.mxu0 0.0
    %v138 = vand.u32 %v16, 4294901760
    %v139 = vsub.f32 %v16, %v138
    %v140 = vand.u32 %v139, 4294901760
    %v141 = vsub.f32 %v139, %v140
    %v142 = vand.u32 %v141, 4294901760
    %143 = vmatpush1.msra.mxu0 %v142
    %144 = vmatprep.subr.mxu0 0.0
    %v145 = vand.u32 %v17, 4294901760
    %v146 = vsub.f32 %v17, %v145
    %v147 = vand.u32 %v146, 4294901760
    %v148 = vsub.f32 %v146, %v147
    %v149 = vand.u32 %v148, 4294901760
    %150 = vmatpush1.msra.mxu0 %v149
    %151 = vmatprep.subr.mxu0 0.0
    %v152 = vand.u32 %v18, 4294901760
    %v153 = vsub.f32 %v18, %v152
    %v154 = vand.u32 %v153, 4294901760
    %v155 = vsub.f32 %v153, %v154
    %v156 = vand.u32 %v155, 4294901760
    %157 = vmatpush1.msra.mxu0 %v156
    %158 = vmatprep.subr.mxu0 0.0
    %v159 = vand.u32 %v19, 4294901760
    %v160 = vsub.f32 %v19, %v159
    %v161 = vand.u32 %v160, 4294901760
    %v162 = vsub.f32 %v160, %v161
    %v163 = vand.u32 %v162, 4294901760
    %164 = vmatpush1.msra.mxu0 %v163
    %165 = vmatprep.subr.mxu0 0.0
    %v166 = vand.u32 %v20, 4294901760
    %v167 = vsub.f32 %v20, %v166
    %v168 = vand.u32 %v167, 4294901760
    %v169 = vsub.f32 %v167, %v168
    %v170 = vand.u32 %v169, 4294901760
    %171 = vmatpush1.msra.mxu0 %v170
    %172 = vmatprep.subr.mxu0 0.0
    %173 = vmatpush1.msra.mxu0 0.0
    %174 = vmatprep.subr.mxu0 0.0
    %175 = vmatpush1.msra.mxu0 0.0
    %176 = vmatprep.subr.mxu0 0.0
    %177 = vmatpush1.msra.mxu0 0.0
    %178 = vmatprep.subr.mxu0 0.0
    %179 = vmatpush1.msra.mxu0 0.0
    %180 = vmatprep.subr.mxu0 0.0
    %181 = vmatpush1.msra.mxu0 0.0
    %182 = vmatprep.subr.mxu0 0.0
    %183 = vmatpush1.msra.mxu0 0.0
    %184 = vmatprep.subr.mxu0 0.0
    %185 = vmatpush1.msra.mxu0 0.0
    %186 = vmatprep.subr.mxu0 0.0
    %187 = vmatpush1.msra.mxu0 0.0
    %188 = vmatprep.subr.mxu0 0.0
    %189 = vmatpush1.msra.mxu0 0.0
    %190 = vmatprep.subr.mxu0 0.0
    %191 = vmatpush1.msra.mxu0 0.0
    %192 = vmatprep.subr.mxu0 0.0
    %193 = vmatpush1.msra.mxu0 0.0
    %194 = vmatprep.subr.mxu0 0.0
    %195 = vmatpush1.msra.mxu0 0.0
    %196 = vmatprep.subr.mxu0 0.0
    %197 = vmatpush1.msra.mxu0 0.0
    %198 = vmatprep.subr.mxu0 0.0
    %199 = vmatpush1.msra.mxu0 0.0
    %200 = vmatprep.subr.mxu0 0.0
    %201 = vmatpush1.msra.mxu0 0.0
    %202 = vmatprep.subr.mxu0 0.0
    %203 = vmatpush1.msra.mxu0 0.0
    %204 = vmatprep.subr.mxu0 0.0
    %205 = vmatpush1.msra.mxu0 0.0
    %206 = vmatprep.subr.mxu0 0.0
    %207 = vmatpush1.msra.mxu0 0.0
    %208 = vmatprep.subr.mxu0 0.0
    %209 = vmatpush1.msra.mxu0 0.0
    %210 = vmatprep.subr.mxu0 0.0
    %211 = vmatpush1.msra.mxu0 0.0
    %212 = vmatprep.subr.mxu0 0.0
    %213 = vmatpush1.msra.mxu0 0.0
    %214 = vmatprep.subr.mxu0 0.0
    %215 = vmatpush1.msra.mxu0 0.0
    %216 = vmatprep.subr.mxu0 0.0
    %217 = vmatpush1.msra.mxu0 0.0
    %218 = vmatprep.subr.mxu0 0.0
    %219 = vmatpush1.msra.mxu0 0.0
    %220 = vmatprep.mubr.f32.mxu0 0.0
    %v221 = vand.u32 %v31, 4294901760
    %222 = vmatmul.mubr.f32.gmra.mrb[0].mxu0 %v221
    %v223 = vpop.f32.mrb[0].mxu0
    %v224 = vadd.f32 %v113, %v223
    %v225 = vpop.f32.mrb[0].mxu0
    %226 = vdwg.mxu0
    %227 = vmatprep.subr.mxu0 0.0
    %v228 = vand.u32 %v13, 4294901760
    %v229 = vsub.f32 %v13, %v228
    %230 = vmatpush1.msra.mxu0 %v229
    %231 = vmatprep.subr.mxu0 0.0
    %v232 = vand.u32 %v14, 4294901760
    %v233 = vsub.f32 %v14, %v232
    %234 = vmatpush1.msra.mxu0 %v233
    %235 = vmatprep.subr.mxu0 0.0
    %v236 = vand.u32 %v15, 4294901760
    %v237 = vsub.f32 %v15, %v236
    %238 = vmatpush1.msra.mxu0 %v237
    %239 = vmatprep.subr.mxu0 0.0
    %v240 = vand.u32 %v16, 4294901760
    %v241 = vsub.f32 %v16, %v240
    %242 = vmatpush1.msra.mxu0 %v241
    %243 = vmatprep.subr.mxu0 0.0
    %v244 = vand.u32 %v17, 4294901760
    %v245 = vsub.f32 %v17, %v244
    %246 = vmatpush1.msra.mxu0 %v245
    %247 = vmatprep.subr.mxu0 0.0
    %v248 = vand.u32 %v18, 4294901760
    %v249 = vsub.f32 %v18, %v248
    %250 = vmatpush1.msra.mxu0 %v249
    %251 = vmatprep.subr.mxu0 0.0
    %v252 = vand.u32 %v19, 4294901760
    %v253 = vsub.f32 %v19, %v252
    %254 = vmatpush1.msra.mxu0 %v253
    %255 = vmatprep.subr.mxu0 0.0
    %v256 = vand.u32 %v20, 4294901760
    %v257 = vsub.f32 %v20, %v256
    %258 = vmatpush1.msra.mxu0 %v257
    %259 = vmatprep.subr.mxu0 0.0
    %260 = vmatpush1.msra.mxu0 0.0
    %261 = vmatprep.subr.mxu0 0.0
    %262 = vmatpush1.msra.mxu0 0.0
    %263 = vmatprep.subr.mxu0 0.0
    %264 = vmatpush1.msra.mxu0 0.0
    %265 = vmatprep.subr.mxu0 0.0
    %266 = vmatpush1.msra.mxu0 0.0
    %267 = vmatprep.subr.mxu0 0.0
    %268 = vmatpush1.msra.mxu0 0.0
    %269 = vmatprep.subr.mxu0 0.0
    %270 = vmatpush1.msra.mxu0 0.0
    %271 = vmatprep.subr.mxu0 0.0
    %272 = vmatpush1.msra.mxu0 0.0
    %273 = vmatprep.subr.mxu0 0.0
    %274 = vmatpush1.msra.mxu0 0.0
    %275 = vmatprep.subr.mxu0 0.0
    %276 = vmatpush1.msra.mxu0 0.0
    %277 = vmatprep.subr.mxu0 0.0
    %278 = vmatpush1.msra.mxu0 0.0
    %279 = vmatprep.subr.mxu0 0.0
    %280 = vmatpush1.msra.mxu0 0.0
    %281 = vmatprep.subr.mxu0 0.0
    %282 = vmatpush1.msra.mxu0 0.0
    %283 = vmatprep.subr.mxu0 0.0
    %284 = vmatpush1.msra.mxu0 0.0
    %285 = vmatprep.subr.mxu0 0.0
    %286 = vmatpush1.msra.mxu0 0.0
    %287 = vmatprep.subr.mxu0 0.0
    %288 = vmatpush1.msra.mxu0 0.0
    %289 = vmatprep.subr.mxu0 0.0
    %290 = vmatpush1.msra.mxu0 0.0
    %291 = vmatprep.subr.mxu0 0.0
    %292 = vmatpush1.msra.mxu0 0.0
    %293 = vmatprep.subr.mxu0 0.0
    %294 = vmatpush1.msra.mxu0 0.0
    %295 = vmatprep.subr.mxu0 0.0
    %296 = vmatpush1.msra.mxu0 0.0
    %297 = vmatprep.subr.mxu0 0.0
    %298 = vmatpush1.msra.mxu0 0.0
    %299 = vmatprep.subr.mxu0 0.0
    %300 = vmatpush1.msra.mxu0 0.0
    %301 = vmatprep.subr.mxu0 0.0
    %302 = vmatpush1.msra.mxu0 0.0
    %303 = vmatprep.subr.mxu0 0.0
    %304 = vmatpush1.msra.mxu0 0.0
    %305 = vmatprep.subr.mxu0 0.0
    %306 = vmatpush1.msra.mxu0 0.0
    %307 = vmatprep.mubr.f32.mxu0 0.0
    %v308 = vand.u32 %v31, 4294901760
    %v309 = vsub.f32 %v31, %v308
    %310 = vmatmul.mubr.f32.gmra.mrb[0].mxu0 %v309
    %v311 = vpop.f32.mrb[0].mxu0
    %v312 = vadd.f32 %v224, %v311
    %v313 = vpop.f32.mrb[0].mxu0
    %314 = vdwg.mxu0
    %315 = vmatprep.subr.mxu0 0.0
    %v316 = vand.u32 %v13, 4294901760
    %317 = vmatpush1.msra.mxu0 %v316
    %318 = vmatprep.subr.mxu0 0.0
    %v319 = vand.u32 %v14, 4294901760
    %320 = vmatpush1.msra.mxu0 %v319
    %321 = vmatprep.subr.mxu0 0.0
    %v322 = vand.u32 %v15, 4294901760
    %323 = vmatpush1.msra.mxu0 %v322
    %324 = vmatprep.subr.mxu0 0.0
    %v325 = vand.u32 %v16, 4294901760
    %326 = vmatpush1.msra.mxu0 %v325
    %327 = vmatprep.subr.mxu0 0.0
    %v328 = vand.u32 %v17, 4294901760
    %329 = vmatpush1.msra.mxu0 %v328
    %330 = vmatprep.subr.mxu0 0.0
    %v331 = vand.u32 %v18, 4294901760
    %332 = vmatpush1.msra.mxu0 %v331
    %333 = vmatprep.subr.mxu0 0.0
    %v334 = vand.u32 %v19, 4294901760
    %335 = vmatpush1.msra.mxu0 %v334
    %336 = vmatprep.subr.mxu0 0.0
    %v337 = vand.u32 %v20, 4294901760
    %338 = vmatpush1.msra.mxu0 %v337
    %339 = vmatprep.subr.mxu0 0.0
    %340 = vmatpush1.msra.mxu0 0.0
    %341 = vmatprep.subr.mxu0 0.0
    %342 = vmatpush1.msra.mxu0 0.0
    %343 = vmatprep.subr.mxu0 0.0
    %344 = vmatpush1.msra.mxu0 0.0
    %345 = vmatprep.subr.mxu0 0.0
    %346 = vmatpush1.msra.mxu0 0.0
    %347 = vmatprep.subr.mxu0 0.0
    %348 = vmatpush1.msra.mxu0 0.0
    %349 = vmatprep.subr.mxu0 0.0
    %350 = vmatpush1.msra.mxu0 0.0
    %351 = vmatprep.subr.mxu0 0.0
    %352 = vmatpush1.msra.mxu0 0.0
    %353 = vmatprep.subr.mxu0 0.0
    %354 = vmatpush1.msra.mxu0 0.0
    %355 = vmatprep.subr.mxu0 0.0
    %356 = vmatpush1.msra.mxu0 0.0
    %357 = vmatprep.subr.mxu0 0.0
    %358 = vmatpush1.msra.mxu0 0.0
    %359 = vmatprep.subr.mxu0 0.0
    %360 = vmatpush1.msra.mxu0 0.0
    %361 = vmatprep.subr.mxu0 0.0
    %362 = vmatpush1.msra.mxu0 0.0
    %363 = vmatprep.subr.mxu0 0.0
    %364 = vmatpush1.msra.mxu0 0.0
    %365 = vmatprep.subr.mxu0 0.0
    %366 = vmatpush1.msra.mxu0 0.0
    %367 = vmatprep.subr.mxu0 0.0
    %368 = vmatpush1.msra.mxu0 0.0
    %369 = vmatprep.subr.mxu0 0.0
    %370 = vmatpush1.msra.mxu0 0.0
    %371 = vmatprep.subr.mxu0 0.0
    %372 = vmatpush1.msra.mxu0 0.0
    %373 = vmatprep.subr.mxu0 0.0
    %374 = vmatpush1.msra.mxu0 0.0
    %375 = vmatprep.subr.mxu0 0.0
    %376 = vmatpush1.msra.mxu0 0.0
    %377 = vmatprep.subr.mxu0 0.0
    %378 = vmatpush1.msra.mxu0 0.0
    %379 = vmatprep.subr.mxu0 0.0
    %380 = vmatpush1.msra.mxu0 0.0
    %381 = vmatprep.subr.mxu0 0.0
    %382 = vmatpush1.msra.mxu0 0.0
    %383 = vmatprep.subr.mxu0 0.0
    %384 = vmatpush1.msra.mxu0 0.0
    %385 = vmatprep.subr.mxu0 0.0
    %386 = vmatpush1.msra.mxu0 0.0
    %387 = vmatprep.mubr.f32.mxu0 0.0
    %v388 = vand.u32 %v31, 4294901760
    %v389 = vsub.f32 %v31, %v388
    %v390 = vand.u32 %v389, 4294901760
    %391 = vmatmul.mubr.f32.gmra.mrb[0].mxu0 %v390
    %v392 = vpop.f32.mrb[0].mxu0
    %v393 = vadd.f32 %v312, %v392
    %v394 = vpop.f32.mrb[0].mxu0
    %395 = vdwg.mxu0
    %396 = vmatprep.subr.mxu0 0.0
    %v397 = vand.u32 %v13, 4294901760
    %v398 = vsub.f32 %v13, %v397
    %v399 = vand.u32 %v398, 4294901760
    %400 = vmatpush1.msra.mxu0 %v399
    %401 = vmatprep.subr.mxu0 0.0
    %v402 = vand.u32 %v14, 4294901760
    %v403 = vsub.f32 %v14, %v402
    %v404 = vand.u32 %v403, 4294901760
    %405 = vmatpush1.msra.mxu0 %v404
    %406 = vmatprep.subr.mxu0 0.0
    %v407 = vand.u32 %v15, 4294901760
    %v408 = vsub.f32 %v15, %v407
    %v409 = vand.u32 %v408, 4294901760
    %410 = vmatpush1.msra.mxu0 %v409
    %411 = vmatprep.subr.mxu0 0.0
    %v412 = vand.u32 %v16, 4294901760
    %v413 = vsub.f32 %v16, %v412
    %v414 = vand.u32 %v413, 4294901760
    %415 = vmatpush1.msra.mxu0 %v414
    %416 = vmatprep.subr.mxu0 0.0
    %v417 = vand.u32 %v17, 4294901760
    %v418 = vsub.f32 %v17, %v417
    %v419 = vand.u32 %v418, 4294901760
    %420 = vmatpush1.msra.mxu0 %v419
    %421 = vmatprep.subr.mxu0 0.0
    %v422 = vand.u32 %v18, 4294901760
    %v423 = vsub.f32 %v18, %v422
    %v424 = vand.u32 %v423, 4294901760
    %425 = vmatpush1.msra.mxu0 %v424
    %426 = vmatprep.subr.mxu0 0.0
    %v427 = vand.u32 %v19, 4294901760
    %v428 = vsub.f32 %v19, %v427
    %v429 = vand.u32 %v428, 4294901760
    %430 = vmatpush1.msra.mxu0 %v429
    %431 = vmatprep.subr.mxu0 0.0
    %v432 = vand.u32 %v20, 4294901760
    %v433 = vsub.f32 %v20, %v432
    %v434 = vand.u32 %v433, 4294901760
    %435 = vmatpush1.msra.mxu0 %v434
    %436 = vmatprep.subr.mxu0 0.0
    %437 = vmatpush1.msra.mxu0 0.0
    %438 = vmatprep.subr.mxu0 0.0
    %439 = vmatpush1.msra.mxu0 0.0
    %440 = vmatprep.subr.mxu0 0.0
    %441 = vmatpush1.msra.mxu0 0.0
    %442 = vmatprep.subr.mxu0 0.0
    %443 = vmatpush1.msra.mxu0 0.0
    %444 = vmatprep.subr.mxu0 0.0
    %445 = vmatpush1.msra.mxu0 0.0
    %446 = vmatprep.subr.mxu0 0.0
    %447 = vmatpush1.msra.mxu0 0.0
    %448 = vmatprep.subr.mxu0 0.0
    %449 = vmatpush1.msra.mxu0 0.0
    %450 = vmatprep.subr.mxu0 0.0
    %451 = vmatpush1.msra.mxu0 0.0
    %452 = vmatprep.subr.mxu0 0.0
    %453 = vmatpush1.msra.mxu0 0.0
    %454 = vmatprep.subr.mxu0 0.0
    %455 = vmatpush1.msra.mxu0 0.0
    %456 = vmatprep.subr.mxu0 0.0
    %457 = vmatpush1.msra.mxu0 0.0
    %458 = vmatprep.subr.mxu0 0.0
    %459 = vmatpush1.msra.mxu0 0.0
    %460 = vmatprep.subr.mxu0 0.0
    %461 = vmatpush1.msra.mxu0 0.0
    %462 = vmatprep.subr.mxu0 0.0
    %463 = vmatpush1.msra.mxu0 0.0
    %464 = vmatprep.subr.mxu0 0.0
    %465 = vmatpush1.msra.mxu0 0.0
    %466 = vmatprep.subr.mxu0 0.0
    %467 = vmatpush1.msra.mxu0 0.0
    %468 = vmatprep.subr.mxu0 0.0
    %469 = vmatpush1.msra.mxu0 0.0
    %470 = vmatprep.subr.mxu0 0.0
    %471 = vmatpush1.msra.mxu0 0.0
    %472 = vmatprep.subr.mxu0 0.0
    %473 = vmatpush1.msra.mxu0 0.0
    %474 = vmatprep.subr.mxu0 0.0
    %475 = vmatpush1.msra.mxu0 0.0
    %476 = vmatprep.subr.mxu0 0.0
    %477 = vmatpush1.msra.mxu0 0.0
    %478 = vmatprep.subr.mxu0 0.0
    %479 = vmatpush1.msra.mxu0 0.0
    %480 = vmatprep.subr.mxu0 0.0
    %481 = vmatpush1.msra.mxu0 0.0
    %482 = vmatprep.subr.mxu0 0.0
    %483 = vmatpush1.msra.mxu0 0.0
    %484 = vmatprep.mubr.f32.mxu0 0.0
    %v485 = vand.u32 %v31, 4294901760
    %486 = vmatmul.mubr.f32.gmra.mrb[0].mxu0 %v485
    %v487 = vpop.f32.mrb[0].mxu0
    %v488 = vadd.f32 %v393, %v487
    %v489 = vpop.f32.mrb[0].mxu0
    %490 = vdwg.mxu0
    %491 = vmatprep.subr.mxu0 0.0
    %v492 = vand.u32 %v13, 4294901760
    %493 = vmatpush1.msra.mxu0 %v492
    %494 = vmatprep.subr.mxu0 0.0
    %v495 = vand.u32 %v14, 4294901760
    %496 = vmatpush1.msra.mxu0 %v495
    %497 = vmatprep.subr.mxu0 0.0
    %v498 = vand.u32 %v15, 4294901760
    %499 = vmatpush1.msra.mxu0 %v498
    %500 = vmatprep.subr.mxu0 0.0
    %v501 = vand.u32 %v16, 4294901760
    %502 = vmatpush1.msra.mxu0 %v501
    %503 = vmatprep.subr.mxu0 0.0
    %v504 = vand.u32 %v17, 4294901760
    %505 = vmatpush1.msra.mxu0 %v504
    %506 = vmatprep.subr.mxu0 0.0
    %v507 = vand.u32 %v18, 4294901760
    %508 = vmatpush1.msra.mxu0 %v507
    %509 = vmatprep.subr.mxu0 0.0
    %v510 = vand.u32 %v19, 4294901760
    %511 = vmatpush1.msra.mxu0 %v510
    %512 = vmatprep.subr.mxu0 0.0
    %v513 = vand.u32 %v20, 4294901760
    %514 = vmatpush1.msra.mxu0 %v513
    %515 = vmatprep.subr.mxu0 0.0
    %516 = vmatpush1.msra.mxu0 0.0
    %517 = vmatprep.subr.mxu0 0.0
    %518 = vmatpush1.msra.mxu0 0.0
    %519 = vmatprep.subr.mxu0 0.0
    %520 = vmatpush1.msra.mxu0 0.0
    %521 = vmatprep.subr.mxu0 0.0
    %522 = vmatpush1.msra.mxu0 0.0
    %523 = vmatprep.subr.mxu0 0.0
    %524 = vmatpush1.msra.mxu0 0.0
    %525 = vmatprep.subr.mxu0 0.0
    %526 = vmatpush1.msra.mxu0 0.0
    %527 = vmatprep.subr.mxu0 0.0
    %528 = vmatpush1.msra.mxu0 0.0
    %529 = vmatprep.subr.mxu0 0.0
    %530 = vmatpush1.msra.mxu0 0.0
    %531 = vmatprep.subr.mxu0 0.0
    %532 = vmatpush1.msra.mxu0 0.0
    %533 = vmatprep.subr.mxu0 0.0
    %534 = vmatpush1.msra.mxu0 0.0
    %535 = vmatprep.subr.mxu0 0.0
    %536 = vmatpush1.msra.mxu0 0.0
    %537 = vmatprep.subr.mxu0 0.0
    %538 = vmatpush1.msra.mxu0 0.0
    %539 = vmatprep.subr.mxu0 0.0
    %540 = vmatpush1.msra.mxu0 0.0
    %541 = vmatprep.subr.mxu0 0.0
    %542 = vmatpush1.msra.mxu0 0.0
    %543 = vmatprep.subr.mxu0 0.0
    %544 = vmatpush1.msra.mxu0 0.0
    %545 = vmatprep.subr.mxu0 0.0
    %546 = vmatpush1.msra.mxu0 0.0
    %547 = vmatprep.subr.mxu0 0.0
    %548 = vmatpush1.msra.mxu0 0.0
    %549 = vmatprep.subr.mxu0 0.0
    %550 = vmatpush1.msra.mxu0 0.0
    %551 = vmatprep.subr.mxu0 0.0
    %552 = vmatpush1.msra.mxu0 0.0
    %553 = vmatprep.subr.mxu0 0.0
    %554 = vmatpush1.msra.mxu0 0.0
    %555 = vmatprep.subr.mxu0 0.0
    %556 = vmatpush1.msra.mxu0 0.0
    %557 = vmatprep.subr.mxu0 0.0
    %558 = vmatpush1.msra.mxu0 0.0
    %559 = vmatprep.subr.mxu0 0.0
    %560 = vmatpush1.msra.mxu0 0.0
    %561 = vmatprep.subr.mxu0 0.0
    %562 = vmatpush1.msra.mxu0 0.0
    %563 = vmatprep.mubr.f32.mxu0 0.0
    %v564 = vand.u32 %v31, 4294901760
    %565 = vmatmul.mubr.f32.gmra.mrb[0].mxu0 %v564
    %v566 = vpop.f32.mrb[0].mxu0
    %v567 = vadd.f32 %v488, %v566
    %v568 = vpop.f32.mrb[0].mxu0
    %569 = vdwg.mxu0
    %vm570 = vcmask 261120
    %571 = vst.msk [vmem:[#allocation2] sm:$0xff] %vm570, %v567
    %572 = vset.pattern.permute.xlu0 1
    %573 = vperm.xlu0 %572, %v12
    %v574 = vpop.permute.xlu0 %573
    %vm575 = vcmp.eq.s32.totalorder %v574, %v22
    %v576 = vsel %vm575, 1, 0
    %v577 = vcvt.s32.f32 %v576
    %v579 = vsel %vm29, %v577, 0
    %581 = vmatprep.subr.mxu0 0.0
    %v582 = vand.u32 %v13, 4294901760
    %583 = vmatpush1.msra.mxu0 %v582
    %584 = vmatprep.subr.mxu0 0.0
    %v585 = vand.u32 %v14, 4294901760
    %586 = vmatpush1.msra.mxu0 %v585
    %587 = vmatprep.subr.mxu0 0.0
    %v588 = vand.u32 %v15, 4294901760
    %589 = vmatpush1.msra.mxu0 %v588
    %590 = vmatprep.subr.mxu0 0.0
    %v591 = vand.u32 %v16, 4294901760
    %592 = vmatpush1.msra.mxu0 %v591
    %593 = vmatprep.subr.mxu0 0.0
    %v594 = vand.u32 %v17, 4294901760
    %595 = vmatpush1.msra.mxu0 %v594
    %596 = vmatprep.subr.mxu0 0.0
    %v597 = vand.u32 %v18, 4294901760
    %598 = vmatpush1.msra.mxu0 %v597
    %599 = vmatprep.subr.mxu0 0.0
    %v600 = vand.u32 %v19, 4294901760
    %601 = vmatpush1.msra.mxu0 %v600
    %602 = vmatprep.subr.mxu0 0.0
    %v603 = vand.u32 %v20, 4294901760
    %604 = vmatpush1.msra.mxu0 %v603
    %605 = vmatprep.subr.mxu0 0.0
    %606 = vmatpush1.msra.mxu0 0.0
    %607 = vmatprep.subr.mxu0 0.0
    %608 = vmatpush1.msra.mxu0 0.0
    %609 = vmatprep.subr.mxu0 0.0
    %610 = vmatpush1.msra.mxu0 0.0
    %611 = vmatprep.subr.mxu0 0.0
    %612 = vmatpush1.msra.mxu0 0.0
    %613 = vmatprep.subr.mxu0 0.0
    %614 = vmatpush1.msra.mxu0 0.0
    %615 = vmatprep.subr.mxu0 0.0
    %616 = vmatpush1.msra.mxu0 0.0
    %617 = vmatprep.subr.mxu0 0.0
    %618 = vmatpush1.msra.mxu0 0.0
    %619 = vmatprep.subr.mxu0 0.0
    %620 = vmatpush1.msra.mxu0 0.0
    %621 = vmatprep.subr.mxu0 0.0
    %622 = vmatpush1.msra.mxu0 0.0
    %623 = vmatprep.subr.mxu0 0.0
    %624 = vmatpush1.msra.mxu0 0.0
    %625 = vmatprep.subr.mxu0 0.0
    %626 = vmatpush1.msra.mxu0 0.0
    %627 = vmatprep.subr.mxu0 0.0
    %628 = vmatpush1.msra.mxu0 0.0
    %629 = vmatprep.subr.mxu0 0.0
    %630 = vmatpush1.msra.mxu0 0.0
    %631 = vmatprep.subr.mxu0 0.0
    %632 = vmatpush1.msra.mxu0 0.0
    %633 = vmatprep.subr.mxu0 0.0
    %634 = vmatpush1.msra.mxu0 0.0
    %635 = vmatprep.subr.mxu0 0.0
    %636 = vmatpush1.msra.mxu0 0.0
    %637 = vmatprep.subr.mxu0 0.0
    %638 = vmatpush1.msra.mxu0 0.0
    %639 = vmatprep.subr.mxu0 0.0
    %640 = vmatpush1.msra.mxu0 0.0
    %641 = vmatprep.subr.mxu0 0.0
    %642 = vmatpush1.msra.mxu0 0.0
    %643 = vmatprep.subr.mxu0 0.0
    %644 = vmatpush1.msra.mxu0 0.0
    %645 = vmatprep.subr.mxu0 0.0
    %646 = vmatpush1.msra.mxu0 0.0
    %647 = vmatprep.subr.mxu0 0.0
    %648 = vmatpush1.msra.mxu0 0.0
    %649 = vmatprep.subr.mxu0 0.0
    %650 = vmatpush1.msra.mxu0 0.0
    %651 = vmatprep.subr.mxu0 0.0
    %652 = vmatpush1.msra.mxu0 0.0
    %653 = vmatprep.mubr.f32.mxu0 0.0
    %v654 = vand.u32 %v579, 4294901760
    %v655 = vsub.f32 %v579, %v654
    %v656 = vand.u32 %v655, 4294901760
    %v657 = vsub.f32 %v655, %v656
    %v658 = vand.u32 %v657, 4294901760
    %659 = vmatmul.mubr.f32.gmra.mrb[0].mxu0 %v658
    %v660 = vpop.f32.mrb[0].mxu0
    %v661 = vadd.f32 0.0, %v660
    %v662 = vpop.f32.mrb[0].mxu0
    %663 = vdwg.mxu0
    %664 = vmatprep.subr.mxu0 0.0
    %v665 = vand.u32 %v13, 4294901760
    %v666 = vsub.f32 %v13, %v665
    %v667 = vand.u32 %v666, 4294901760
    %v668 = vsub.f32 %v666, %v667
    %v669 = vand.u32 %v668, 4294901760
    %670 = vmatpush1.msra.mxu0 %v669
    %671 = vmatprep.subr.mxu0 0.0
    %v672 = vand.u32 %v14, 4294901760
    %v673 = vsub.f32 %v14, %v672
    %v674 = vand.u32 %v673, 4294901760
    %v675 = vsub.f32 %v673, %v674
    %v676 = vand.u32 %v675, 4294901760
    %677 = vmatpush1.msra.mxu0 %v676
    %678 = vmatprep.subr.mxu0 0.0
    %v679 = vand.u32 %v15, 4294901760
    %v680 = vsub.f32 %v15, %v679
    %v681 = vand.u32 %v680, 4294901760
    %v682 = vsub.f32 %v680, %v681
    %v683 = vand.u32 %v682, 4294901760
    %684 = vmatpush1.msra.mxu0 %v683
    %685 = vmatprep.subr.mxu0 0.0
    %v686 = vand.u32 %v16, 4294901760
    %v687 = vsub.f32 %v16, %v686
    %v688 = vand.u32 %v687, 4294901760
    %v689 = vsub.f32 %v687, %v688
    %v690 = vand.u32 %v689, 4294901760
    %691 = vmatpush1.msra.mxu0 %v690
    %692 = vmatprep.subr.mxu0 0.0
    %v693 = vand.u32 %v17, 4294901760
    %v694 = vsub.f32 %v17, %v693
    %v695 = vand.u32 %v694, 4294901760
    %v696 = vsub.f32 %v694, %v695
    %v697 = vand.u32 %v696, 4294901760
    %698 = vmatpush1.msra.mxu0 %v697
    %699 = vmatprep.subr.mxu0 0.0
    %v700 = vand.u32 %v18, 4294901760
    %v701 = vsub.f32 %v18, %v700
    %v702 = vand.u32 %v701, 4294901760
    %v703 = vsub.f32 %v701, %v702
    %v704 = vand.u32 %v703, 4294901760
    %705 = vmatpush1.msra.mxu0 %v704
    %706 = vmatprep.subr.mxu0 0.0
    %v707 = vand.u32 %v19, 4294901760
    %v708 = vsub.f32 %v19, %v707
    %v709 = vand.u32 %v708, 4294901760
    %v710 = vsub.f32 %v708, %v709
    %v711 = vand.u32 %v710, 4294901760
    %712 = vmatpush1.msra.mxu0 %v711
    %713 = vmatprep.subr.mxu0 0.0
    %v714 = vand.u32 %v20, 4294901760
    %v715 = vsub.f32 %v20, %v714
    %v716 = vand.u32 %v715, 4294901760
    %v717 = vsub.f32 %v715, %v716
    %v718 = vand.u32 %v717, 4294901760
    %719 = vmatpush1.msra.mxu0 %v718
    %720 = vmatprep.subr.mxu0 0.0
    %721 = vmatpush1.msra.mxu0 0.0
    %722 = vmatprep.subr.mxu0 0.0
    %723 = vmatpush1.msra.mxu0 0.0
    %724 = vmatprep.subr.mxu0 0.0
    %725 = vmatpush1.msra.mxu0 0.0
    %726 = vmatprep.subr.mxu0 0.0
    %727 = vmatpush1.msra.mxu0 0.0
    %728 = vmatprep.subr.mxu0 0.0
    %729 = vmatpush1.msra.mxu0 0.0
    %730 = vmatprep.subr.mxu0 0.0
    %731 = vmatpush1.msra.mxu0 0.0
    %732 = vmatprep.subr.mxu0 0.0
    %733 = vmatpush1.msra.mxu0 0.0
    %734 = vmatprep.subr.mxu0 0.0
    %735 = vmatpush1.msra.mxu0 0.0
    %736 = vmatprep.subr.mxu0 0.0
    %737 = vmatpush1.msra.mxu0 0.0
    %738 = vmatprep.subr.mxu0 0.0
    %739 = vmatpush1.msra.mxu0 0.0
    %740 = vmatprep.subr.mxu0 0.0
    %741 = vmatpush1.msra.mxu0 0.0
    %742 = vmatprep.subr.mxu0 0.0
    %743 = vmatpush1.msra.mxu0 0.0
    %744 = vmatprep.subr.mxu0 0.0
    %745 = vmatpush1.msra.mxu0 0.0
    %746 = vmatprep.subr.mxu0 0.0
    %747 = vmatpush1.msra.mxu0 0.0
    %748 = vmatprep.subr.mxu0 0.0
    %749 = vmatpush1.msra.mxu0 0.0
    %750 = vmatprep.subr.mxu0 0.0
    %751 = vmatpush1.msra.mxu0 0.0
    %752 = vmatprep.subr.mxu0 0.0
    %753 = vmatpush1.msra.mxu0 0.0
    %754 = vmatprep.subr.mxu0 0.0
    %755 = vmatpush1.msra.mxu0 0.0
    %756 = vmatprep.subr.mxu0 0.0
    %757 = vmatpush1.msra.mxu0 0.0
    %758 = vmatprep.subr.mxu0 0.0
    %759 = vmatpush1.msra.mxu0 0.0
    %760 = vmatprep.subr.mxu0 0.0
    %761 = vmatpush1.msra.mxu0 0.0
    %762 = vmatprep.subr.mxu0 0.0
    %763 = vmatpush1.msra.mxu0 0.0
    %764 = vmatprep.subr.mxu0 0.0
    %765 = vmatpush1.msra.mxu0 0.0
    %766 = vmatprep.subr.mxu0 0.0
    %767 = vmatpush1.msra.mxu0 0.0
    %768 = vmatprep.mubr.f32.mxu0 0.0
    %v769 = vand.u32 %v579, 4294901760
    %770 = vmatmul.mubr.f32.gmra.mrb[0].mxu0 %v769
    %v771 = vpop.f32.mrb[0].mxu0
    %v772 = vadd.f32 %v661, %v771
    %v773 = vpop.f32.mrb[0].mxu0
    %774 = vdwg.mxu0
    %775 = vmatprep.subr.mxu0 0.0
    %v776 = vand.u32 %v13, 4294901760
    %v777 = vsub.f32 %v13, %v776
    %778 = vmatpush1.msra.mxu0 %v777
    %779 = vmatprep.subr.mxu0 0.0
    %v780 = vand.u32 %v14, 4294901760
    %v781 = vsub.f32 %v14, %v780
    %782 = vmatpush1.msra.mxu0 %v781
    %783 = vmatprep.subr.mxu0 0.0
    %v784 = vand.u32 %v15, 4294901760
    %v785 = vsub.f32 %v15, %v784
    %786 = vmatpush1.msra.mxu0 %v785
    %787 = vmatprep.subr.mxu0 0.0
    %v788 = vand.u32 %v16, 4294901760
    %v789 = vsub.f32 %v16, %v788
    %790 = vmatpush1.msra.mxu0 %v789
    %791 = vmatprep.subr.mxu0 0.0
    %v792 = vand.u32 %v17, 4294901760
    %v793 = vsub.f32 %v17, %v792
    %794 = vmatpush1.msra.mxu0 %v793
    %795 = vmatprep.subr.mxu0 0.0
    %v796 = vand.u32 %v18, 4294901760
    %v797 = vsub.f32 %v18, %v796
    %798 = vmatpush1.msra.mxu0 %v797
    %799 = vmatprep.subr.mxu0 0.0
    %v800 = vand.u32 %v19, 4294901760
    %v801 = vsub.f32 %v19, %v800
    %802 = vmatpush1.msra.mxu0 %v801
    %803 = vmatprep.subr.mxu0 0.0
    %v804 = vand.u32 %v20, 4294901760
    %v805 = vsub.f32 %v20, %v804
    %806 = vmatpush1.msra.mxu0 %v805
    %807 = vmatprep.subr.mxu0 0.0
    %808 = vmatpush1.msra.mxu0 0.0
    %809 = vmatprep.subr.mxu0 0.0
    %810 = vmatpush1.msra.mxu0 0.0
    %811 = vmatprep.subr.mxu0 0.0
    %812 = vmatpush1.msra.mxu0 0.0
    %813 = vmatprep.subr.mxu0 0.0
    %814 = vmatpush1.msra.mxu0 0.0
    %815 = vmatprep.subr.mxu0 0.0
    %816 = vmatpush1.msra.mxu0 0.0
    %817 = vmatprep.subr.mxu0 0.0
    %818 = vmatpush1.msra.mxu0 0.0
    %819 = vmatprep.subr.mxu0 0.0
    %820 = vmatpush1.msra.mxu0 0.0
    %821 = vmatprep.subr.mxu0 0.0
    %822 = vmatpush1.msra.mxu0 0.0
    %823 = vmatprep.subr.mxu0 0.0
    %824 = vmatpush1.msra.mxu0 0.0
    %825 = vmatprep.subr.mxu0 0.0
    %826 = vmatpush1.msra.mxu0 0.0
    %827 = vmatprep.subr.mxu0 0.0
    %828 = vmatpush1.msra.mxu0 0.0
    %829 = vmatprep.subr.mxu0 0.0
    %830 = vmatpush1.msra.mxu0 0.0
    %831 = vmatprep.subr.mxu0 0.0
    %832 = vmatpush1.msra.mxu0 0.0
    %833 = vmatprep.subr.mxu0 0.0
    %834 = vmatpush1.msra.mxu0 0.0
    %835 = vmatprep.subr.mxu0 0.0
    %836 = vmatpush1.msra.mxu0 0.0
    %837 = vmatprep.subr.mxu0 0.0
    %838 = vmatpush1.msra.mxu0 0.0
    %839 = vmatprep.subr.mxu0 0.0
    %840 = vmatpush1.msra.mxu0 0.0
    %841 = vmatprep.subr.mxu0 0.0
    %842 = vmatpush1.msra.mxu0 0.0
    %843 = vmatprep.subr.mxu0 0.0
    %844 = vmatpush1.msra.mxu0 0.0
    %845 = vmatprep.subr.mxu0 0.0
    %846 = vmatpush1.msra.mxu0 0.0
    %847 = vmatprep.subr.mxu0 0.0
    %848 = vmatpush1.msra.mxu0 0.0
    %849 = vmatprep.subr.mxu0 0.0
    %850 = vmatpush1.msra.mxu0 0.0
    %851 = vmatprep.subr.mxu0 0.0
    %852 = vmatpush1.msra.mxu0 0.0
    %853 = vmatprep.subr.mxu0 0.0
    %854 = vmatpush1.msra.mxu0 0.0
    %855 = vmatprep.mubr.f32.mxu0 0.0
    %v856 = vand.u32 %v579, 4294901760
    %v857 = vsub.f32 %v579, %v856
    %858 = vmatmul.mubr.f32.gmra.mrb[0].mxu0 %v857
    %v859 = vpop.f32.mrb[0].mxu0
    %v860 = vadd.f32 %v772, %v859
    %v861 = vpop.f32.mrb[0].mxu0
    %862 = vdwg.mxu0
    %863 = vmatprep.subr.mxu0 0.0
    %v864 = vand.u32 %v13, 4294901760
    %865 = vmatpush1.msra.mxu0 %v864
    %866 = vmatprep.subr.mxu0 0.0
    %v867 = vand.u32 %v14, 4294901760
    %868 = vmatpush1.msra.mxu0 %v867
    %869 = vmatprep.subr.mxu0 0.0
    %v870 = vand.u32 %v15, 4294901760
    %871 = vmatpush1.msra.mxu0 %v870
    %872 = vmatprep.subr.mxu0 0.0
    %v873 = vand.u32 %v16, 4294901760
    %874 = vmatpush1.msra.mxu0 %v873
    %875 = vmatprep.subr.mxu0 0.0
    %v876 = vand.u32 %v17, 4294901760
    %877 = vmatpush1.msra.mxu0 %v876
    %878 = vmatprep.subr.mxu0 0.0
    %v879 = vand.u32 %v18, 4294901760
    %880 = vmatpush1.msra.mxu0 %v879
    %881 = vmatprep.subr.mxu0 0.0
    %v882 = vand.u32 %v19, 4294901760
    %883 = vmatpush1.msra.mxu0 %v882
    %884 = vmatprep.subr.mxu0 0.0
    %v885 = vand.u32 %v20, 4294901760
    %886 = vmatpush1.msra.mxu0 %v885
    %887 = vmatprep.subr.mxu0 0.0
    %888 = vmatpush1.msra.mxu0 0.0
    %889 = vmatprep.subr.mxu0 0.0
    %890 = vmatpush1.msra.mxu0 0.0
    %891 = vmatprep.subr.mxu0 0.0
    %892 = vmatpush1.msra.mxu0 0.0
    %893 = vmatprep.subr.mxu0 0.0
    %894 = vmatpush1.msra.mxu0 0.0
    %895 = vmatprep.subr.mxu0 0.0
    %896 = vmatpush1.msra.mxu0 0.0
    %897 = vmatprep.subr.mxu0 0.0
    %898 = vmatpush1.msra.mxu0 0.0
    %899 = vmatprep.subr.mxu0 0.0
    %900 = vmatpush1.msra.mxu0 0.0
    %901 = vmatprep.subr.mxu0 0.0
    %902 = vmatpush1.msra.mxu0 0.0
    %903 = vmatprep.subr.mxu0 0.0
    %904 = vmatpush1.msra.mxu0 0.0
    %905 = vmatprep.subr.mxu0 0.0
    %906 = vmatpush1.msra.mxu0 0.0
    %907 = vmatprep.subr.mxu0 0.0
    %908 = vmatpush1.msra.mxu0 0.0
    %909 = vmatprep.subr.mxu0 0.0
    %910 = vmatpush1.msra.mxu0 0.0
    %911 = vmatprep.subr.mxu0 0.0
    %912 = vmatpush1.msra.mxu0 0.0
    %913 = vmatprep.subr.mxu0 0.0
    %914 = vmatpush1.msra.mxu0 0.0
    %915 = vmatprep.subr.mxu0 0.0
    %916 = vmatpush1.msra.mxu0 0.0
    %917 = vmatprep.subr.mxu0 0.0
    %918 = vmatpush1.msra.mxu0 0.0
    %919 = vmatprep.subr.mxu0 0.0
    %920 = vmatpush1.msra.mxu0 0.0
    %921 = vmatprep.subr.mxu0 0.0
    %922 = vmatpush1.msra.mxu0 0.0
    %923 = vmatprep.subr.mxu0 0.0
    %924 = vmatpush1.msra.mxu0 0.0
    %925 = vmatprep.subr.mxu0 0.0
    %926 = vmatpush1.msra.mxu0 0.0
    %927 = vmatprep.subr.mxu0 0.0
    %928 = vmatpush1.msra.mxu0 0.0
    %929 = vmatprep.subr.mxu0 0.0
    %930 = vmatpush1.msra.mxu0 0.0
    %931 = vmatprep.subr.mxu0 0.0
    %932 = vmatpush1.msra.mxu0 0.0
    %933 = vmatprep.subr.mxu0 0.0
    %934 = vmatpush1.msra.mxu0 0.0
    %935 = vmatprep.mubr.f32.mxu0 0.0
    %v936 = vand.u32 %v579, 4294901760
    %v937 = vsub.f32 %v579, %v936
    %v938 = vand.u32 %v937, 4294901760
    %939 = vmatmul.mubr.f32.gmra.mrb[0].mxu0 %v938
    %v940 = vpop.f32.mrb[0].mxu0
    %v941 = vadd.f32 %v860, %v940
    %v942 = vpop.f32.mrb[0].mxu0
    %943 = vdwg.mxu0
    %944 = vmatprep.subr.mxu0 0.0
    %v945 = vand.u32 %v13, 4294901760
    %v946 = vsub.f32 %v13, %v945
    %v947 = vand.u32 %v946, 4294901760
    %948 = vmatpush1.msra.mxu0 %v947
    %949 = vmatprep.subr.mxu0 0.0
    %v950 = vand.u32 %v14, 4294901760
    %v951 = vsub.f32 %v14, %v950
    %v952 = vand.u32 %v951, 4294901760
    %953 = vmatpush1.msra.mxu0 %v952
    %954 = vmatprep.subr.mxu0 0.0
    %v955 = vand.u32 %v15, 4294901760
    %v956 = vsub.f32 %v15, %v955
    %v957 = vand.u32 %v956, 4294901760
    %958 = vmatpush1.msra.mxu0 %v957
    %959 = vmatprep.subr.mxu0 0.0
    %v960 = vand.u32 %v16, 4294901760
    %v961 = vsub.f32 %v16, %v960
    %v962 = vand.u32 %v961, 4294901760
    %963 = vmatpush1.msra.mxu0 %v962
    %964 = vmatprep.subr.mxu0 0.0
    %v965 = vand.u32 %v17, 4294901760
    %v966 = vsub.f32 %v17, %v965
    %v967 = vand.u32 %v966, 4294901760
    %968 = vmatpush1.msra.mxu0 %v967
    %969 = vmatprep.subr.mxu0 0.0
    %v970 = vand.u32 %v18, 4294901760
    %v971 = vsub.f32 %v18, %v970
    %v972 = vand.u32 %v971, 4294901760
    %973 = vmatpush1.msra.mxu0 %v972
    %974 = vmatprep.subr.mxu0 0.0
    %v975 = vand.u32 %v19, 4294901760
    %v976 = vsub.f32 %v19, %v975
    %v977 = vand.u32 %v976, 4294901760
    %978 = vmatpush1.msra.mxu0 %v977
    %979 = vmatprep.subr.mxu0 0.0
    %v980 = vand.u32 %v20, 4294901760
    %v981 = vsub.f32 %v20, %v980
    %v982 = vand.u32 %v981, 4294901760
    %983 = vmatpush1.msra.mxu0 %v982
    %984 = vmatprep.subr.mxu0 0.0
    %985 = vmatpush1.msra.mxu0 0.0
    %986 = vmatprep.subr.mxu0 0.0
    %987 = vmatpush1.msra.mxu0 0.0
    %988 = vmatprep.subr.mxu0 0.0
    %989 = vmatpush1.msra.mxu0 0.0
    %990 = vmatprep.subr.mxu0 0.0
    %991 = vmatpush1.msra.mxu0 0.0
    %992 = vmatprep.subr.mxu0 0.0
    %993 = vmatpush1.msra.mxu0 0.0
    %994 = vmatprep.subr.mxu0 0.0
    %995 = vmatpush1.msra.mxu0 0.0
    %996 = vmatprep.subr.mxu0 0.0
    %997 = vmatpush1.msra.mxu0 0.0
    %998 = vmatprep.subr.mxu0 0.0
    %999 = vmatpush1.msra.mxu0 0.0
    %1000 = vmatprep.subr.mxu0 0.0
    %1001 = vmatpush1.msra.mxu0 0.0
    %1002 = vmatprep.subr.mxu0 0.0
    %1003 = vmatpush1.msra.mxu0 0.0
    %1004 = vmatprep.subr.mxu0 0.0
    %1005 = vmatpush1.msra.mxu0 0.0
    %1006 = vmatprep.subr.mxu0 0.0
    %1007 = vmatpush1.msra.mxu0 0.0
    %1008 = vmatprep.subr.mxu0 0.0
    %1009 = vmatpush1.msra.mxu0 0.0
    %1010 = vmatprep.subr.mxu0 0.0
    %1011 = vmatpush1.msra.mxu0 0.0
    %1012 = vmatprep.subr.mxu0 0.0
    %1013 = vmatpush1.msra.mxu0 0.0
    %1014 = vmatprep.subr.mxu0 0.0
    %1015 = vmatpush1.msra.mxu0 0.0
    %1016 = vmatprep.subr.mxu0 0.0
    %1017 = vmatpush1.msra.mxu0 0.0
    %1018 = vmatprep.subr.mxu0 0.0
    %1019 = vmatpush1.msra.mxu0 0.0
    %1020 = vmatprep.subr.mxu0 0.0
    %1021 = vmatpush1.msra.mxu0 0.0
    %1022 = vmatprep.subr.mxu0 0.0
    %1023 = vmatpush1.msra.mxu0 0.0
    %1024 = vmatprep.subr.mxu0 0.0
    %1025 = vmatpush1.msra.mxu0 0.0
    %1026 = vmatprep.subr.mxu0 0.0
    %1027 = vmatpush1.msra.mxu0 0.0
    %1028 = vmatprep.subr.mxu0 0.0
    %1029 = vmatpush1.msra.mxu0 0.0
    %1030 = vmatprep.subr.mxu0 0.0
    %1031 = vmatpush1.msra.mxu0 0.0
    %1032 = vmatprep.mubr.f32.mxu0 0.0
    %v1033 = vand.u32 %v579, 4294901760
    %1034 = vmatmul.mubr.f32.gmra.mrb[0].mxu0 %v1033
    %v1035 = vpop.f32.mrb[0].mxu0
    %v1036 = vadd.f32 %v941, %v1035
    %v1037 = vpop.f32.mrb[0].mxu0
    %1038 = vdwg.mxu0
    %1039 = vmatprep.subr.mxu0 0.0
    %v1040 = vand.u32 %v13, 4294901760
    %1041 = vmatpush1.msra.mxu0 %v1040
    %1042 = vmatprep.subr.mxu0 0.0
    %v1043 = vand.u32 %v14, 4294901760
    %1044 = vmatpush1.msra.mxu0 %v1043
    %1045 = vmatprep.subr.mxu0 0.0
    %v1046 = vand.u32 %v15, 4294901760
    %1047 = vmatpush1.msra.mxu0 %v1046
    %1048 = vmatprep.subr.mxu0 0.0
    %v1049 = vand.u32 %v16, 4294901760
    %1050 = vmatpush1.msra.mxu0 %v1049
    %1051 = vmatprep.subr.mxu0 0.0
    %v1052 = vand.u32 %v17, 4294901760
    %1053 = vmatpush1.msra.mxu0 %v1052
    %1054 = vmatprep.subr.mxu0 0.0
    %v1055 = vand.u32 %v18, 4294901760
    %1056 = vmatpush1.msra.mxu0 %v1055
    %1057 = vmatprep.subr.mxu0 0.0
    %v1058 = vand.u32 %v19, 4294901760
    %1059 = vmatpush1.msra.mxu0 %v1058
    %1060 = vmatprep.subr.mxu0 0.0
    %v1061 = vand.u32 %v20, 4294901760
    %1062 = vmatpush1.msra.mxu0 %v1061
    %1063 = vmatprep.subr.mxu0 0.0
    %1064 = vmatpush1.msra.mxu0 0.0
    %1065 = vmatprep.subr.mxu0 0.0
    %1066 = vmatpush1.msra.mxu0 0.0
    %1067 = vmatprep.subr.mxu0 0.0
    %1068 = vmatpush1.msra.mxu0 0.0
    %1069 = vmatprep.subr.mxu0 0.0
    %1070 = vmatpush1.msra.mxu0 0.0
    %1071 = vmatprep.subr.mxu0 0.0
    %1072 = vmatpush1.msra.mxu0 0.0
    %1073 = vmatprep.subr.mxu0 0.0
    %1074 = vmatpush1.msra.mxu0 0.0
    %1075 = vmatprep.subr.mxu0 0.0
    %1076 = vmatpush1.msra.mxu0 0.0
    %1077 = vmatprep.subr.mxu0 0.0
    %1078 = vmatpush1.msra.mxu0 0.0
    %1079 = vmatprep.subr.mxu0 0.0
    %1080 = vmatpush1.msra.mxu0 0.0
    %1081 = vmatprep.subr.mxu0 0.0
    %1082 = vmatpush1.msra.mxu0 0.0
    %1083 = vmatprep.subr.mxu0 0.0
    %1084 = vmatpush1.msra.mxu0 0.0
    %1085 = vmatprep.subr.mxu0 0.0
    %1086 = vmatpush1.msra.mxu0 0.0
    %1087 = vmatprep.subr.mxu0 0.0
    %1088 = vmatpush1.msra.mxu0 0.0
    %1089 = vmatprep.subr.mxu0 0.0
    %1090 = vmatpush1.msra.mxu0 0.0
    %1091 = vmatprep.subr.mxu0 0.0
    %1092 = vmatpush1.msra.mxu0 0.0
    %1093 = vmatprep.subr.mxu0 0.0
    %1094 = vmatpush1.msra.mxu0 0.0
    %1095 = vmatprep.subr.mxu0 0.0
    %1096 = vmatpush1.msra.mxu0 0.0
    %1097 = vmatprep.subr.mxu0 0.0
    %1098 = vmatpush1.msra.mxu0 0.0
    %1099 = vmatprep.subr.mxu0 0.0
    %1100 = vmatpush1.msra.mxu0 0.0
    %1101 = vmatprep.subr.mxu0 0.0
    %1102 = vmatpush1.msra.mxu0 0.0
    %1103 = vmatprep.subr.mxu0 0.0
    %1104 = vmatpush1.msra.mxu0 0.0
    %1105 = vmatprep.subr.mxu0 0.0
    %1106 = vmatpush1.msra.mxu0 0.0
    %1107 = vmatprep.subr.mxu0 0.0
    %1108 = vmatpush1.msra.mxu0 0.0
    %1109 = vmatprep.subr.mxu0 0.0
    %1110 = vmatpush1.msra.mxu0 0.0
    %1111 = vmatprep.mubr.f32.mxu0 0.0
    %v1112 = vand.u32 %v579, 4294901760
    %1113 = vmatmul.mubr.f32.gmra.mrb[0].mxu0 %v1112
    %v1114 = vpop.f32.mrb[0].mxu0
    %v1115 = vadd.f32 %v1036, %v1114
    %v1116 = vpop.f32.mrb[0].mxu0
    %1117 = vdwg.mxu0
    %1119 = vrot.lane.b32.xlu0 %v1115, 32
    %v1120 = vpop.permute.xlu0 %1119
    %vm1122 = vcmask 523520
    %1123 = vst.msk [vmem:[#allocation2] sm:$0xff] %vm1122, %v1120
    %1124 = vset.pattern.permute.xlu0 2
    %1125 = vperm.xlu0 %1124, %v12
    %v1126 = vpop.permute.xlu0 %1125
    %vm1127 = vcmp.eq.s32.totalorder %v1126, %v22
    %v1128 = vsel %vm1127, 1, 0
    %v1129 = vcvt.s32.f32 %v1128
    %v1131 = vsel %vm29, %v1129, 0
    %1133 = vmatprep.subr.mxu0 0.0
    %v1134 = vand.u32 %v13, 4294901760
    %1135 = vmatpush1.msra.mxu0 %v1134
    %1136 = vmatprep.subr.mxu0 0.0
    %v1137 = vand.u32 %v14, 4294901760
    %1138 = vmatpush1.msra.mxu0 %v1137
    %1139 = vmatprep.subr.mxu0 0.0
    %v1140 = vand.u32 %v15, 4294901760
    %1141 = vmatpush1.msra.mxu0 %v1140
    %1142 = vmatprep.subr.mxu0 0.0
    %v1143 = vand.u32 %v16, 4294901760
    %1144 = vmatpush1.msra.mxu0 %v1143
    %1145 = vmatprep.subr.mxu0 0.0
    %v1146 = vand.u32 %v17, 4294901760
    %1147 = vmatpush1.msra.mxu0 %v1146
    %1148 = vmatprep.subr.mxu0 0.0
    %v1149 = vand.u32 %v18, 4294901760
    %1150 = vmatpush1.msra.mxu0 %v1149
    %1151 = vmatprep.subr.mxu0 0.0
    %v1152 = vand.u32 %v19, 4294901760
    %1153 = vmatpush1.msra.mxu0 %v1152
    %1154 = vmatprep.subr.mxu0 0.0
    %v1155 = vand.u32 %v20, 4294901760
    %1156 = vmatpush1.msra.mxu0 %v1155
    %1157 = vmatprep.subr.mxu0 0.0
    %1158 = vmatpush1.msra.mxu0 0.0
    %1159 = vmatprep.subr.mxu0 0.0
    %1160 = vmatpush1.msra.mxu0 0.0
    %1161 = vmatprep.subr.mxu0 0.0
    %1162 = vmatpush1.msra.mxu0 0.0
    %1163 = vmatprep.subr.mxu0 0.0
    %1164 = vmatpush1.msra.mxu0 0.0
    %1165 = vmatprep.subr.mxu0 0.0
    %1166 = vmatpush1.msra.mxu0 0.0
    %1167 = vmatprep.subr.mxu0 0.0
    %1168 = vmatpush1.msra.mxu0 0.0
    %1169 = vmatprep.subr.mxu0 0.0
    %1170 = vmatpush1.msra.mxu0 0.0
    %1171 = vmatprep.subr.mxu0 0.0
    %1172 = vmatpush1.msra.mxu0 0.0
    %1173 = vmatprep.subr.mxu0 0.0
    %1174 = vmatpush1.msra.mxu0 0.0
    %1175 = vmatprep.subr.mxu0 0.0
    %1176 = vmatpush1.msra.mxu0 0.0
    %1177 = vmatprep.subr.mxu0 0.0
    %1178 = vmatpush1.msra.mxu0 0.0
    %1179 = vmatprep.subr.mxu0 0.0
    %1180 = vmatpush1.msra.mxu0 0.0
    %1181 = vmatprep.subr.mxu0 0.0
    %1182 = vmatpush1.msra.mxu0 0.0
    %1183 = vmatprep.subr.mxu0 0.0
    %1184 = vmatpush1.msra.mxu0 0.0
    %1185 = vmatprep.subr.mxu0 0.0
    %1186 = vmatpush1.msra.mxu0 0.0
    %1187 = vmatprep.subr.mxu0 0.0
    %1188 = vmatpush1.msra.mxu0 0.0
    %1189 = vmatprep.subr.mxu0 0.0
    %1190 = vmatpush1.msra.mxu0 0.0
    %1191 = vmatprep.subr.mxu0 0.0
    %1192 = vmatpush1.msra.mxu0 0.0
    %1193 = vmatprep.subr.mxu0 0.0
    %1194 = vmatpush1.msra.mxu0 0.0
    %1195 = vmatprep.subr.mxu0 0.0
    %1196 = vmatpush1.msra.mxu0 0.0
    %1197 = vmatprep.subr.mxu0 0.0
    %1198 = vmatpush1.msra.mxu0 0.0
    %1199 = vmatprep.subr.mxu0 0.0
    %1200 = vmatpush1.msra.mxu0 0.0
    %1201 = vmatprep.subr.mxu0 0.0
    %1202 = vmatpush1.msra.mxu0 0.0
    %1203 = vmatprep.subr.mxu0 0.0
    %1204 = vmatpush1.msra.mxu0 0.0
    %1205 = vmatprep.mubr.f32.mxu0 0.0
    %v1206 = vand.u32 %v1131, 4294901760
    %v1207 = vsub.f32 %v1131, %v1206
    %v1208 = vand.u32 %v1207, 4294901760
    %v1209 = vsub.f32 %v1207, %v1208
    %v1210 = vand.u32 %v1209, 4294901760
    %1211 = vmatmul.mubr.f32.gmra.mrb[0].mxu0 %v1210
    %v1212 = vpop.f32.mrb[0].mxu0
    %v1213 = vadd.f32 0.0, %v1212
    %v1214 = vpop.f32.mrb[0].mxu0
    %1215 = vdwg.mxu0
    %1216 = vmatprep.subr.mxu0 0.0
    %v1217 = vand.u32 %v13, 4294901760
    %v1218 = vsub.f32 %v13, %v1217
    %v1219 = vand.u32 %v1218, 4294901760
    %v1220 = vsub.f32 %v1218, %v1219
    %v1221 = vand.u32 %v1220, 4294901760
    %1222 = vmatpush1.msra.mxu0 %v1221
    %1223 = vmatprep.subr.mxu0 0.0
    %v1224 = vand.u32 %v14, 4294901760
    %v1225 = vsub.f32 %v14, %v1224
    %v1226 = vand.u32 %v1225, 4294901760
    %v1227 = vsub.f32 %v1225, %v1226
    %v1228 = vand.u32 %v1227, 4294901760
    %1229 = vmatpush1.msra.mxu0 %v1228
    %1230 = vmatprep.subr.mxu0 0.0
    %v1231 = vand.u32 %v15, 4294901760
    %v1232 = vsub.f32 %v15, %v1231
    %v1233 = vand.u32 %v1232, 4294901760
    %v1234 = vsub.f32 %v1232, %v1233
    %v1235 = vand.u32 %v1234, 4294901760
    %1236 = vmatpush1.msra.mxu0 %v1235
    %1237 = vmatprep.subr.mxu0 0.0
    %v1238 = vand.u32 %v16, 4294901760
    %v1239 = vsub.f32 %v16, %v1238
    %v1240 = vand.u32 %v1239, 4294901760
    %v1241 = vsub.f32 %v1239, %v1240
    %v1242 = vand.u32 %v1241, 4294901760
    %1243 = vmatpush1.msra.mxu0 %v1242
    %1244 = vmatprep.subr.mxu0 0.0
    %v1245 = vand.u32 %v17, 4294901760
    %v1246 = vsub.f32 %v17, %v1245
    %v1247 = vand.u32 %v1246, 4294901760
    %v1248 = vsub.f32 %v1246, %v1247
    %v1249 = vand.u32 %v1248, 4294901760
    %1250 = vmatpush1.msra.mxu0 %v1249
    %1251 = vmatprep.subr.mxu0 0.0
    %v1252 = vand.u32 %v18, 4294901760
    %v1253 = vsub.f32 %v18, %v1252
    %v1254 = vand.u32 %v1253, 4294901760
    %v1255 = vsub.f32 %v1253, %v1254
    %v1256 = vand.u32 %v1255, 4294901760
    %1257 = vmatpush1.msra.mxu0 %v1256
    %1258 = vmatprep.subr.mxu0 0.0
    %v1259 = vand.u32 %v19, 4294901760
    %v1260 = vsub.f32 %v19, %v1259
    %v1261 = vand.u32 %v1260, 4294901760
    %v1262 = vsub.f32 %v1260, %v1261
    %v1263 = vand.u32 %v1262, 4294901760
    %1264 = vmatpush1.msra.mxu0 %v1263
    %1265 = vmatprep.subr.mxu0 0.0
    %v1266 = vand.u32 %v20, 4294901760
    %v1267 = vsub.f32 %v20, %v1266
    %v1268 = vand.u32 %v1267, 4294901760
    %v1269 = vsub.f32 %v1267, %v1268
    %v1270 = vand.u32 %v1269, 4294901760
    %1271 = vmatpush1.msra.mxu0 %v1270
    %1272 = vmatprep.subr.mxu0 0.0
    %1273 = vmatpush1.msra.mxu0 0.0
    %1274 = vmatprep.subr.mxu0 0.0
    %1275 = vmatpush1.msra.mxu0 0.0
    %1276 = vmatprep.subr.mxu0 0.0
    %1277 = vmatpush1.msra.mxu0 0.0
    %1278 = vmatprep.subr.mxu0 0.0
    %1279 = vmatpush1.msra.mxu0 0.0
    %1280 = vmatprep.subr.mxu0 0.0
    %1281 = vmatpush1.msra.mxu0 0.0
    %1282 = vmatprep.subr.mxu0 0.0
    %1283 = vmatpush1.msra.mxu0 0.0
    %1284 = vmatprep.subr.mxu0 0.0
    %1285 = vmatpush1.msra.mxu0 0.0
    %1286 = vmatprep.subr.mxu0 0.0
    %1287 = vmatpush1.msra.mxu0 0.0
    %1288 = vmatprep.subr.mxu0 0.0
    %1289 = vmatpush1.msra.mxu0 0.0
    %1290 = vmatprep.subr.mxu0 0.0
    %1291 = vmatpush1.msra.mxu0 0.0
    %1292 = vmatprep.subr.mxu0 0.0
    %1293 = vmatpush1.msra.mxu0 0.0
    %1294 = vmatprep.subr.mxu0 0.0
    %1295 = vmatpush1.msra.mxu0 0.0
    %1296 = vmatprep.subr.mxu0 0.0
    %1297 = vmatpush1.msra.mxu0 0.0
    %1298 = vmatprep.subr.mxu0 0.0
    %1299 = vmatpush1.msra.mxu0 0.0
    %1300 = vmatprep.subr.mxu0 0.0
    %1301 = vmatpush1.msra.mxu0 0.0
    %1302 = vmatprep.subr.mxu0 0.0
    %1303 = vmatpush1.msra.mxu0 0.0
    %1304 = vmatprep.subr.mxu0 0.0
    %1305 = vmatpush1.msra.mxu0 0.0
    %1306 = vmatprep.subr.mxu0 0.0
    %1307 = vmatpush1.msra.mxu0 0.0
    %1308 = vmatprep.subr.mxu0 0.0
    %1309 = vmatpush1.msra.mxu0 0.0
    %1310 = vmatprep.subr.mxu0 0.0
    %1311 = vmatpush1.msra.mxu0 0.0
    %1312 = vmatprep.subr.mxu0 0.0
    %1313 = vmatpush1.msra.mxu0 0.0
    %1314 = vmatprep.subr.mxu0 0.0
    %1315 = vmatpush1.msra.mxu0 0.0
    %1316 = vmatprep.subr.mxu0 0.0
    %1317 = vmatpush1.msra.mxu0 0.0
    %1318 = vmatprep.subr.mxu0 0.0
    %1319 = vmatpush1.msra.mxu0 0.0
    %1320 = vmatprep.mubr.f32.mxu0 0.0
    %v1321 = vand.u32 %v1131, 4294901760
    %1322 = vmatmul.mubr.f32.gmra.mrb[0].mxu0 %v1321
    %v1323 = vpop.f32.mrb[0].mxu0
    %v1324 = vadd.f32 %v1213, %v1323
    %v1325 = vpop.f32.mrb[0].mxu0
    %1326 = vdwg.mxu0
    %1327 = vmatprep.subr.mxu0 0.0
    %v1328 = vand.u32 %v13, 4294901760
    %v1329 = vsub.f32 %v13, %v1328
    %1330 = vmatpush1.msra.mxu0 %v1329
    %1331 = vmatprep.subr.mxu0 0.0
    %v1332 = vand.u32 %v14, 4294901760
    %v1333 = vsub.f32 %v14, %v1332
    %1334 = vmatpush1.msra.mxu0 %v1333
    %1335 = vmatprep.subr.mxu0 0.0
    %v1336 = vand.u32 %v15, 4294901760
    %v1337 = vsub.f32 %v15, %v1336
    %1338 = vmatpush1.msra.mxu0 %v1337
    %1339 = vmatprep.subr.mxu0 0.0
    %v1340 = vand.u32 %v16, 4294901760
    %v1341 = vsub.f32 %v16, %v1340
    %1342 = vmatpush1.msra.mxu0 %v1341
    %1343 = vmatprep.subr.mxu0 0.0
    %v1344 = vand.u32 %v17, 4294901760
    %v1345 = vsub.f32 %v17, %v1344
    %1346 = vmatpush1.msra.mxu0 %v1345
    %1347 = vmatprep.subr.mxu0 0.0
    %v1348 = vand.u32 %v18, 4294901760
    %v1349 = vsub.f32 %v18, %v1348
    %1350 = vmatpush1.msra.mxu0 %v1349
    %1351 = vmatprep.subr.mxu0 0.0
    %v1352 = vand.u32 %v19, 4294901760
    %v1353 = vsub.f32 %v19, %v1352
    %1354 = vmatpush1.msra.mxu0 %v1353
    %1355 = vmatprep.subr.mxu0 0.0
    %v1356 = vand.u32 %v20, 4294901760
    %v1357 = vsub.f32 %v20, %v1356
    %1358 = vmatpush1.msra.mxu0 %v1357
    %1359 = vmatprep.subr.mxu0 0.0
    %1360 = vmatpush1.msra.mxu0 0.0
    %1361 = vmatprep.subr.mxu0 0.0
    %1362 = vmatpush1.msra.mxu0 0.0
    %1363 = vmatprep.subr.mxu0 0.0
    %1364 = vmatpush1.msra.mxu0 0.0
    %1365 = vmatprep.subr.mxu0 0.0
    %1366 = vmatpush1.msra.mxu0 0.0
    %1367 = vmatprep.subr.mxu0 0.0
    %1368 = vmatpush1.msra.mxu0 0.0
    %1369 = vmatprep.subr.mxu0 0.0
    %1370 = vmatpush1.msra.mxu0 0.0
    %1371 = vmatprep.subr.mxu0 0.0
    %1372 = vmatpush1.msra.mxu0 0.0
    %1373 = vmatprep.subr.mxu0 0.0
    %1374 = vmatpush1.msra.mxu0 0.0
    %1375 = vmatprep.subr.mxu0 0.0
    %1376 = vmatpush1.msra.mxu0 0.0
    %1377 = vmatprep.subr.mxu0 0.0
    %1378 = vmatpush1.msra.mxu0 0.0
    %1379 = vmatprep.subr.mxu0 0.0
    %1380 = vmatpush1.msra.mxu0 0.0
    %1381 = vmatprep.subr.mxu0 0.0
    %1382 = vmatpush1.msra.mxu0 0.0
    %1383 = vmatprep.subr.mxu0 0.0
    %1384 = vmatpush1.msra.mxu0 0.0
    %1385 = vmatprep.subr.mxu0 0.0
    %1386 = vmatpush1.msra.mxu0 0.0
    %1387 = vmatprep.subr.mxu0 0.0
    %1388 = vmatpush1.msra.mxu0 0.0
    %1389 = vmatprep.subr.mxu0 0.0
    %1390 = vmatpush1.msra.mxu0 0.0
    %1391 = vmatprep.subr.mxu0 0.0
    %1392 = vmatpush1.msra.mxu0 0.0
    %1393 = vmatprep.subr.mxu0 0.0
    %1394 = vmatpush1.msra.mxu0 0.0
    %1395 = vmatprep.subr.mxu0 0.0
    %1396 = vmatpush1.msra.mxu0 0.0
    %1397 = vmatprep.subr.mxu0 0.0
    %1398 = vmatpush1.msra.mxu0 0.0
    %1399 = vmatprep.subr.mxu0 0.0
    %1400 = vmatpush1.msra.mxu0 0.0
    %1401 = vmatprep.subr.mxu0 0.0
    %1402 = vmatpush1.msra.mxu0 0.0
    %1403 = vmatprep.subr.mxu0 0.0
    %1404 = vmatpush1.msra.mxu0 0.0
    %1405 = vmatprep.subr.mxu0 0.0
    %1406 = vmatpush1.msra.mxu0 0.0
    %1407 = vmatprep.mubr.f32.mxu0 0.0
    %v1408 = vand.u32 %v1131, 4294901760
    %v1409 = vsub.f32 %v1131, %v1408
    %1410 = vmatmul.mubr.f32.gmra.mrb[0].mxu0 %v1409
    %v1411 = vpop.f32.mrb[0].mxu0
    %v1412 = vadd.f32 %v1324, %v1411
    %v1413 = vpop.f32.mrb[0].mxu0
    %1414 = vdwg.mxu0
    %1415 = vmatprep.subr.mxu0 0.0
    %v1416 = vand.u32 %v13, 4294901760
    %1417 = vmatpush1.msra.mxu0 %v1416
    %1418 = vmatprep.subr.mxu0 0.0
    %v1419 = vand.u32 %v14, 4294901760
    %1420 = vmatpush1.msra.mxu0 %v1419
    %1421 = vmatprep.subr.mxu0 0.0
    %v1422 = vand.u32 %v15, 4294901760
    %1423 = vmatpush1.msra.mxu0 %v1422
    %1424 = vmatprep.subr.mxu0 0.0
    %v1425 = vand.u32 %v16, 4294901760
    %1426 = vmatpush1.msra.mxu0 %v1425
    %1427 = vmatprep.subr.mxu0 0.0
    %v1428 = vand.u32 %v17, 4294901760
    %1429 = vmatpush1.msra.mxu0 %v1428
    %1430 = vmatprep.subr.mxu0 0.0
    %v1431 = vand.u32 %v18, 4294901760
    %1432 = vmatpush1.msra.mxu0 %v1431
    %1433 = vmatprep.subr.mxu0 0.0
    %v1434 = vand.u32 %v19, 4294901760
    %1435 = vmatpush1.msra.mxu0 %v1434
    %1436 = vmatprep.subr.mxu0 0.0
    %v1437 = vand.u32 %v20, 4294901760
    %1438 = vmatpush1.msra.mxu0 %v1437
    %1439 = vmatprep.subr.mxu0 0.0
    %1440 = vmatpush1.msra.mxu0 0.0
    %1441 = vmatprep.subr.mxu0 0.0
    %1442 = vmatpush1.msra.mxu0 0.0
    %1443 = vmatprep.subr.mxu0 0.0
    %1444 = vmatpush1.msra.mxu0 0.0
    %1445 = vmatprep.subr.mxu0 0.0
    %1446 = vmatpush1.msra.mxu0 0.0
    %1447 = vmatprep.subr.mxu0 0.0
    %1448 = vmatpush1.msra.mxu0 0.0
    %1449 = vmatprep.subr.mxu0 0.0
    %1450 = vmatpush1.msra.mxu0 0.0
    %1451 = vmatprep.subr.mxu0 0.0
    %1452 = vmatpush1.msra.mxu0 0.0
    %1453 = vmatprep.subr.mxu0 0.0
    %1454 = vmatpush1.msra.mxu0 0.0
    %1455 = vmatprep.subr.mxu0 0.0
    %1456 = vmatpush1.msra.mxu0 0.0
    %1457 = vmatprep.subr.mxu0 0.0
    %1458 = vmatpush1.msra.mxu0 0.0
    %1459 = vmatprep.subr.mxu0 0.0
    %1460 = vmatpush1.msra.mxu0 0.0
    %1461 = vmatprep.subr.mxu0 0.0
    %1462 = vmatpush1.msra.mxu0 0.0
    %1463 = vmatprep.subr.mxu0 0.0
    %1464 = vmatpush1.msra.mxu0 0.0
    %1465 = vmatprep.subr.mxu0 0.0
    %1466 = vmatpush1.msra.mxu0 0.0
    %1467 = vmatprep.subr.mxu0 0.0
    %1468 = vmatpush1.msra.mxu0 0.0
    %1469 = vmatprep.subr.mxu0 0.0
    %1470 = vmatpush1.msra.mxu0 0.0
    %1471 = vmatprep.subr.mxu0 0.0
    %1472 = vmatpush1.msra.mxu0 0.0
    %1473 = vmatprep.subr.mxu0 0.0
    %1474 = vmatpush1.msra.mxu0 0.0
    %1475 = vmatprep.subr.mxu0 0.0
    %1476 = vmatpush1.msra.mxu0 0.0
    %1477 = vmatprep.subr.mxu0 0.0
    %1478 = vmatpush1.msra.mxu0 0.0
    %1479 = vmatprep.subr.mxu0 0.0
    %1480 = vmatpush1.msra.mxu0 0.0
    %1481 = vmatprep.subr.mxu0 0.0
    %1482 = vmatpush1.msra.mxu0 0.0
    %1483 = vmatprep.subr.mxu0 0.0
    %1484 = vmatpush1.msra.mxu0 0.0
    %1485 = vmatprep.subr.mxu0 0.0
    %1486 = vmatpush1.msra.mxu0 0.0
    %1487 = vmatprep.mubr.f32.mxu0 0.0
    %v1488 = vand.u32 %v1131, 4294901760
    %v1489 = vsub.f32 %v1131, %v1488
    %v1490 = vand.u32 %v1489, 4294901760
    %1491 = vmatmul.mubr.f32.gmra.mrb[0].mxu0 %v1490
    %v1492 = vpop.f32.mrb[0].mxu0
    %v1493 = vadd.f32 %v1412, %v1492
    %v1494 = vpop.f32.mrb[0].mxu0
    %1495 = vdwg.mxu0
    %1496 = vmatprep.subr.mxu0 0.0
    %v1497 = vand.u32 %v13, 4294901760
    %v1498 = vsub.f32 %v13, %v1497
    %v1499 = vand.u32 %v1498, 4294901760
    %1500 = vmatpush1.msra.mxu0 %v1499
    %1501 = vmatprep.subr.mxu0 0.0
    %v1502 = vand.u32 %v14, 4294901760
    %v1503 = vsub.f32 %v14, %v1502
    %v1504 = vand.u32 %v1503, 4294901760
    %1505 = vmatpush1.msra.mxu0 %v1504
    %1506 = vmatprep.subr.mxu0 0.0
    %v1507 = vand.u32 %v15, 4294901760
    %v1508 = vsub.f32 %v15, %v1507
    %v1509 = vand.u32 %v1508, 4294901760
    %1510 = vmatpush1.msra.mxu0 %v1509
    %1511 = vmatprep.subr.mxu0 0.0
    %v1512 = vand.u32 %v16, 4294901760
    %v1513 = vsub.f32 %v16, %v1512
    %v1514 = vand.u32 %v1513, 4294901760
    %1515 = vmatpush1.msra.mxu0 %v1514
    %1516 = vmatprep.subr.mxu0 0.0
    %v1517 = vand.u32 %v17, 4294901760
    %v1518 = vsub.f32 %v17, %v1517
    %v1519 = vand.u32 %v1518, 4294901760
    %1520 = vmatpush1.msra.mxu0 %v1519
    %1521 = vmatprep.subr.mxu0 0.0
    %v1522 = vand.u32 %v18, 4294901760
    %v1523 = vsub.f32 %v18, %v1522
    %v1524 = vand.u32 %v1523, 4294901760
    %1525 = vmatpush1.msra.mxu0 %v1524
    %1526 = vmatprep.subr.mxu0 0.0
    %v1527 = vand.u32 %v19, 4294901760
    %v1528 = vsub.f32 %v19, %v1527
    %v1529 = vand.u32 %v1528, 4294901760
    %1530 = vmatpush1.msra.mxu0 %v1529
    %1531 = vmatprep.subr.mxu0 0.0
    %v1532 = vand.u32 %v20, 4294901760
    %v1533 = vsub.f32 %v20, %v1532
    %v1534 = vand.u32 %v1533, 4294901760
    %1535 = vmatpush1.msra.mxu0 %v1534
    %1536 = vmatprep.subr.mxu0 0.0
    %1537 = vmatpush1.msra.mxu0 0.0
    %1538 = vmatprep.subr.mxu0 0.0
    %1539 = vmatpush1.msra.mxu0 0.0
    %1540 = vmatprep.subr.mxu0 0.0
    %1541 = vmatpush1.msra.mxu0 0.0
    %1542 = vmatprep.subr.mxu0 0.0
    %1543 = vmatpush1.msra.mxu0 0.0
    %1544 = vmatprep.subr.mxu0 0.0
    %1545 = vmatpush1.msra.mxu0 0.0
    %1546 = vmatprep.subr.mxu0 0.0
    %1547 = vmatpush1.msra.mxu0 0.0
    %1548 = vmatprep.subr.mxu0 0.0
    %1549 = vmatpush1.msra.mxu0 0.0
    %1550 = vmatprep.subr.mxu0 0.0
    %1551 = vmatpush1.msra.mxu0 0.0
    %1552 = vmatprep.subr.mxu0 0.0
    %1553 = vmatpush1.msra.mxu0 0.0
    %1554 = vmatprep.subr.mxu0 0.0
    %1555 = vmatpush1.msra.mxu0 0.0
    %1556 = vmatprep.subr.mxu0 0.0
    %1557 = vmatpush1.msra.mxu0 0.0
    %1558 = vmatprep.subr.mxu0 0.0
    %1559 = vmatpush1.msra.mxu0 0.0
    %1560 = vmatprep.subr.mxu0 0.0
    %1561 = vmatpush1.msra.mxu0 0.0
    %1562 = vmatprep.subr.mxu0 0.0
    %1563 = vmatpush1.msra.mxu0 0.0
    %1564 = vmatprep.subr.mxu0 0.0
    %1565 = vmatpush1.msra.mxu0 0.0
    %1566 = vmatprep.subr.mxu0 0.0
    %1567 = vmatpush1.msra.mxu0 0.0
    %1568 = vmatprep.subr.mxu0 0.0
    %1569 = vmatpush1.msra.mxu0 0.0
    %1570 = vmatprep.subr.mxu0 0.0
    %1571 = vmatpush1.msra.mxu0 0.0
    %1572 = vmatprep.subr.mxu0 0.0
    %1573 = vmatpush1.msra.mxu0 0.0
    %1574 = vmatprep.subr.mxu0 0.0
    %1575 = vmatpush1.msra.mxu0 0.0
    %1576 = vmatprep.subr.mxu0 0.0
    %1577 = vmatpush1.msra.mxu0 0.0
    %1578 = vmatprep.subr.mxu0 0.0
    %1579 = vmatpush1.msra.mxu0 0.0
    %1580 = vmatprep.subr.mxu0 0.0
    %1581 = vmatpush1.msra.mxu0 0.0
    %1582 = vmatprep.subr.mxu0 0.0
    %1583 = vmatpush1.msra.mxu0 0.0
    %1584 = vmatprep.mubr.f32.mxu0 0.0
    %v1585 = vand.u32 %v1131, 4294901760
    %1586 = vmatmul.mubr.f32.gmra.mrb[0].mxu0 %v1585
    %v1587 = vpop.f32.mrb[0].mxu0
    %v1588 = vadd.f32 %v1493, %v1587
    %v1589 = vpop.f32.mrb[0].mxu0
    %1590 = vdwg.mxu0
    %1591 = vmatprep.subr.mxu0 0.0
    %v1592 = vand.u32 %v13, 4294901760
    %1593 = vmatpush1.msra.mxu0 %v1592
    %1594 = vmatprep.subr.mxu0 0.0
    %v1595 = vand.u32 %v14, 4294901760
    %1596 = vmatpush1.msra.mxu0 %v1595
    %1597 = vmatprep.subr.mxu0 0.0
    %v1598 = vand.u32 %v15, 4294901760
    %1599 = vmatpush1.msra.mxu0 %v1598
    %1600 = vmatprep.subr.mxu0 0.0
    %v1601 = vand.u32 %v16, 4294901760
    %1602 = vmatpush1.msra.mxu0 %v1601
    %1603 = vmatprep.subr.mxu0 0.0
    %v1604 = vand.u32 %v17, 4294901760
    %1605 = vmatpush1.msra.mxu0 %v1604
    %1606 = vmatprep.subr.mxu0 0.0
    %v1607 = vand.u32 %v18, 4294901760
    %1608 = vmatpush1.msra.mxu0 %v1607
    %1609 = vmatprep.subr.mxu0 0.0
    %v1610 = vand.u32 %v19, 4294901760
    %1611 = vmatpush1.msra.mxu0 %v1610
    %1612 = vmatprep.subr.mxu0 0.0
    %v1613 = vand.u32 %v20, 4294901760
    %1614 = vmatpush1.msra.mxu0 %v1613
    %1615 = vmatprep.subr.mxu0 0.0
    %1616 = vmatpush1.msra.mxu0 0.0
    %1617 = vmatprep.subr.mxu0 0.0
    %1618 = vmatpush1.msra.mxu0 0.0
    %1619 = vmatprep.subr.mxu0 0.0
    %1620 = vmatpush1.msra.mxu0 0.0
    %1621 = vmatprep.subr.mxu0 0.0
    %1622 = vmatpush1.msra.mxu0 0.0
    %1623 = vmatprep.subr.mxu0 0.0
    %1624 = vmatpush1.msra.mxu0 0.0
    %1625 = vmatprep.subr.mxu0 0.0
    %1626 = vmatpush1.msra.mxu0 0.0
    %1627 = vmatprep.subr.mxu0 0.0
    %1628 = vmatpush1.msra.mxu0 0.0
    %1629 = vmatprep.subr.mxu0 0.0
    %1630 = vmatpush1.msra.mxu0 0.0
    %1631 = vmatprep.subr.mxu0 0.0
    %1632 = vmatpush1.msra.mxu0 0.0
    %1633 = vmatprep.subr.mxu0 0.0
    %1634 = vmatpush1.msra.mxu0 0.0
    %1635 = vmatprep.subr.mxu0 0.0
    %1636 = vmatpush1.msra.mxu0 0.0
    %1637 = vmatprep.subr.mxu0 0.0
    %1638 = vmatpush1.msra.mxu0 0.0
    %1639 = vmatprep.subr.mxu0 0.0
    %1640 = vmatpush1.msra.mxu0 0.0
    %1641 = vmatprep.subr.mxu0 0.0
    %1642 = vmatpush1.msra.mxu0 0.0
    %1643 = vmatprep.subr.mxu0 0.0
    %1644 = vmatpush1.msra.mxu0 0.0
    %1645 = vmatprep.subr.mxu0 0.0
    %1646 = vmatpush1.msra.mxu0 0.0
    %1647 = vmatprep.subr.mxu0 0.0
    %1648 = vmatpush1.msra.mxu0 0.0
    %1649 = vmatprep.subr.mxu0 0.0
    %1650 = vmatpush1.msra.mxu0 0.0
    %1651 = vmatprep.subr.mxu0 0.0
    %1652 = vmatpush1.msra.mxu0 0.0
    %1653 = vmatprep.subr.mxu0 0.0
    %1654 = vmatpush1.msra.mxu0 0.0
    %1655 = vmatprep.subr.mxu0 0.0
    %1656 = vmatpush1.msra.mxu0 0.0
    %1657 = vmatprep.subr.mxu0 0.0
    %1658 = vmatpush1.msra.mxu0 0.0
    %1659 = vmatprep.subr.mxu0 0.0
    %1660 = vmatpush1.msra.mxu0 0.0
    %1661 = vmatprep.subr.mxu0 0.0
    %1662 = vmatpush1.msra.mxu0 0.0
    %1663 = vmatprep.mubr.f32.mxu0 0.0
    %v1664 = vand.u32 %v1131, 4294901760
    %1665 = vmatmul.mubr.f32.gmra.mrb[0].mxu0 %v1664
    %v1666 = vpop.f32.mrb[0].mxu0
    %v1667 = vadd.f32 %v1588, %v1666
    %v1668 = vpop.f32.mrb[0].mxu0
    %1669 = vdwg.mxu0
    %1671 = vrot.lane.b32.xlu0 %v1667, 64
    %v1672 = vpop.permute.xlu0 %1671
    %vm1674 = vcmask 785920
    %1675 = vst.msk [vmem:[#allocation2] sm:$0xff] %vm1674, %v1672
    %1676 = vset.pattern.permute.xlu0 3
    %1677 = vperm.xlu0 %1676, %v12
    %v1678 = vpop.permute.xlu0 %1677
    %vm1679 = vcmp.eq.s32.totalorder %v1678, %v22
    %v1680 = vsel %vm1679, 1, 0
    %v1681 = vcvt.s32.f32 %v1680
    %v1683 = vsel %vm29, %v1681, 0
    %1685 = vmatprep.subr.mxu0 0.0
    %v1686 = vand.u32 %v13, 4294901760
    %1687 = vmatpush1.msra.mxu0 %v1686
    %1688 = vmatprep.subr.mxu0 0.0
    %v1689 = vand.u32 %v14, 4294901760
    %1690 = vmatpush1.msra.mxu0 %v1689
    %1691 = vmatprep.subr.mxu0 0.0
    %v1692 = vand.u32 %v15, 4294901760
    %1693 = vmatpush1.msra.mxu0 %v1692
    %1694 = vmatprep.subr.mxu0 0.0
    %v1695 = vand.u32 %v16, 4294901760
    %1696 = vmatpush1.msra.mxu0 %v1695
    %1697 = vmatprep.subr.mxu0 0.0
    %v1698 = vand.u32 %v17, 4294901760
    %1699 = vmatpush1.msra.mxu0 %v1698
    %1700 = vmatprep.subr.mxu0 0.0
    %v1701 = vand.u32 %v18, 4294901760
    %1702 = vmatpush1.msra.mxu0 %v1701
    %1703 = vmatprep.subr.mxu0 0.0
    %v1704 = vand.u32 %v19, 4294901760
    %1705 = vmatpush1.msra.mxu0 %v1704
    %1706 = vmatprep.subr.mxu0 0.0
    %v1707 = vand.u32 %v20, 4294901760
    %1708 = vmatpush1.msra.mxu0 %v1707
    %1709 = vmatprep.subr.mxu0 0.0
    %1710 = vmatpush1.msra.mxu0 0.0
    %1711 = vmatprep.subr.mxu0 0.0
    %1712 = vmatpush1.msra.mxu0 0.0
    %1713 = vmatprep.subr.mxu0 0.0
    %1714 = vmatpush1.msra.mxu0 0.0
    %1715 = vmatprep.subr.mxu0 0.0
    %1716 = vmatpush1.msra.mxu0 0.0
    %1717 = vmatprep.subr.mxu0 0.0
    %1718 = vmatpush1.msra.mxu0 0.0
    %1719 = vmatprep.subr.mxu0 0.0
    %1720 = vmatpush1.msra.mxu0 0.0
    %1721 = vmatprep.subr.mxu0 0.0
    %1722 = vmatpush1.msra.mxu0 0.0
    %1723 = vmatprep.subr.mxu0 0.0
    %1724 = vmatpush1.msra.mxu0 0.0
    %1725 = vmatprep.subr.mxu0 0.0
    %1726 = vmatpush1.msra.mxu0 0.0
    %1727 = vmatprep.subr.mxu0 0.0
    %1728 = vmatpush1.msra.mxu0 0.0
    %1729 = vmatprep.subr.mxu0 0.0
    %1730 = vmatpush1.msra.mxu0 0.0
    %1731 = vmatprep.subr.mxu0 0.0
    %1732 = vmatpush1.msra.mxu0 0.0
    %1733 = vmatprep.subr.mxu0 0.0
    %1734 = vmatpush1.msra.mxu0 0.0
    %1735 = vmatprep.subr.mxu0 0.0
    %1736 = vmatpush1.msra.mxu0 0.0
    %1737 = vmatprep.subr.mxu0 0.0
    %1738 = vmatpush1.msra.mxu0 0.0
    %1739 = vmatprep.subr.mxu0 0.0
    %1740 = vmatpush1.msra.mxu0 0.0
    %1741 = vmatprep.subr.mxu0 0.0
    %1742 = vmatpush1.msra.mxu0 0.0
    %1743 = vmatprep.subr.mxu0 0.0
    %1744 = vmatpush1.msra.mxu0 0.0
    %1745 = vmatprep.subr.mxu0 0.0
    %1746 = vmatpush1.msra.mxu0 0.0
    %1747 = vmatprep.subr.mxu0 0.0
    %1748 = vmatpush1.msra.mxu0 0.0
    %1749 = vmatprep.subr.mxu0 0.0
    %1750 = vmatpush1.msra.mxu0 0.0
    %1751 = vmatprep.subr.mxu0 0.0
    %1752 = vmatpush1.msra.mxu0 0.0
    %1753 = vmatprep.subr.mxu0 0.0
    %1754 = vmatpush1.msra.mxu0 0.0
    %1755 = vmatprep.subr.mxu0 0.0
    %1756 = vmatpush1.msra.mxu0 0.0
    %1757 = vmatprep.mubr.f32.mxu0 0.0
    %v1758 = vand.u32 %v1683, 4294901760
    %v1759 = vsub.f32 %v1683, %v1758
    %v1760 = vand.u32 %v1759, 4294901760
    %v1761 = vsub.f32 %v1759, %v1760
    %v1762 = vand.u32 %v1761, 4294901760
    %1763 = vmatmul.mubr.f32.gmra.mrb[0].mxu0 %v1762
    %v1764 = vpop.f32.mrb[0].mxu0
    %v1765 = vadd.f32 0.0, %v1764
    %v1766 = vpop.f32.mrb[0].mxu0
    %1767 = vdwg.mxu0
    %1768 = vmatprep.subr.mxu0 0.0
    %v1769 = vand.u32 %v13, 4294901760
    %v1770 = vsub.f32 %v13, %v1769
    %v1771 = vand.u32 %v1770, 4294901760
    %v1772 = vsub.f32 %v1770, %v1771
    %v1773 = vand.u32 %v1772, 4294901760
    %1774 = vmatpush1.msra.mxu0 %v1773
    %1775 = vmatprep.subr.mxu0 0.0
    %v1776 = vand.u32 %v14, 4294901760
    %v1777 = vsub.f32 %v14, %v1776
    %v1778 = vand.u32 %v1777, 4294901760
    %v1779 = vsub.f32 %v1777, %v1778
    %v1780 = vand.u32 %v1779, 4294901760
    %1781 = vmatpush1.msra.mxu0 %v1780
    %1782 = vmatprep.subr.mxu0 0.0
    %v1783 = vand.u32 %v15, 4294901760
    %v1784 = vsub.f32 %v15, %v1783
    %v1785 = vand.u32 %v1784, 4294901760
    %v1786 = vsub.f32 %v1784, %v1785
    %v1787 = vand.u32 %v1786, 4294901760
    %1788 = vmatpush1.msra.mxu0 %v1787
    %1789 = vmatprep.subr.mxu0 0.0
    %v1790 = vand.u32 %v16, 4294901760
    %v1791 = vsub.f32 %v16, %v1790
    %v1792 = vand.u32 %v1791, 4294901760
    %v1793 = vsub.f32 %v1791, %v1792
    %v1794 = vand.u32 %v1793, 4294901760
    %1795 = vmatpush1.msra.mxu0 %v1794
    %1796 = vmatprep.subr.mxu0 0.0
    %v1797 = vand.u32 %v17, 4294901760
    %v1798 = vsub.f32 %v17, %v1797
    %v1799 = vand.u32 %v1798, 4294901760
    %v1800 = vsub.f32 %v1798, %v1799
    %v1801 = vand.u32 %v1800, 4294901760
    %1802 = vmatpush1.msra.mxu0 %v1801
    %1803 = vmatprep.subr.mxu0 0.0
    %v1804 = vand.u32 %v18, 4294901760
    %v1805 = vsub.f32 %v18, %v1804
    %v1806 = vand.u32 %v1805, 4294901760
    %v1807 = vsub.f32 %v1805, %v1806
    %v1808 = vand.u32 %v1807, 4294901760
    %1809 = vmatpush1.msra.mxu0 %v1808
    %1810 = vmatprep.subr.mxu0 0.0
    %v1811 = vand.u32 %v19, 4294901760
    %v1812 = vsub.f32 %v19, %v1811
    %v1813 = vand.u32 %v1812, 4294901760
    %v1814 = vsub.f32 %v1812, %v1813
    %v1815 = vand.u32 %v1814, 4294901760
    %1816 = vmatpush1.msra.mxu0 %v1815
    %1817 = vmatprep.subr.mxu0 0.0
    %v1818 = vand.u32 %v20, 4294901760
    %v1819 = vsub.f32 %v20, %v1818
    %v1820 = vand.u32 %v1819, 4294901760
    %v1821 = vsub.f32 %v1819, %v1820
    %v1822 = vand.u32 %v1821, 4294901760
    %1823 = vmatpush1.msra.mxu0 %v1822
    %1824 = vmatprep.subr.mxu0 0.0
    %1825 = vmatpush1.msra.mxu0 0.0
    %1826 = vmatprep.subr.mxu0 0.0
    %1827 = vmatpush1.msra.mxu0 0.0
    %1828 = vmatprep.subr.mxu0 0.0
    %1829 = vmatpush1.msra.mxu0 0.0
    %1830 = vmatprep.subr.mxu0 0.0
    %1831 = vmatpush1.msra.mxu0 0.0
    %1832 = vmatprep.subr.mxu0 0.0
    %1833 = vmatpush1.msra.mxu0 0.0
    %1834 = vmatprep.subr.mxu0 0.0
    %1835 = vmatpush1.msra.mxu0 0.0
    %1836 = vmatprep.subr.mxu0 0.0
    %1837 = vmatpush1.msra.mxu0 0.0
    %1838 = vmatprep.subr.mxu0 0.0
    %1839 = vmatpush1.msra.mxu0 0.0
    %1840 = vmatprep.subr.mxu0 0.0
    %1841 = vmatpush1.msra.mxu0 0.0
    %1842 = vmatprep.subr.mxu0 0.0
    %1843 = vmatpush1.msra.mxu0 0.0
    %1844 = vmatprep.subr.mxu0 0.0
    %1845 = vmatpush1.msra.mxu0 0.0
    %1846 = vmatprep.subr.mxu0 0.0
    %1847 = vmatpush1.msra.mxu0 0.0
    %1848 = vmatprep.subr.mxu0 0.0
    %1849 = vmatpush1.msra.mxu0 0.0
    %1850 = vmatprep.subr.mxu0 0.0
    %1851 = vmatpush1.msra.mxu0 0.0
    %1852 = vmatprep.subr.mxu0 0.0
    %1853 = vmatpush1.msra.mxu0 0.0
    %1854 = vmatprep.subr.mxu0 0.0
    %1855 = vmatpush1.msra.mxu0 0.0
    %1856 = vmatprep.subr.mxu0 0.0
    %1857 = vmatpush1.msra.mxu0 0.0
    %1858 = vmatprep.subr.mxu0 0.0
    %1859 = vmatpush1.msra.mxu0 0.0
    %1860 = vmatprep.subr.mxu0 0.0
    %1861 = vmatpush1.msra.mxu0 0.0
    %1862 = vmatprep.subr.mxu0 0.0
    %1863 = vmatpush1.msra.mxu0 0.0
    %1864 = vmatprep.subr.mxu0 0.0
    %1865 = vmatpush1.msra.mxu0 0.0
    %1866 = vmatprep.subr.mxu0 0.0
    %1867 = vmatpush1.msra.mxu0 0.0
    %1868 = vmatprep.subr.mxu0 0.0
    %1869 = vmatpush1.msra.mxu0 0.0
    %1870 = vmatprep.subr.mxu0 0.0
    %1871 = vmatpush1.msra.mxu0 0.0
    %1872 = vmatprep.mubr.f32.mxu0 0.0
    %v1873 = vand.u32 %v1683, 4294901760
    %1874 = vmatmul.mubr.f32.gmra.mrb[0].mxu0 %v1873
    %v1875 = vpop.f32.mrb[0].mxu0
    %v1876 = vadd.f32 %v1765, %v1875
    %v1877 = vpop.f32.mrb[0].mxu0
    %1878 = vdwg.mxu0
    %1879 = vmatprep.subr.mxu0 0.0
    %v1880 = vand.u32 %v13, 4294901760
    %v1881 = vsub.f32 %v13, %v1880
    %1882 = vmatpush1.msra.mxu0 %v1881
    %1883 = vmatprep.subr.mxu0 0.0
    %v1884 = vand.u32 %v14, 4294901760
    %v1885 = vsub.f32 %v14, %v1884
    %1886 = vmatpush1.msra.mxu0 %v1885
    %1887 = vmatprep.subr.mxu0 0.0
    %v1888 = vand.u32 %v15, 4294901760
    %v1889 = vsub.f32 %v15, %v1888
    %1890 = vmatpush1.msra.mxu0 %v1889
    %1891 = vmatprep.subr.mxu0 0.0
    %v1892 = vand.u32 %v16, 4294901760
    %v1893 = vsub.f32 %v16, %v1892
    %1894 = vmatpush1.msra.mxu0 %v1893
    %1895 = vmatprep.subr.mxu0 0.0
    %v1896 = vand.u32 %v17, 4294901760
    %v1897 = vsub.f32 %v17, %v1896
    %1898 = vmatpush1.msra.mxu0 %v1897
    %1899 = vmatprep.subr.mxu0 0.0
    %v1900 = vand.u32 %v18, 4294901760
    %v1901 = vsub.f32 %v18, %v1900
    %1902 = vmatpush1.msra.mxu0 %v1901
    %1903 = vmatprep.subr.mxu0 0.0
    %v1904 = vand.u32 %v19, 4294901760
    %v1905 = vsub.f32 %v19, %v1904
    %1906 = vmatpush1.msra.mxu0 %v1905
    %1907 = vmatprep.subr.mxu0 0.0
    %v1908 = vand.u32 %v20, 4294901760
    %v1909 = vsub.f32 %v20, %v1908
    %1910 = vmatpush1.msra.mxu0 %v1909
    %1911 = vmatprep.subr.mxu0 0.0
    %1912 = vmatpush1.msra.mxu0 0.0
    %1913 = vmatprep.subr.mxu0 0.0
    %1914 = vmatpush1.msra.mxu0 0.0
    %1915 = vmatprep.subr.mxu0 0.0
    %1916 = vmatpush1.msra.mxu0 0.0
    %1917 = vmatprep.subr.mxu0 0.0
    %1918 = vmatpush1.msra.mxu0 0.0
    %1919 = vmatprep.subr.mxu0 0.0
    %1920 = vmatpush1.msra.mxu0 0.0
    %1921 = vmatprep.subr.mxu0 0.0
    %1922 = vmatpush1.msra.mxu0 0.0
    %1923 = vmatprep.subr.mxu0 0.0
    %1924 = vmatpush1.msra.mxu0 0.0
    %1925 = vmatprep.subr.mxu0 0.0
    %1926 = vmatpush1.msra.mxu0 0.0
    %1927 = vmatprep.subr.mxu0 0.0
    %1928 = vmatpush1.msra.mxu0 0.0
    %1929 = vmatprep.subr.mxu0 0.0
    %1930 = vmatpush1.msra.mxu0 0.0
    %1931 = vmatprep.subr.mxu0 0.0
    %1932 = vmatpush1.msra.mxu0 0.0
    %1933 = vmatprep.subr.mxu0 0.0
    %1934 = vmatpush1.msra.mxu0 0.0
    %1935 = vmatprep.subr.mxu0 0.0
    %1936 = vmatpush1.msra.mxu0 0.0
    %1937 = vmatprep.subr.mxu0 0.0
    %1938 = vmatpush1.msra.mxu0 0.0
    %1939 = vmatprep.subr.mxu0 0.0
    %1940 = vmatpush1.msra.mxu0 0.0
    %1941 = vmatprep.subr.mxu0 0.0
    %1942 = vmatpush1.msra.mxu0 0.0
    %1943 = vmatprep.subr.mxu0 0.0
    %1944 = vmatpush1.msra.mxu0 0.0
    %1945 = vmatprep.subr.mxu0 0.0
    %1946 = vmatpush1.msra.mxu0 0.0
    %1947 = vmatprep.subr.mxu0 0.0
    %1948 = vmatpush1.msra.mxu0 0.0
    %1949 = vmatprep.subr.mxu0 0.0
    %1950 = vmatpush1.msra.mxu0 0.0
    %1951 = vmatprep.subr.mxu0 0.0
    %1952 = vmatpush1.msra.mxu0 0.0
    %1953 = vmatprep.subr.mxu0 0.0
    %1954 = vmatpush1.msra.mxu0 0.0
    %1955 = vmatprep.subr.mxu0 0.0
    %1956 = vmatpush1.msra.mxu0 0.0
    %1957 = vmatprep.subr.mxu0 0.0
    %1958 = vmatpush1.msra.mxu0 0.0
    %1959 = vmatprep.mubr.f32.mxu0 0.0
    %v1960 = vand.u32 %v1683, 4294901760
    %v1961 = vsub.f32 %v1683, %v1960
    %1962 = vmatmul.mubr.f32.gmra.mrb[0].mxu0 %v1961
    %v1963 = vpop.f32.mrb[0].mxu0
    %v1964 = vadd.f32 %v1876, %v1963
    %v1965 = vpop.f32.mrb[0].mxu0
    %1966 = vdwg.mxu0
    %1967 = vmatprep.subr.mxu0 0.0
    %v1968 = vand.u32 %v13, 4294901760
    %1969 = vmatpush1.msra.mxu0 %v1968
    %1970 = vmatprep.subr.mxu0 0.0
    %v1971 = vand.u32 %v14, 4294901760
    %1972 = vmatpush1.msra.mxu0 %v1971
    %1973 = vmatprep.subr.mxu0 0.0
    %v1974 = vand.u32 %v15, 4294901760
    %1975 = vmatpush1.msra.mxu0 %v1974
    %1976 = vmatprep.subr.mxu0 0.0
    %v1977 = vand.u32 %v16, 4294901760
    %1978 = vmatpush1.msra.mxu0 %v1977
    %1979 = vmatprep.subr.mxu0 0.0
    %v1980 = vand.u32 %v17, 4294901760
    %1981 = vmatpush1.msra.mxu0 %v1980
    %1982 = vmatprep.subr.mxu0 0.0
    %v1983 = vand.u32 %v18, 4294901760
    %1984 = vmatpush1.msra.mxu0 %v1983
    %1985 = vmatprep.subr.mxu0 0.0
    %v1986 = vand.u32 %v19, 4294901760
    %1987 = vmatpush1.msra.mxu0 %v1986
    %1988 = vmatprep.subr.mxu0 0.0
    %v1989 = vand.u32 %v20, 4294901760
    %1990 = vmatpush1.msra.mxu0 %v1989
    %1991 = vmatprep.subr.mxu0 0.0
    %1992 = vmatpush1.msra.mxu0 0.0
    %1993 = vmatprep.subr.mxu0 0.0
    %1994 = vmatpush1.msra.mxu0 0.0
    %1995 = vmatprep.subr.mxu0 0.0
    %1996 = vmatpush1.msra.mxu0 0.0
    %1997 = vmatprep.subr.mxu0 0.0
    %1998 = vmatpush1.msra.mxu0 0.0
    %1999 = vmatprep.subr.mxu0 0.0
    %2000 = vmatpush1.msra.mxu0 0.0
    %2001 = vmatprep.subr.mxu0 0.0
    %2002 = vmatpush1.msra.mxu0 0.0
    %2003 = vmatprep.subr.mxu0 0.0
    %2004 = vmatpush1.msra.mxu0 0.0
    %2005 = vmatprep.subr.mxu0 0.0
    %2006 = vmatpush1.msra.mxu0 0.0
    %2007 = vmatprep.subr.mxu0 0.0
    %2008 = vmatpush1.msra.mxu0 0.0
    %2009 = vmatprep.subr.mxu0 0.0
    %2010 = vmatpush1.msra.mxu0 0.0
    %2011 = vmatprep.subr.mxu0 0.0
    %2012 = vmatpush1.msra.mxu0 0.0
    %2013 = vmatprep.subr.mxu0 0.0
    %2014 = vmatpush1.msra.mxu0 0.0
    %2015 = vmatprep.subr.mxu0 0.0
    %2016 = vmatpush1.msra.mxu0 0.0
    %2017 = vmatprep.subr.mxu0 0.0
    %2018 = vmatpush1.msra.mxu0 0.0
    %2019 = vmatprep.subr.mxu0 0.0
    %2020 = vmatpush1.msra.mxu0 0.0
    %2021 = vmatprep.subr.mxu0 0.0
    %2022 = vmatpush1.msra.mxu0 0.0
    %2023 = vmatprep.subr.mxu0 0.0
    %2024 = vmatpush1.msra.mxu0 0.0
    %2025 = vmatprep.subr.mxu0 0.0
    %2026 = vmatpush1.msra.mxu0 0.0
    %2027 = vmatprep.subr.mxu0 0.0
    %2028 = vmatpush1.msra.mxu0 0.0
    %2029 = vmatprep.subr.mxu0 0.0
    %2030 = vmatpush1.msra.mxu0 0.0
    %2031 = vmatprep.subr.mxu0 0.0
    %2032 = vmatpush1.msra.mxu0 0.0
    %2033 = vmatprep.subr.mxu0 0.0
    %2034 = vmatpush1.msra.mxu0 0.0
    %2035 = vmatprep.subr.mxu0 0.0
    %2036 = vmatpush1.msra.mxu0 0.0
    %2037 = vmatprep.subr.mxu0 0.0
    %2038 = vmatpush1.msra.mxu0 0.0
    %2039 = vmatprep.mubr.f32.mxu0 0.0
    %v2040 = vand.u32 %v1683, 4294901760
    %v2041 = vsub.f32 %v1683, %v2040
    %v2042 = vand.u32 %v2041, 4294901760
    %2043 = vmatmul.mubr.f32.gmra.mrb[0].mxu0 %v2042
    %v2044 = vpop.f32.mrb[0].mxu0
    %v2045 = vadd.f32 %v1964, %v2044
    %v2046 = vpop.f32.mrb[0].mxu0
    %2047 = vdwg.mxu0
    %2048 = vmatprep.subr.mxu0 0.0
    %v2049 = vand.u32 %v13, 4294901760
    %v2050 = vsub.f32 %v13, %v2049
    %v2051 = vand.u32 %v2050, 4294901760
    %2052 = vmatpush1.msra.mxu0 %v2051
    %2053 = vmatprep.subr.mxu0 0.0
    %v2054 = vand.u32 %v14, 4294901760
    %v2055 = vsub.f32 %v14, %v2054
    %v2056 = vand.u32 %v2055, 4294901760
    %2057 = vmatpush1.msra.mxu0 %v2056
    %2058 = vmatprep.subr.mxu0 0.0
    %v2059 = vand.u32 %v15, 4294901760
    %v2060 = vsub.f32 %v15, %v2059
    %v2061 = vand.u32 %v2060, 4294901760
    %2062 = vmatpush1.msra.mxu0 %v2061
    %2063 = vmatprep.subr.mxu0 0.0
    %v2064 = vand.u32 %v16, 4294901760
    %v2065 = vsub.f32 %v16, %v2064
    %v2066 = vand.u32 %v2065, 4294901760
    %2067 = vmatpush1.msra.mxu0 %v2066
    %2068 = vmatprep.subr.mxu0 0.0
    %v2069 = vand.u32 %v17, 4294901760
    %v2070 = vsub.f32 %v17, %v2069
    %v2071 = vand.u32 %v2070, 4294901760
    %2072 = vmatpush1.msra.mxu0 %v2071
    %2073 = vmatprep.subr.mxu0 0.0
    %v2074 = vand.u32 %v18, 4294901760
    %v2075 = vsub.f32 %v18, %v2074
    %v2076 = vand.u32 %v2075, 4294901760
    %2077 = vmatpush1.msra.mxu0 %v2076
    %2078 = vmatprep.subr.mxu0 0.0
    %v2079 = vand.u32 %v19, 4294901760
    %v2080 = vsub.f32 %v19, %v2079
    %v2081 = vand.u32 %v2080, 4294901760
    %2082 = vmatpush1.msra.mxu0 %v2081
    %2083 = vmatprep.subr.mxu0 0.0
    %v2084 = vand.u32 %v20, 4294901760
    %v2085 = vsub.f32 %v20, %v2084
    %v2086 = vand.u32 %v2085, 4294901760
    %2087 = vmatpush1.msra.mxu0 %v2086
    %2088 = vmatprep.subr.mxu0 0.0
    %2089 = vmatpush1.msra.mxu0 0.0
    %2090 = vmatprep.subr.mxu0 0.0
    %2091 = vmatpush1.msra.mxu0 0.0
    %2092 = vmatprep.subr.mxu0 0.0
    %2093 = vmatpush1.msra.mxu0 0.0
    %2094 = vmatprep.subr.mxu0 0.0
    %2095 = vmatpush1.msra.mxu0 0.0
    %2096 = vmatprep.subr.mxu0 0.0
    %2097 = vmatpush1.msra.mxu0 0.0
    %2098 = vmatprep.subr.mxu0 0.0
    %2099 = vmatpush1.msra.mxu0 0.0
    %2100 = vmatprep.subr.mxu0 0.0
    %2101 = vmatpush1.msra.mxu0 0.0
    %2102 = vmatprep.subr.mxu0 0.0
    %2103 = vmatpush1.msra.mxu0 0.0
    %2104 = vmatprep.subr.mxu0 0.0
    %2105 = vmatpush1.msra.mxu0 0.0
    %2106 = vmatprep.subr.mxu0 0.0
    %2107 = vmatpush1.msra.mxu0 0.0
    %2108 = vmatprep.subr.mxu0 0.0
    %2109 = vmatpush1.msra.mxu0 0.0
    %2110 = vmatprep.subr.mxu0 0.0
    %2111 = vmatpush1.msra.mxu0 0.0
    %2112 = vmatprep.subr.mxu0 0.0
    %2113 = vmatpush1.msra.mxu0 0.0
    %2114 = vmatprep.subr.mxu0 0.0
    %2115 = vmatpush1.msra.mxu0 0.0
    %2116 = vmatprep.subr.mxu0 0.0
    %2117 = vmatpush1.msra.mxu0 0.0
    %2118 = vmatprep.subr.mxu0 0.0
    %2119 = vmatpush1.msra.mxu0 0.0
    %2120 = vmatprep.subr.mxu0 0.0
    %2121 = vmatpush1.msra.mxu0 0.0
    %2122 = vmatprep.subr.mxu0 0.0
    %2123 = vmatpush1.msra.mxu0 0.0
    %2124 = vmatprep.subr.mxu0 0.0
    %2125 = vmatpush1.msra.mxu0 0.0
    %2126 = vmatprep.subr.mxu0 0.0
    %2127 = vmatpush1.msra.mxu0 0.0
    %2128 = vmatprep.subr.mxu0 0.0
    %2129 = vmatpush1.msra.mxu0 0.0
    %2130 = vmatprep.subr.mxu0 0.0
    %2131 = vmatpush1.msra.mxu0 0.0
    %2132 = vmatprep.subr.mxu0 0.0
    %2133 = vmatpush1.msra.mxu0 0.0
    %2134 = vmatprep.subr.mxu0 0.0
    %2135 = vmatpush1.msra.mxu0 0.0
    %2136 = vmatprep.mubr.f32.mxu0 0.0
    %v2137 = vand.u32 %v1683, 4294901760
    %2138 = vmatmul.mubr.f32.gmra.mrb[0].mxu0 %v2137
    %v2139 = vpop.f32.mrb[0].mxu0
    %v2140 = vadd.f32 %v2045, %v2139
    %v2141 = vpop.f32.mrb[0].mxu0
    %2142 = vdwg.mxu0
    %2143 = vmatprep.subr.mxu0 0.0
    %v2144 = vand.u32 %v13, 4294901760
    %2145 = vmatpush1.msra.mxu0 %v2144
    %2146 = vmatprep.subr.mxu0 0.0
    %v2147 = vand.u32 %v14, 4294901760
    %2148 = vmatpush1.msra.mxu0 %v2147
    %2149 = vmatprep.subr.mxu0 0.0
    %v2150 = vand.u32 %v15, 4294901760
    %2151 = vmatpush1.msra.mxu0 %v2150
    %2152 = vmatprep.subr.mxu0 0.0
    %v2153 = vand.u32 %v16, 4294901760
    %2154 = vmatpush1.msra.mxu0 %v2153
    %2155 = vmatprep.subr.mxu0 0.0
    %v2156 = vand.u32 %v17, 4294901760
    %2157 = vmatpush1.msra.mxu0 %v2156
    %2158 = vmatprep.subr.mxu0 0.0
    %v2159 = vand.u32 %v18, 4294901760
    %2160 = vmatpush1.msra.mxu0 %v2159
    %2161 = vmatprep.subr.mxu0 0.0
    %v2162 = vand.u32 %v19, 4294901760
    %2163 = vmatpush1.msra.mxu0 %v2162
    %2164 = vmatprep.subr.mxu0 0.0
    %v2165 = vand.u32 %v20, 4294901760
    %2166 = vmatpush1.msra.mxu0 %v2165
    %2167 = vmatprep.subr.mxu0 0.0
    %2168 = vmatpush1.msra.mxu0 0.0
    %2169 = vmatprep.subr.mxu0 0.0
    %2170 = vmatpush1.msra.mxu0 0.0
    %2171 = vmatprep.subr.mxu0 0.0
    %2172 = vmatpush1.msra.mxu0 0.0
    %2173 = vmatprep.subr.mxu0 0.0
    %2174 = vmatpush1.msra.mxu0 0.0
    %2175 = vmatprep.subr.mxu0 0.0
    %2176 = vmatpush1.msra.mxu0 0.0
    %2177 = vmatprep.subr.mxu0 0.0
    %2178 = vmatpush1.msra.mxu0 0.0
    %2179 = vmatprep.subr.mxu0 0.0
    %2180 = vmatpush1.msra.mxu0 0.0
    %2181 = vmatprep.subr.mxu0 0.0
    %2182 = vmatpush1.msra.mxu0 0.0
    %2183 = vmatprep.subr.mxu0 0.0
    %2184 = vmatpush1.msra.mxu0 0.0
    %2185 = vmatprep.subr.mxu0 0.0
    %2186 = vmatpush1.msra.mxu0 0.0
    %2187 = vmatprep.subr.mxu0 0.0
    %2188 = vmatpush1.msra.mxu0 0.0
    %2189 = vmatprep.subr.mxu0 0.0
    %2190 = vmatpush1.msra.mxu0 0.0
    %2191 = vmatprep.subr.mxu0 0.0
    %2192 = vmatpush1.msra.mxu0 0.0
    %2193 = vmatprep.subr.mxu0 0.0
    %2194 = vmatpush1.msra.mxu0 0.0
    %2195 = vmatprep.subr.mxu0 0.0
    %2196 = vmatpush1.msra.mxu0 0.0
    %2197 = vmatprep.subr.mxu0 0.0
    %2198 = vmatpush1.msra.mxu0 0.0
    %2199 = vmatprep.subr.mxu0 0.0
    %2200 = vmatpush1.msra.mxu0 0.0
    %2201 = vmatprep.subr.mxu0 0.0
    %2202 = vmatpush1.msra.mxu0 0.0
    %2203 = vmatprep.subr.mxu0 0.0
    %2204 = vmatpush1.msra.mxu0 0.0
    %2205 = vmatprep.subr.mxu0 0.0
    %2206 = vmatpush1.msra.mxu0 0.0
    %2207 = vmatprep.subr.mxu0 0.0
    %2208 = vmatpush1.msra.mxu0 0.0
    %2209 = vmatprep.subr.mxu0 0.0
    %2210 = vmatpush1.msra.mxu0 0.0
    %2211 = vmatprep.subr.mxu0 0.0
    %2212 = vmatpush1.msra.mxu0 0.0
    %2213 = vmatprep.subr.mxu0 0.0
    %2214 = vmatpush1.msra.mxu0 0.0
    %2215 = vmatprep.mubr.f32.mxu0 0.0
    %v2216 = vand.u32 %v1683, 4294901760
    %2217 = vmatmul.mubr.f32.gmra.mrb[0].mxu0 %v2216
    %v2218 = vpop.f32.mrb[0].mxu0
    %v2219 = vadd.f32 %v2140, %v2218
    %v2220 = vpop.f32.mrb[0].mxu0
    %2221 = vdwg.mxu0
    %2223 = vrot.lane.b32.xlu0 %v2219, 96
    %v2224 = vpop.permute.xlu0 %2223
    %vm2226 = vcmask 1048320
    %2227 = vst.msk [vmem:[#allocation2] sm:$0xff] %vm2226, %v2224
    // Predicated region
    $region10: #{tpu_custom_call.1} parent=1 // pred_check
      _
    $region11: #{tpu_custom_call.1} parent=1 // pred_check_branch
      %2229 = sbr.rel (0) target = $region13
    $region12: #{tpu_custom_call.1} parent=1 // pred_region
      %s2231 = ssub.s32 128, 128
      %2232 = vsyncadd [#allocation3], %s2231
      %s2234 = sshll.u32 [#allocation2], 4
      %s2235 = int_to_ptr.vmem [resolvable:$true] %s2234
      %2237 = dma.vmem_to_hbm [thread:$0]  %s2235, 128, %s2, [#allocation3]
    $region13: #{tpu_custom_call.1} parent=1 // pred_fallthru
      _
    // Predicated region
    $region14: #{tpu_custom_call.1} parent=1 // pred_check
      _
    $region15: #{tpu_custom_call.1} parent=1 // pred_check_branch
      %2239 = sbr.rel (0) target = $region17
    $region16: #{tpu_custom_call.1} parent=1 // pred_region
      %2240 = dma.done [#allocation3], 128
    $region17: #{tpu_custom_call.1} parent=1 // pred_fallthru
      _
    %2241 = vsyncpa [#allocation3], 1

// kernel: tpu_custom_call.1
$region0: #{tpu_custom_call.1}
  #allocation0 [shape = 'u32[]', space=smem, size = 0x4, offset = 0x4, fixed_abs, tag = 'smem constant byte address 0x4 - core index']
  #allocation1 [shape = 'u32[144,128]{1,0:T(1,128)}', space=vmem, size = 0x12000, scoped, tag = 'internal scratch']
  %s0 = inlined_call_operand.vmem [shape: s32[8,4], index: 0, kind: input, shape index: {}]
  %s1 = inlined_call_operand.vmem [shape: f32[64,32], index: 1, kind: input, shape index: {}]
  %s2 = inlined_call_operand.hbm [shape: f32[8,128], index: 2, kind: output, shape index: {}]
  %s3 = sld [smem:[#allocation0]]
  $region18: #{tpu_custom_call.1} parent=0
    _
  %s5 = ssub.s32 1, %s3
  %s6 = scalar_select 0, %s5, %s3
  $region1: #{tpu_custom_call.1} parent=0
    #allocation2 [shape = 'u8[4096]{0}', space=vmem, size = 0x1000, scoped, tag = 'output window, operand 0, single buffered']
    #allocation3 [shape = 's32[1]{0}', space=sflag, size = 0x4, scoped, tag = 'scoped memory for tpu_custom_call.1']
    %7 = vsyncpa [#allocation3], 0
    // Predicated region
    $region2: #{tpu_custom_call.1} parent=1 // pred_check
      _
    $region3: #{tpu_custom_call.1} parent=1 // pred_check_branch
      %9 = sbr.rel (0) target = $region5
    $region4: #{tpu_custom_call.1} parent=1 // pred_region
      _
    $region5: #{tpu_custom_call.1} parent=1 // pred_fallthru
      _
    // Predicated region
    $region6: #{tpu_custom_call.1} parent=1 // pred_check
      _
    $region7: #{tpu_custom_call.1} parent=1 // pred_check_branch
      %11 = sbr.rel (0) target = $region9
    $region8: #{tpu_custom_call.1} parent=1 // pred_region
      _
    $region9: #{tpu_custom_call.1} parent=1 // pred_fallthru
      _
    %v12 = vld [vmem:[%s0] sm:$0xff]
    %v13 = vld [vmem:[%s1] sm:$0xff]
    %v14 = vld [vmem:[%s1 + $0x8] sm:$0xff]
    %v15 = vld [vmem:[%s1 + $0x10] sm:$0xff]
    %v16 = vld [vmem:[%s1 + $0x18] sm:$0xff]
    %v17 = vld [vmem:[%s1 + $0x20] sm:$0xff]
    %v18 = vld [vmem:[%s1 + $0x28] sm:$0xff]
    %v19 = vld [vmem:[%s1 + $0x30] sm:$0xff]
    %v20 = vld [vmem:[%s1 + $0x38] sm:$0xff]
    %v21 = vlaneseq
    %v22 = vand.u32 %v21, 127
    %23 = vset.pattern.permute.xlu0 0
    %24 = vperm.xlu0 %23, %v12
    %v25 = vpop.permute.xlu0 %24
    %vm26 = vcmp.eq.s32.totalorder %v25, %v22
    %v27 = vsel %vm26, 1, 0
    %v28 = vcvt.s32.f32 %v27
    %vm29 = vcmask 523264
    %v31 = vsel %vm29, %v28, 0
    %33 = vmatprep.subr.mxu0 0.0
    %v34 = vand.u32 %v13, 4294901760
    %35 = vmatpush1.msra.mxu0 %v34
    %36 = vmatprep.subr.mxu0 0.0
    %v37 = vand.u32 %v14, 4294901760
    %38 = vmatpush1.msra.mxu0 %v37
    %39 = vmatprep.subr.mxu0 0.0
    %v40 = vand.u32 %v15, 4294901760
    %41 = vmatpush1.msra.mxu0 %v40
    %42 = vmatprep.subr.mxu0 0.0
    %v43 = vand.u32 %v16, 4294901760
    %44 = vmatpush1.msra.mxu0 %v43
    %45 = vmatprep.subr.mxu0 0.0
    %v46 = vand.u32 %v17, 4294901760
    %47 = vmatpush1.msra.mxu0 %v46
    %48 = vmatprep.subr.mxu0 0.0
    %v49 = vand.u32 %v18, 4294901760
    %50 = vmatpush1.msra.mxu0 %v49
    %51 = vmatprep.subr.mxu0 0.0
    %v52 = vand.u32 %v19, 4294901760
    %53 = vmatpush1.msra.mxu0 %v52
    %54 = vmatprep.subr.mxu0 0.0
    %v55 = vand.u32 %v20, 4294901760
    %56 = vmatpush1.msra.mxu0 %v55
    %57 = vmatprep.subr.mxu0 0.0
    %58 = vmatpush1.msra.mxu0 0.0
    %59 = vmatprep.subr.mxu0 0.0
    %60 = vmatpush1.msra.mxu0 0.0
    %61 = vmatprep.subr.mxu0 0.0
    %62 = vmatpush1.msra.mxu0 0.0
    %63 = vmatprep.subr.mxu0 0.0
    %64 = vmatpush1.msra.mxu0 0.0
    %65 = vmatprep.subr.mxu0 0.0
    %66 = vmatpush1.msra.mxu0 0.0
    %67 = vmatprep.subr.mxu0 0.0
    %68 = vmatpush1.msra.mxu0 0.0
    %69 = vmatprep.subr.mxu0 0.0
    %70 = vmatpush1.msra.mxu0 0.0
    %71 = vmatprep.subr.mxu0 0.0
    %72 = vmatpush1.msra.mxu0 0.0
    %73 = vmatprep.subr.mxu0 0.0
    %74 = vmatpush1.msra.mxu0 0.0
    %75 = vmatprep.subr.mxu0 0.0
    %76 = vmatpush1.msra.mxu0 0.0
    %77 = vmatprep.subr.mxu0 0.0
    %78 = vmatpush1.msra.mxu0 0.0
    %79 = vmatprep.subr.mxu0 0.0
    %80 = vmatpush1.msra.mxu0 0.0
    %81 = vmatprep.subr.mxu0 0.0
    %82 = vmatpush1.msra.mxu0 0.0
    %83 = vmatprep.subr.mxu0 0.0
    %84 = vmatpush1.msra.mxu0 0.0
    %85 = vmatprep.subr.mxu0 0.0
    %86 = vmatpush1.msra.mxu0 0.0
    %87 = vmatprep.subr.mxu0 0.0
    %88 = vmatpush1.msra.mxu0 0.0
    %89 = vmatprep.subr.mxu0 0.0
    %90 = vmatpush1.msra.mxu0 0.0
    %91 = vmatprep.subr.mxu0 0.0
    %92 = vmatpush1.msra.mxu0 0.0
    %93 = vmatprep.subr.mxu0 0.0
    %94 = vmatpush1.msra.mxu0 0.0
    %95 = vmatprep.subr.mxu0 0.0
    %96 = vmatpush1.msra.mxu0 0.0
    %97 = vmatprep.subr.mxu0 0.0
    %98 = vmatpush1.msra.mxu0 0.0
    %99 = vmatprep.subr.mxu0 0.0
    %100 = vmatpush1.msra.mxu0 0.0
    %101 = vmatprep.subr.mxu0 0.0
    %102 = vmatpush1.msra.mxu0 0.0
    %103 = vmatprep.subr.mxu0 0.0
    %104 = vmatpush1.msra.mxu0 0.0
    %105 = vmatprep.mubr.f32.mxu0 0.0
    %v106 = vand.u32 %v31, 4294901760
    %v107 = vsub.f32 %v31, %v106
    %v108 = vand.u32 %v107, 4294901760
    %v109 = vsub.f32 %v107, %v108
    %v110 = vand.u32 %v109, 4294901760
    %111 = vmatmul.mubr.f32.gmra.mrb[0].mxu0 %v110
    %v112 = vpop.f32.mrb[0].mxu0
    %v113 = vadd.f32 0.0, %v112
    %v114 = vpop.f32.mrb[0].mxu0
    %115 = vdwg.mxu0
    %116 = vmatprep.subr.mxu0 0.0
    %v117 = vand.u32 %v13, 4294901760
    %v118 = vsub.f32 %v13, %v117
    %v119 = vand.u32 %v118, 4294901760
    %v120 = vsub.f32 %v118, %v119
    %v121 = vand.u32 %v120, 4294901760
    %122 = vmatpush1.msra.mxu0 %v121
    %123 = vmatprep.subr.mxu0 0.0
    %v124 = vand.u32 %v14, 4294901760
    %v125 = vsub.f32 %v14, %v124
    %v126 = vand.u32 %v125, 4294901760
    %v127 = vsub.f32 %v125, %v126
    %v128 = vand.u32 %v127, 4294901760
    %129 = vmatpush1.msra.mxu0 %v128
    %130 = vmatprep.subr.mxu0 0.0
    %v131 = vand.u32 %v15, 4294901760
    %v132 = vsub.f32 %v15, %v131
    %v133 = vand.u32 %v132, 4294901760
    %v134 = vsub.f32 %v132, %v133
    %v135 = vand.u32 %v134, 4294901760
    %136 = vmatpush1.msra.mxu0 %v135
    %137 = vmatprep.subr.mxu0 0.0
    %v138 = vand.u32 %v16, 4294901760
    %v139 = vsub.f32 %v16, %v138
    %v140 = vand.u32 %v139, 4294901760
    %v141 = vsub.f32 %v139, %v140
    %v142 = vand.u32 %v141, 4294901760
    %143 = vmatpush1.msra.mxu0 %v142
    %144 = vmatprep.subr.mxu0 0.0
    %v145 = vand.u32 %v17, 4294901760
    %v146 = vsub.f32 %v17, %v145
    %v147 = vand.u32 %v146, 4294901760
    %v148 = vsub.f32 %v146, %v147
    %v149 = vand.u32 %v148, 4294901760
    %150 = vmatpush1.msra.mxu0 %v149
    %151 = vmatprep.subr.mxu0 0.0
    %v152 = vand.u32 %v18, 4294901760
    %v153 = vsub.f32 %v18, %v152
    %v154 = vand.u32 %v153, 4294901760
    %v155 = vsub.f32 %v153, %v154
    %v156 = vand.u32 %v155, 4294901760
    %157 = vmatpush1.msra.mxu0 %v156
    %158 = vmatprep.subr.mxu0 0.0
    %v159 = vand.u32 %v19, 4294901760
    %v160 = vsub.f32 %v19, %v159
    %v161 = vand.u32 %v160, 4294901760
    %v162 = vsub.f32 %v160, %v161
    %v163 = vand.u32 %v162, 4294901760
    %164 = vmatpush1.msra.mxu0 %v163
    %165 = vmatprep.subr.mxu0 0.0
    %v166 = vand.u32 %v20, 4294901760
    %v167 = vsub.f32 %v20, %v166
    %v168 = vand.u32 %v167, 4294901760
    %v169 = vsub.f32 %v167, %v168
    %v170 = vand.u32 %v169, 4294901760
    %171 = vmatpush1.msra.mxu0 %v170
    %172 = vmatprep.subr.mxu0 0.0
    %173 = vmatpush1.msra.mxu0 0.0
    %174 = vmatprep.subr.mxu0 0.0
    %175 = vmatpush1.msra.mxu0 0.0
    %176 = vmatprep.subr.mxu0 0.0
    %177 = vmatpush1.msra.mxu0 0.0
    %178 = vmatprep.subr.mxu0 0.0
    %179 = vmatpush1.msra.mxu0 0.0
    %180 = vmatprep.subr.mxu0 0.0
    %181 = vmatpush1.msra.mxu0 0.0
    %182 = vmatprep.subr.mxu0 0.0
    %183 = vmatpush1.msra.mxu0 0.0
    %184 = vmatprep.subr.mxu0 0.0
    %185 = vmatpush1.msra.mxu0 0.0
    %186 = vmatprep.subr.mxu0 0.0
    %187 = vmatpush1.msra.mxu0 0.0
    %188 = vmatprep.subr.mxu0 0.0
    %189 = vmatpush1.msra.mxu0 0.0
    %190 = vmatprep.subr.mxu0 0.0
    %191 = vmatpush1.msra.mxu0 0.0
    %192 = vmatprep.subr.mxu0 0.0
    %193 = vmatpush1.msra.mxu0 0.0
    %194 = vmatprep.subr.mxu0 0.0
    %195 = vmatpush1.msra.mxu0 0.0
    %196 = vmatprep.subr.mxu0 0.0
    %197 = vmatpush1.msra.mxu0 0.0
    %198 = vmatprep.subr.mxu0 0.0
    %199 = vmatpush1.msra.mxu0 0.0
    %200 = vmatprep.subr.mxu0 0.0
    %201 = vmatpush1.msra.mxu0 0.0
    %202 = vmatprep.subr.mxu0 0.0
    %203 = vmatpush1.msra.mxu0 0.0
    %204 = vmatprep.subr.mxu0 0.0
    %205 = vmatpush1.msra.mxu0 0.0
    %206 = vmatprep.subr.mxu0 0.0
    %207 = vmatpush1.msra.mxu0 0.0
    %208 = vmatprep.subr.mxu0 0.0
    %209 = vmatpush1.msra.mxu0 0.0
    %210 = vmatprep.subr.mxu0 0.0
    %211 = vmatpush1.msra.mxu0 0.0
    %212 = vmatprep.subr.mxu0 0.0
    %213 = vmatpush1.msra.mxu0 0.0
    %214 = vmatprep.subr.mxu0 0.0
    %215 = vmatpush1.msra.mxu0 0.0
    %216 = vmatprep.subr.mxu0 0.0
    %217 = vmatpush1.msra.mxu0 0.0
    %218 = vmatprep.subr.mxu0 0.0
    %219 = vmatpush1.msra.mxu0 0.0
    %220 = vmatprep.mubr.f32.mxu0 0.0
    %v221 = vand.u32 %v31, 4294901760
    %222 = vmatmul.mubr.f32.gmra.mrb[0].mxu0 %v221
    %v223 = vpop.f32.mrb[0].mxu0
    %v224 = vadd.f32 %v113, %v223
    %v225 = vpop.f32.mrb[0].mxu0
    %226 = vdwg.mxu0
    %227 = vmatprep.subr.mxu0 0.0
    %v228 = vand.u32 %v13, 4294901760
    %v229 = vsub.f32 %v13, %v228
    %230 = vmatpush1.msra.mxu0 %v229
    %231 = vmatprep.subr.mxu0 0.0
    %v232 = vand.u32 %v14, 4294901760
    %v233 = vsub.f32 %v14, %v232
    %234 = vmatpush1.msra.mxu0 %v233
    %235 = vmatprep.subr.mxu0 0.0
    %v236 = vand.u32 %v15, 4294901760
    %v237 = vsub.f32 %v15, %v236
    %238 = vmatpush1.msra.mxu0 %v237
    %239 = vmatprep.subr.mxu0 0.0
    %v240 = vand.u32 %v16, 4294901760
    %v241 = vsub.f32 %v16, %v240
    %242 = vmatpush1.msra.mxu0 %v241
    %243 = vmatprep.subr.mxu0 0.0
    %v244 = vand.u32 %v17, 4294901760
    %v245 = vsub.f32 %v17, %v244
    %246 = vmatpush1.msra.mxu0 %v245
    %247 = vmatprep.subr.mxu0 0.0
    %v248 = vand.u32 %v18, 4294901760
    %v249 = vsub.f32 %v18, %v248
    %250 = vmatpush1.msra.mxu0 %v249
    %251 = vmatprep.subr.mxu0 0.0
    %v252 = vand.u32 %v19, 4294901760
    %v253 = vsub.f32 %v19, %v252
    %254 = vmatpush1.msra.mxu0 %v253
    %255 = vmatprep.subr.mxu0 0.0
    %v256 = vand.u32 %v20, 4294901760
    %v257 = vsub.f32 %v20, %v256
    %258 = vmatpush1.msra.mxu0 %v257
    %259 = vmatprep.subr.mxu0 0.0
    %260 = vmatpush1.msra.mxu0 0.0
    %261 = vmatprep.subr.mxu0 0.0
    %262 = vmatpush1.msra.mxu0 0.0
    %263 = vmatprep.subr.mxu0 0.0
    %264 = vmatpush1.msra.mxu0 0.0
    %265 = vmatprep.subr.mxu0 0.0
    %266 = vmatpush1.msra.mxu0 0.0
    %267 = vmatprep.subr.mxu0 0.0
    %268 = vmatpush1.msra.mxu0 0.0
    %269 = vmatprep.subr.mxu0 0.0
    %270 = vmatpush1.msra.mxu0 0.0
    %271 = vmatprep.subr.mxu0 0.0
    %272 = vmatpush1.msra.mxu0 0.0
    %273 = vmatprep.subr.mxu0 0.0
    %274 = vmatpush1.msra.mxu0 0.0
    %275 = vmatprep.subr.mxu0 0.0
    %276 = vmatpush1.msra.mxu0 0.0
    %277 = vmatprep.subr.mxu0 0.0
    %278 = vmatpush1.msra.mxu0 0.0
    %279 = vmatprep.subr.mxu0 0.0
    %280 = vmatpush1.msra.mxu0 0.0
    %281 = vmatprep.subr.mxu0 0.0
    %282 = vmatpush1.msra.mxu0 0.0
    %283 = vmatprep.subr.mxu0 0.0
    %284 = vmatpush1.msra.mxu0 0.0
    %285 = vmatprep.subr.mxu0 0.0
    %286 = vmatpush1.msra.mxu0 0.0
    %287 = vmatprep.subr.mxu0 0.0
    %288 = vmatpush1.msra.mxu0 0.0
    %289 = vmatprep.subr.mxu0 0.0
    %290 = vmatpush1.msra.mxu0 0.0
    %291 = vmatprep.subr.mxu0 0.0
    %292 = vmatpush1.msra.mxu0 0.0
    %293 = vmatprep.subr.mxu0 0.0
    %294 = vmatpush1.msra.mxu0 0.0
    %295 = vmatprep.subr.mxu0 0.0
    %296 = vmatpush1.msra.mxu0 0.0
    %297 = vmatprep.subr.mxu0 0.0
    %298 = vmatpush1.msra.mxu0 0.0
    %299 = vmatprep.subr.mxu0 0.0
    %300 = vmatpush1.msra.mxu0 0.0
    %301 = vmatprep.subr.mxu0 0.0
    %302 = vmatpush1.msra.mxu0 0.0
    %303 = vmatprep.subr.mxu0 0.0
    %304 = vmatpush1.msra.mxu0 0.0
    %305 = vmatprep.subr.mxu0 0.0
    %306 = vmatpush1.msra.mxu0 0.0
    %307 = vmatprep.mubr.f32.mxu0 0.0
    %v308 = vand.u32 %v31, 4294901760
    %v309 = vsub.f32 %v31, %v308
    %310 = vmatmul.mubr.f32.gmra.mrb[0].mxu0 %v309
    %v311 = vpop.f32.mrb[0].mxu0
    %v312 = vadd.f32 %v224, %v311
    %v313 = vpop.f32.mrb[0].mxu0
    %314 = vdwg.mxu0
    %315 = vmatprep.subr.mxu0 0.0
    %v316 = vand.u32 %v13, 4294901760
    %317 = vmatpush1.msra.mxu0 %v316
    %318 = vmatprep.subr.mxu0 0.0
    %v319 = vand.u32 %v14, 4294901760
    %320 = vmatpush1.msra.mxu0 %v319
    %321 = vmatprep.subr.mxu0 0.0
    %v322 = vand.u32 %v15, 4294901760
    %323 = vmatpush1.msra.mxu0 %v322
    %324 = vmatprep.subr.mxu0 0.0
    %v325 = vand.u32 %v16, 4294901760
    %326 = vmatpush1.msra.mxu0 %v325
    %327 = vmatprep.subr.mxu0 0.0
    %v328 = vand.u32 %v17, 4294901760
    %329 = vmatpush1.msra.mxu0 %v328
    %330 = vmatprep.subr.mxu0 0.0
    %v331 = vand.u32 %v18, 4294901760
    %332 = vmatpush1.msra.mxu0 %v331
    %333 = vmatprep.subr.mxu0 0.0
    %v334 = vand.u32 %v19, 4294901760
    %335 = vmatpush1.msra.mxu0 %v334
    %336 = vmatprep.subr.mxu0 0.0
    %v337 = vand.u32 %v20, 4294901760
    %338 = vmatpush1.msra.mxu0 %v337
    %339 = vmatprep.subr.mxu0 0.0
    %340 = vmatpush1.msra.mxu0 0.0
    %341 = vmatprep.subr.mxu0 0.0
    %342 = vmatpush1.msra.mxu0 0.0
    %343 = vmatprep.subr.mxu0 0.0
    %344 = vmatpush1.msra.mxu0 0.0
    %345 = vmatprep.subr.mxu0 0.0
    %346 = vmatpush1.msra.mxu0 0.0
    %347 = vmatprep.subr.mxu0 0.0
    %348 = vmatpush1.msra.mxu0 0.0
    %349 = vmatprep.subr.mxu0 0.0
    %350 = vmatpush1.msra.mxu0 0.0
    %351 = vmatprep.subr.mxu0 0.0
    %352 = vmatpush1.msra.mxu0 0.0
    %353 = vmatprep.subr.mxu0 0.0
    %354 = vmatpush1.msra.mxu0 0.0
    %355 = vmatprep.subr.mxu0 0.0
    %356 = vmatpush1.msra.mxu0 0.0
    %357 = vmatprep.subr.mxu0 0.0
    %358 = vmatpush1.msra.mxu0 0.0
    %359 = vmatprep.subr.mxu0 0.0
    %360 = vmatpush1.msra.mxu0 0.0
    %361 = vmatprep.subr.mxu0 0.0
    %362 = vmatpush1.msra.mxu0 0.0
    %363 = vmatprep.subr.mxu0 0.0
    %364 = vmatpush1.msra.mxu0 0.0
    %365 = vmatprep.subr.mxu0 0.0
    %366 = vmatpush1.msra.mxu0 0.0
    %367 = vmatprep.subr.mxu0 0.0
    %368 = vmatpush1.msra.mxu0 0.0
    %369 = vmatprep.subr.mxu0 0.0
    %370 = vmatpush1.msra.mxu0 0.0
    %371 = vmatprep.subr.mxu0 0.0
    %372 = vmatpush1.msra.mxu0 0.0
    %373 = vmatprep.subr.mxu0 0.0
    %374 = vmatpush1.msra.mxu0 0.0
    %375 = vmatprep.subr.mxu0 0.0
    %376 = vmatpush1.msra.mxu0 0.0
    %377 = vmatprep.subr.mxu0 0.0
    %378 = vmatpush1.msra.mxu0 0.0
    %379 = vmatprep.subr.mxu0 0.0
    %380 = vmatpush1.msra.mxu0 0.0
    %381 = vmatprep.subr.mxu0 0.0
    %382 = vmatpush1.msra.mxu0 0.0
    %383 = vmatprep.subr.mxu0 0.0
    %384 = vmatpush1.msra.mxu0 0.0
    %385 = vmatprep.subr.mxu0 0.0
    %386 = vmatpush1.msra.mxu0 0.0
    %387 = vmatprep.mubr.f32.mxu0 0.0
    %v388 = vand.u32 %v31, 4294901760
    %v389 = vsub.f32 %v31, %v388
    %v390 = vand.u32 %v389, 4294901760
    %391 = vmatmul.mubr.f32.gmra.mrb[0].mxu0 %v390
    %v392 = vpop.f32.mrb[0].mxu0
    %v393 = vadd.f32 %v312, %v392
    %v394 = vpop.f32.mrb[0].mxu0
    %395 = vdwg.mxu0
    %396 = vmatprep.subr.mxu0 0.0
    %v397 = vand.u32 %v13, 4294901760
    %v398 = vsub.f32 %v13, %v397
    %v399 = vand.u32 %v398, 4294901760
    %400 = vmatpush1.msra.mxu0 %v399
    %401 = vmatprep.subr.mxu0 0.0
    %v402 = vand.u32 %v14, 4294901760
    %v403 = vsub.f32 %v14, %v402
    %v404 = vand.u32 %v403, 4294901760
    %405 = vmatpush1.msra.mxu0 %v404
    %406 = vmatprep.subr.mxu0 0.0
    %v407 = vand.u32 %v15, 4294901760
    %v408 = vsub.f32 %v15, %v407
    %v409 = vand.u32 %v408, 4294901760
    %410 = vmatpush1.msra.mxu0 %v409
    %411 = vmatprep.subr.mxu0 0.0
    %v412 = vand.u32 %v16, 4294901760
    %v413 = vsub.f32 %v16, %v412
    %v414 = vand.u32 %v413, 4294901760
    %415 = vmatpush1.msra.mxu0 %v414
    %416 = vmatprep.subr.mxu0 0.0
    %v417 = vand.u32 %v17, 4294901760
    %v418 = vsub.f32 %v17, %v417
    %v419 = vand.u32 %v418, 4294901760
    %420 = vmatpush1.msra.mxu0 %v419
    %421 = vmatprep.subr.mxu0 0.0
    %v422 = vand.u32 %v18, 4294901760
    %v423 = vsub.f32 %v18, %v422
    %v424 = vand.u32 %v423, 4294901760
    %425 = vmatpush1.msra.mxu0 %v424
    %426 = vmatprep.subr.mxu0 0.0
    %v427 = vand.u32 %v19, 4294901760
    %v428 = vsub.f32 %v19, %v427
    %v429 = vand.u32 %v428, 4294901760
    %430 = vmatpush1.msra.mxu0 %v429
    %431 = vmatprep.subr.mxu0 0.0
    %v432 = vand.u32 %v20, 4294901760
    %v433 = vsub.f32 %v20, %v432
    %v434 = vand.u32 %v433, 4294901760
    %435 = vmatpush1.msra.mxu0 %v434
    %436 = vmatprep.subr.mxu0 0.0
    %437 = vmatpush1.msra.mxu0 0.0
    %438 = vmatprep.subr.mxu0 0.0
    %439 = vmatpush1.msra.mxu0 0.0
    %440 = vmatprep.subr.mxu0 0.0
    %441 = vmatpush1.msra.mxu0 0.0
    %442 = vmatprep.subr.mxu0 0.0
    %443 = vmatpush1.msra.mxu0 0.0
    %444 = vmatprep.subr.mxu0 0.0
    %445 = vmatpush1.msra.mxu0 0.0
    %446 = vmatprep.subr.mxu0 0.0
    %447 = vmatpush1.msra.mxu0 0.0
    %448 = vmatprep.subr.mxu0 0.0
    %449 = vmatpush1.msra.mxu0 0.0
    %450 = vmatprep.subr.mxu0 0.0
    %451 = vmatpush1.msra.mxu0 0.0
    %452 = vmatprep.subr.mxu0 0.0
    %453 = vmatpush1.msra.mxu0 0.0
    %454 = vmatprep.subr.mxu0 0.0
    %455 = vmatpush1.msra.mxu0 0.0
    %456 = vmatprep.subr.mxu0 0.0
    %457 = vmatpush1.msra.mxu0 0.0
    %458 = vmatprep.subr.mxu0 0.0
    %459 = vmatpush1.msra.mxu0 0.0
    %460 = vmatprep.subr.mxu0 0.0
    %461 = vmatpush1.msra.mxu0 0.0
    %462 = vmatprep.subr.mxu0 0.0
    %463 = vmatpush1.msra.mxu0 0.0
    %464 = vmatprep.subr.mxu0 0.0
    %465 = vmatpush1.msra.mxu0 0.0
    %466 = vmatprep.subr.mxu0 0.0
    %467 = vmatpush1.msra.mxu0 0.0
    %468 = vmatprep.subr.mxu0 0.0
    %469 = vmatpush1.msra.mxu0 0.0
    %470 = vmatprep.subr.mxu0 0.0
    %471 = vmatpush1.msra.mxu0 0.0
    %472 = vmatprep.subr.mxu0 0.0
    %473 = vmatpush1.msra.mxu0 0.0
    %474 = vmatprep.subr.mxu0 0.0
    %475 = vmatpush1.msra.mxu0 0.0
    %476 = vmatprep.subr.mxu0 0.0
    %477 = vmatpush1.msra.mxu0 0.0
    %478 = vmatprep.subr.mxu0 0.0
    %479 = vmatpush1.msra.mxu0 0.0
    %480 = vmatprep.subr.mxu0 0.0
    %481 = vmatpush1.msra.mxu0 0.0
    %482 = vmatprep.subr.mxu0 0.0
    %483 = vmatpush1.msra.mxu0 0.0
    %484 = vmatprep.mubr.f32.mxu0 0.0
    %v485 = vand.u32 %v31, 4294901760
    %486 = vmatmul.mubr.f32.gmra.mrb[0].mxu0 %v485
    %v487 = vpop.f32.mrb[0].mxu0
    %v488 = vadd.f32 %v393, %v487
    %v489 = vpop.f32.mrb[0].mxu0
    %490 = vdwg.mxu0
    %491 = vmatprep.subr.mxu0 0.0
    %v492 = vand.u32 %v13, 4294901760
    %493 = vmatpush1.msra.mxu0 %v492
    %494 = vmatprep.subr.mxu0 0.0
    %v495 = vand.u32 %v14, 4294901760
    %496 = vmatpush1.msra.mxu0 %v495
    %497 = vmatprep.subr.mxu0 0.0
    %v498 = vand.u32 %v15, 4294901760
    %499 = vmatpush1.msra.mxu0 %v498
    %500 = vmatprep.subr.mxu0 0.0
    %v501 = vand.u32 %v16, 4294901760
    %502 = vmatpush1.msra.mxu0 %v501
    %503 = vmatprep.subr.mxu0 0.0
    %v504 = vand.u32 %v17, 4294901760
    %505 = vmatpush1.msra.mxu0 %v504
    %506 = vmatprep.subr.mxu0 0.0
    %v507 = vand.u32 %v18, 4294901760
    %508 = vmatpush1.msra.mxu0 %v507
    %509 = vmatprep.subr.mxu0 0.0
    %v510 = vand.u32 %v19, 4294901760
    %511 = vmatpush1.msra.mxu0 %v510
    %512 = vmatprep.subr.mxu0 0.0
    %v513 = vand.u32 %v20, 4294901760
    %514 = vmatpush1.msra.mxu0 %v513
    %515 = vmatprep.subr.mxu0 0.0
    %516 = vmatpush1.msra.mxu0 0.0
    %517 = vmatprep.subr.mxu0 0.0
    %518 = vmatpush1.msra.mxu0 0.0
    %519 = vmatprep.subr.mxu0 0.0
    %520 = vmatpush1.msra.mxu0 0.0
    %521 = vmatprep.subr.mxu0 0.0
    %522 = vmatpush1.msra.mxu0 0.0
    %523 = vmatprep.subr.mxu0 0.0
    %524 = vmatpush1.msra.mxu0 0.0
    %525 = vmatprep.subr.mxu0 0.0
    %526 = vmatpush1.msra.mxu0 0.0
    %527 = vmatprep.subr.mxu0 0.0
    %528 = vmatpush1.msra.mxu0 0.0
    %529 = vmatprep.subr.mxu0 0.0
    %530 = vmatpush1.msra.mxu0 0.0
    %531 = vmatprep.subr.mxu0 0.0
    %532 = vmatpush1.msra.mxu0 0.0
    %533 = vmatprep.subr.mxu0 0.0
    %534 = vmatpush1.msra.mxu0 0.0
    %535 = vmatprep.subr.mxu0 0.0
    %536 = vmatpush1.msra.mxu0 0.0
    %537 = vmatprep.subr.mxu0 0.0
    %538 = vmatpush1.msra.mxu0 0.0
    %539 = vmatprep.subr.mxu0 0.0
    %540 = vmatpush1.msra.mxu0 0.0
    %541 = vmatprep.subr.mxu0 0.0
    %542 = vmatpush1.msra.mxu0 0.0
    %543 = vmatprep.subr.mxu0 0.0
    %544 = vmatpush1.msra.mxu0 0.0
    %545 = vmatprep.subr.mxu0 0.0
    %546 = vmatpush1.msra.mxu0 0.0
    %547 = vmatprep.subr.mxu0 0.0
    %548 = vmatpush1.msra.mxu0 0.0
    %549 = vmatprep.subr.mxu0 0.0
    %550 = vmatpush1.msra.mxu0 0.0
    %551 = vmatprep.subr.mxu0 0.0
    %552 = vmatpush1.msra.mxu0 0.0
    %553 = vmatprep.subr.mxu0 0.0
    %554 = vmatpush1.msra.mxu0 0.0
    %555 = vmatprep.subr.mxu0 0.0
    %556 = vmatpush1.msra.mxu0 0.0
    %557 = vmatprep.subr.mxu0 0.0
    %558 = vmatpush1.msra.mxu0 0.0
    %559 = vmatprep.subr.mxu0 0.0
    %560 = vmatpush1.msra.mxu0 0.0
    %561 = vmatprep.subr.mxu0 0.0
    %562 = vmatpush1.msra.mxu0 0.0
    %563 = vmatprep.mubr.f32.mxu0 0.0
    %v564 = vand.u32 %v31, 4294901760
    %565 = vmatmul.mubr.f32.gmra.mrb[0].mxu0 %v564
    %v566 = vpop.f32.mrb[0].mxu0
    %v567 = vadd.f32 %v488, %v566
    %v568 = vpop.f32.mrb[0].mxu0
    %569 = vdwg.mxu0
    %vm570 = vcmask 261120
    %571 = vst.msk [vmem:[#allocation2] sm:$0xff] %vm570, %v567
    %572 = vset.pattern.permute.xlu0 1
    %573 = vperm.xlu0 %572, %v12
    %v574 = vpop.permute.xlu0 %573
    %vm575 = vcmp.eq.s32.totalorder %v574, %v22
    %v576 = vsel %vm575, 1, 0
    %v577 = vcvt.s32.f32 %v576
    %v579 = vsel %vm29, %v577, 0
    %581 = vmatprep.subr.mxu0 0.0
    %v582 = vand.u32 %v13, 4294901760
    %583 = vmatpush1.msra.mxu0 %v582
    %584 = vmatprep.subr.mxu0 0.0
    %v585 = vand.u32 %v14, 4294901760
    %586 = vmatpush1.msra.mxu0 %v585
    %587 = vmatprep.subr.mxu0 0.0
    %v588 = vand.u32 %v15, 4294901760
    %589 = vmatpush1.msra.mxu0 %v588
    %590 = vmatprep.subr.mxu0 0.0
    %v591 = vand.u32 %v16, 4294901760
    %592 = vmatpush1.msra.mxu0 %v591
    %593 = vmatprep.subr.mxu0 0.0
    %v594 = vand.u32 %v17, 4294901760
    %595 = vmatpush1.msra.mxu0 %v594
    %596 = vmatprep.subr.mxu0 0.0
    %v597 = vand.u32 %v18, 4294901760
    %598 = vmatpush1.msra.mxu0 %v597
    %599 = vmatprep.subr.mxu0 0.0
    %v600 = vand.u32 %v19, 4294901760
    %601 = vmatpush1.msra.mxu0 %v600
    %602 = vmatprep.subr.mxu0 0.0
    %v603 = vand.u32 %v20, 4294901760
    %604 = vmatpush1.msra.mxu0 %v603
    %605 = vmatprep.subr.mxu0 0.0
    %606 = vmatpush1.msra.mxu0 0.0
    %607 = vmatprep.subr.mxu0 0.0
    %608 = vmatpush1.msra.mxu0 0.0
    %609 = vmatprep.subr.mxu0 0.0
    %610 = vmatpush1.msra.mxu0 0.0
    %611 = vmatprep.subr.mxu0 0.0
    %612 = vmatpush1.msra.mxu0 0.0
    %613 = vmatprep.subr.mxu0 0.0
    %614 = vmatpush1.msra.mxu0 0.0
    %615 = vmatprep.subr.mxu0 0.0
    %616 = vmatpush1.msra.mxu0 0.0
    %617 = vmatprep.subr.mxu0 0.0
    %618 = vmatpush1.msra.mxu0 0.0
    %619 = vmatprep.subr.mxu0 0.0
    %620 = vmatpush1.msra.mxu0 0.0
    %621 = vmatprep.subr.mxu0 0.0
    %622 = vmatpush1.msra.mxu0 0.0
    %623 = vmatprep.subr.mxu0 0.0
    %624 = vmatpush1.msra.mxu0 0.0
    %625 = vmatprep.subr.mxu0 0.0
    %626 = vmatpush1.msra.mxu0 0.0
    %627 = vmatprep.subr.mxu0 0.0
    %628 = vmatpush1.msra.mxu0 0.0
    %629 = vmatprep.subr.mxu0 0.0
    %630 = vmatpush1.msra.mxu0 0.0
    %631 = vmatprep.subr.mxu0 0.0
    %632 = vmatpush1.msra.mxu0 0.0
    %633 = vmatprep.subr.mxu0 0.0
    %634 = vmatpush1.msra.mxu0 0.0
    %635 = vmatprep.subr.mxu0 0.0
    %636 = vmatpush1.msra.mxu0 0.0
    %637 = vmatprep.subr.mxu0 0.0
    %638 = vmatpush1.msra.mxu0 0.0
    %639 = vmatprep.subr.mxu0 0.0
    %640 = vmatpush1.msra.mxu0 0.0
    %641 = vmatprep.subr.mxu0 0.0
    %642 = vmatpush1.msra.mxu0 0.0
    %643 = vmatprep.subr.mxu0 0.0
    %644 = vmatpush1.msra.mxu0 0.0
    %645 = vmatprep.subr.mxu0 0.0
    %646 = vmatpush1.msra.mxu0 0.0
    %647 = vmatprep.subr.mxu0 0.0
    %648 = vmatpush1.msra.mxu0 0.0
    %649 = vmatprep.subr.mxu0 0.0
    %650 = vmatpush1.msra.mxu0 0.0
    %651 = vmatprep.subr.mxu0 0.0
    %652 = vmatpush1.msra.mxu0 0.0
    %653 = vmatprep.mubr.f32.mxu0 0.0
    %v654 = vand.u32 %v579, 4294901760
    %v655 = vsub.f32 %v579, %v654
    %v656 = vand.u32 %v655, 4294901760
    %v657 = vsub.f32 %v655, %v656
    %v658 = vand.u32 %v657, 4294901760
    %659 = vmatmul.mubr.f32.gmra.mrb[0].mxu0 %v658
    %v660 = vpop.f32.mrb[0].mxu0
    %v661 = vadd.f32 0.0, %v660
    %v662 = vpop.f32.mrb[0].mxu0
    %663 = vdwg.mxu0
    %664 = vmatprep.subr.mxu0 0.0
    %v665 = vand.u32 %v13, 4294901760
    %v666 = vsub.f32 %v13, %v665
    %v667 = vand.u32 %v666, 4294901760
    %v668 = vsub.f32 %v666, %v667
    %v669 = vand.u32 %v668, 4294901760
    %670 = vmatpush1.msra.mxu0 %v669
    %671 = vmatprep.subr.mxu0 0.0
    %v672 = vand.u32 %v14, 4294901760
    %v673 = vsub.f32 %v14, %v672
    %v674 = vand.u32 %v673, 4294901760
    %v675 = vsub.f32 %v673, %v674
    %v676 = vand.u32 %v675, 4294901760
    %677 = vmatpush1.msra.mxu0 %v676
    %678 = vmatprep.subr.mxu0 0.0
    %v679 = vand.u32 %v15, 4294901760
    %v680 = vsub.f32 %v15, %v679
    %v681 = vand.u32 %v680, 4294901760
    %v682 = vsub.f32 %v680, %v681
    %v683 = vand.u32 %v682, 4294901760
    %684 = vmatpush1.msra.mxu0 %v683
    %685 = vmatprep.subr.mxu0 0.0
    %v686 = vand.u32 %v16, 4294901760
    %v687 = vsub.f32 %v16, %v686
    %v688 = vand.u32 %v687, 4294901760
    %v689 = vsub.f32 %v687, %v688
    %v690 = vand.u32 %v689, 4294901760
    %691 = vmatpush1.msra.mxu0 %v690
    %692 = vmatprep.subr.mxu0 0.0
    %v693 = vand.u32 %v17, 4294901760
    %v694 = vsub.f32 %v17, %v693
    %v695 = vand.u32 %v694, 4294901760
    %v696 = vsub.f32 %v694, %v695
    %v697 = vand.u32 %v696, 4294901760
    %698 = vmatpush1.msra.mxu0 %v697
    %699 = vmatprep.subr.mxu0 0.0
    %v700 = vand.u32 %v18, 4294901760
    %v701 = vsub.f32 %v18, %v700
    %v702 = vand.u32 %v701, 4294901760
    %v703 = vsub.f32 %v701, %v702
    %v704 = vand.u32 %v703, 4294901760
    %705 = vmatpush1.msra.mxu0 %v704
    %706 = vmatprep.subr.mxu0 0.0
    %v707 = vand.u32 %v19, 4294901760
    %v708 = vsub.f32 %v19, %v707
    %v709 = vand.u32 %v708, 4294901760
    %v710 = vsub.f32 %v708, %v709
    %v711 = vand.u32 %v710, 4294901760
    %712 = vmatpush1.msra.mxu0 %v711
    %713 = vmatprep.subr.mxu0 0.0
    %v714 = vand.u32 %v20, 4294901760
    %v715 = vsub.f32 %v20, %v714
    %v716 = vand.u32 %v715, 4294901760
    %v717 = vsub.f32 %v715, %v716
    %v718 = vand.u32 %v717, 4294901760
    %719 = vmatpush1.msra.mxu0 %v718
    %720 = vmatprep.subr.mxu0 0.0
    %721 = vmatpush1.msra.mxu0 0.0
    %722 = vmatprep.subr.mxu0 0.0
    %723 = vmatpush1.msra.mxu0 0.0
    %724 = vmatprep.subr.mxu0 0.0
    %725 = vmatpush1.msra.mxu0 0.0
    %726 = vmatprep.subr.mxu0 0.0
    %727 = vmatpush1.msra.mxu0 0.0
    %728 = vmatprep.subr.mxu0 0.0
    %729 = vmatpush1.msra.mxu0 0.0
    %730 = vmatprep.subr.mxu0 0.0
    %731 = vmatpush1.msra.mxu0 0.0
    %732 = vmatprep.subr.mxu0 0.0
    %733 = vmatpush1.msra.mxu0 0.0
    %734 = vmatprep.subr.mxu0 0.0
    %735 = vmatpush1.msra.mxu0 0.0
    %736 = vmatprep.subr.mxu0 0.0
    %737 = vmatpush1.msra.mxu0 0.0
    %738 = vmatprep.subr.mxu0 0.0
    %739 = vmatpush1.msra.mxu0 0.0
    %740 = vmatprep.subr.mxu0 0.0
    %741 = vmatpush1.msra.mxu0 0.0
    %742 = vmatprep.subr.mxu0 0.0
    %743 = vmatpush1.msra.mxu0 0.0
    %744 = vmatprep.subr.mxu0 0.0
    %745 = vmatpush1.msra.mxu0 0.0
    %746 = vmatprep.subr.mxu0 0.0
    %747 = vmatpush1.msra.mxu0 0.0
    %748 = vmatprep.subr.mxu0 0.0
    %749 = vmatpush1.msra.mxu0 0.0
    %750 = vmatprep.subr.mxu0 0.0
    %751 = vmatpush1.msra.mxu0 0.0
    %752 = vmatprep.subr.mxu0 0.0
    %753 = vmatpush1.msra.mxu0 0.0
    %754 = vmatprep.subr.mxu0 0.0
    %755 = vmatpush1.msra.mxu0 0.0
    %756 = vmatprep.subr.mxu0 0.0
    %757 = vmatpush1.msra.mxu0 0.0
    %758 = vmatprep.subr.mxu0 0.0
    %759 = vmatpush1.msra.mxu0 0.0
    %760 = vmatprep.subr.mxu0 0.0
    %761 = vmatpush1.msra.mxu0 0.0
    %762 = vmatprep.subr.mxu0 0.0
    %763 = vmatpush1.msra.mxu0 0.0
    %764 = vmatprep.subr.mxu0 0.0
    %765 = vmatpush1.msra.mxu0 0.0
    %766 = vmatprep.subr.mxu0 0.0
    %767 = vmatpush1.msra.mxu0 0.0
    %768 = vmatprep.mubr.f32.mxu0 0.0
    %v769 = vand.u32 %v579, 4294901760
    %770 = vmatmul.mubr.f32.gmra.mrb[0].mxu0 %v769
    %v771 = vpop.f32.mrb[0].mxu0
    %v772 = vadd.f32 %v661, %v771
    %v773 = vpop.f32.mrb[0].mxu0
    %774 = vdwg.mxu0
    %775 = vmatprep.subr.mxu0 0.0
    %v776 = vand.u32 %v13, 4294901760
    %v777 = vsub.f32 %v13, %v776
    %778 = vmatpush1.msra.mxu0 %v777
    %779 = vmatprep.subr.mxu0 0.0
    %v780 = vand.u32 %v14, 4294901760
    %v781 = vsub.f32 %v14, %v780
    %782 = vmatpush1.msra.mxu0 %v781
    %783 = vmatprep.subr.mxu0 0.0
    %v784 = vand.u32 %v15, 4294901760
    %v785 = vsub.f32 %v15, %v784
    %786 = vmatpush1.msra.mxu0 %v785
    %787 = vmatprep.subr.mxu0 0.0
    %v788 = vand.u32 %v16, 4294901760
    %v789 = vsub.f32 %v16, %v788
    %790 = vmatpush1.msra.mxu0 %v789
    %791 = vmatprep.subr.mxu0 0.0
    %v792 = vand.u32 %v17, 4294901760
    %v793 = vsub.f32 %v17, %v792
    %794 = vmatpush1.msra.mxu0 %v793
    %795 = vmatprep.subr.mxu0 0.0
    %v796 = vand.u32 %v18, 4294901760
    %v797 = vsub.f32 %v18, %v796
    %798 = vmatpush1.msra.mxu0 %v797
    %799 = vmatprep.subr.mxu0 0.0
    %v800 = vand.u32 %v19, 4294901760
    %v801 = vsub.f32 %v19, %v800
    %802 = vmatpush1.msra.mxu0 %v801
    %803 = vmatprep.subr.mxu0 0.0
    %v804 = vand.u32 %v20, 4294901760
    %v805 = vsub.f32 %v20, %v804
    %806 = vmatpush1.msra.mxu0 %v805
    %807 = vmatprep.subr.mxu0 0.0
    %808 = vmatpush1.msra.mxu0 0.0
    %809 = vmatprep.subr.mxu0 0.0
    %810 = vmatpush1.msra.mxu0 0.0
    %811 = vmatprep.subr.mxu0 0.0
    %812 = vmatpush1.msra.mxu0 0.0
    %813 = vmatprep.subr.mxu0 0.0
    %814 = vmatpush1.msra.mxu0 0.0
    %815 = vmatprep.subr.mxu0 0.0
    %816 = vmatpush1.msra.mxu0 0.0
    %817 = vmatprep.subr.mxu0 0.0
    %818 = vmatpush1.msra.mxu0 0.0
    %819 = vmatprep.subr.mxu0 0.0
    %820 = vmatpush1.msra.mxu0 0.0
    %821 = vmatprep.subr.mxu0 0.0
    %822 = vmatpush1.msra.mxu0 0.0
    %823 = vmatprep.subr.mxu0 0.0
    %824 = vmatpush1.msra.mxu0 0.0
    %825 = vmatprep.subr.mxu0 0.0
    %826 = vmatpush1.msra.mxu0 0.0
    %827 = vmatprep.subr.mxu0 0.0
    %828 = vmatpush1.msra.mxu0 0.0
    %829 = vmatprep.subr.mxu0 0.0
    %830 = vmatpush1.msra.mxu0 0.0
    %831 = vmatprep.subr.mxu0 0.0
    %832 = vmatpush1.msra.mxu0 0.0
    %833 = vmatprep.subr.mxu0 0.0
    %834 = vmatpush1.msra.mxu0 0.0
    %835 = vmatprep.subr.mxu0 0.0
    %836 = vmatpush1.msra.mxu0 0.0
    %837 = vmatprep.subr.mxu0 0.0
    %838 = vmatpush1.msra.mxu0 0.0
    %839 = vmatprep.subr.mxu0 0.0
    %840 = vmatpush1.msra.mxu0 0.0
    %841 = vmatprep.subr.mxu0 0.0
    %842 = vmatpush1.msra.mxu0 0.0
    %843 = vmatprep.subr.mxu0 0.0
    %844 = vmatpush1.msra.mxu0 0.0
    %845 = vmatprep.subr.mxu0 0.0
    %846 = vmatpush1.msra.mxu0 0.0
    %847 = vmatprep.subr.mxu0 0.0
    %848 = vmatpush1.msra.mxu0 0.0
    %849 = vmatprep.subr.mxu0 0.0
    %850 = vmatpush1.msra.mxu0 0.0
    %851 = vmatprep.subr.mxu0 0.0
    %852 = vmatpush1.msra.mxu0 0.0
    %853 = vmatprep.subr.mxu0 0.0
    %854 = vmatpush1.msra.mxu0 0.0
    %855 = vmatprep.mubr.f32.mxu0 0.0
    %v856 = vand.u32 %v579, 4294901760
    %v857 = vsub.f32 %v579, %v856
    %858 = vmatmul.mubr.f32.gmra.mrb[0].mxu0 %v857
    %v859 = vpop.f32.mrb[0].mxu0
    %v860 = vadd.f32 %v772, %v859
    %v861 = vpop.f32.mrb[0].mxu0
    %862 = vdwg.mxu0
    %863 = vmatprep.subr.mxu0 0.0
    %v864 = vand.u32 %v13, 4294901760
    %865 = vmatpush1.msra.mxu0 %v864
    %866 = vmatprep.subr.mxu0 0.0
    %v867 = vand.u32 %v14, 4294901760
    %868 = vmatpush1.msra.mxu0 %v867
    %869 = vmatprep.subr.mxu0 0.0
    %v870 = vand.u32 %v15, 4294901760
    %871 = vmatpush1.msra.mxu0 %v870
    %872 = vmatprep.subr.mxu0 0.0
    %v873 = vand.u32 %v16, 4294901760
    %874 = vmatpush1.msra.mxu0 %v873
    %875 = vmatprep.subr.mxu0 0.0
    %v876 = vand.u32 %v17, 4294901760
    %877 = vmatpush1.msra.mxu0 %v876
    %878 = vmatprep.subr.mxu0 0.0
    %v879 = vand.u32 %v18, 4294901760
    %880 = vmatpush1.msra.mxu0 %v879
    %881 = vmatprep.subr.mxu0 0.0
    %v882 = vand.u32 %v19, 4294901760
    %883 = vmatpush1.msra.mxu0 %v882
    %884 = vmatprep.subr.mxu0 0.0
    %v885 = vand.u32 %v20, 4294901760
    %886 = vmatpush1.msra.mxu0 %v885
    %887 = vmatprep.subr.mxu0 0.0
    %888 = vmatpush1.msra.mxu0 0.0
    %889 = vmatprep.subr.mxu0 0.0
    %890 = vmatpush1.msra.mxu0 0.0
    %891 = vmatprep.subr.mxu0 0.0
    %892 = vmatpush1.msra.mxu0 0.0
    %893 = vmatprep.subr.mxu0 0.0
    %894 = vmatpush1.msra.mxu0 0.0
    %895 = vmatprep.subr.mxu0 0.0
    %896 = vmatpush1.msra.mxu0 0.0
    %897 = vmatprep.subr.mxu0 0.0
    %898 = vmatpush1.msra.mxu0 0.0
    %899 = vmatprep.subr.mxu0 0.0
    %900 = vmatpush1.msra.mxu0 0.0
    %901 = vmatprep.subr.mxu0 0.0
    %902 = vmatpush1.msra.mxu0 0.0
    %903 = vmatprep.subr.mxu0 0.0
    %904 = vmatpush1.msra.mxu0 0.0
    %905 = vmatprep.subr.mxu0 0.0
    %906 = vmatpush1.msra.mxu0 0.0
    %907 = vmatprep.subr.mxu0 0.0
    %908 = vmatpush1.msra.mxu0 0.0
    %909 = vmatprep.subr.mxu0 0.0
    %910 = vmatpush1.msra.mxu0 0.0
    %911 = vmatprep.subr.mxu0 0.0
    %912 = vmatpush1.msra.mxu0 0.0
    %913 = vmatprep.subr.mxu0 0.0
    %914 = vmatpush1.msra.mxu0 0.0
    %915 = vmatprep.subr.mxu0 0.0
    %916 = vmatpush1.msra.mxu0 0.0
    %917 = vmatprep.subr.mxu0 0.0
    %918 = vmatpush1.msra.mxu0 0.0
    %919 = vmatprep.subr.mxu0 0.0
    %920 = vmatpush1.msra.mxu0 0.0
    %921 = vmatprep.subr.mxu0 0.0
    %922 = vmatpush1.msra.mxu0 0.0
    %923 = vmatprep.subr.mxu0 0.0
    %924 = vmatpush1.msra.mxu0 0.0
    %925 = vmatprep.subr.mxu0 0.0
    %926 = vmatpush1.msra.mxu0 0.0
    %927 = vmatprep.subr.mxu0 0.0
    %928 = vmatpush1.msra.mxu0 0.0
    %929 = vmatprep.subr.mxu0 0.0
    %930 = vmatpush1.msra.mxu0 0.0
    %931 = vmatprep.subr.mxu0 0.0
    %932 = vmatpush1.msra.mxu0 0.0
    %933 = vmatprep.subr.mxu0 0.0
    %934 = vmatpush1.msra.mxu0 0.0
    %935 = vmatprep.mubr.f32.mxu0 0.0
    %v936 = vand.u32 %v579, 4294901760
    %v937 = vsub.f32 %v579, %v936
    %v938 = vand.u32 %v937, 4294901760
    %939 = vmatmul.mubr.f32.gmra.mrb[0].mxu0 %v938
    %v940 = vpop.f32.mrb[0].mxu0
    %v941 = vadd.f32 %v860, %v940
    %v942 = vpop.f32.mrb[0].mxu0
    %943 = vdwg.mxu0
    %944 = vmatprep.subr.mxu0 0.0
    %v945 = vand.u32 %v13, 4294901760
    %v946 = vsub.f32 %v13, %v945
    %v947 = vand.u32 %v946, 4294901760
    %948 = vmatpush1.msra.mxu0 %v947
    %949 = vmatprep.subr.mxu0 0.0
    %v950 = vand.u32 %v14, 4294901760
    %v951 = vsub.f32 %v14, %v950
    %v952 = vand.u32 %v951, 4294901760
    %953 = vmatpush1.msra.mxu0 %v952
    %954 = vmatprep.subr.mxu0 0.0
    %v955 = vand.u32 %v15, 4294901760
    %v956 = vsub.f32 %v15, %v955
    %v957 = vand.u32 %v956, 4294901760
    %958 = vmatpush1.msra.mxu0 %v957
    %959 = vmatprep.subr.mxu0 0.0
    %v960 = vand.u32 %v16, 4294901760
    %v961 = vsub.f32 %v16, %v960
    %v962 = vand.u32 %v961, 4294901760
    %963 = vmatpush1.msra.mxu0 %v962
    %964 = vmatprep.subr.mxu0 0.0
    %v965 = vand.u32 %v17, 4294901760
    %v966 = vsub.f32 %v17, %v965
    %v967 = vand.u32 %v966, 4294901760
    %968 = vmatpush1.msra.mxu0 %v967
    %969 = vmatprep.subr.mxu0 0.0
    %v970 = vand.u32 %v18, 4294901760
    %v971 = vsub.f32 %v18, %v970
    %v972 = vand.u32 %v971, 4294901760
    %973 = vmatpush1.msra.mxu0 %v972
    %974 = vmatprep.subr.mxu0 0.0
    %v975 = vand.u32 %v19, 4294901760
    %v976 = vsub.f32 %v19, %v975
    %v977 = vand.u32 %v976, 4294901760
    %978 = vmatpush1.msra.mxu0 %v977
    %979 = vmatprep.subr.mxu0 0.0
    %v980 = vand.u32 %v20, 4294901760
    %v981 = vsub.f32 %v20, %v980
    %v982 = vand.u32 %v981, 4294901760
    %983 = vmatpush1.msra.mxu0 %v982
    %984 = vmatprep.subr.mxu0 0.0
    %985 = vmatpush1.msra.mxu0 0.0
    %986 = vmatprep.subr.mxu0 0.0
    %987 = vmatpush1.msra.mxu0 0.0
    %988 = vmatprep.subr.mxu0 0.0
    %989 = vmatpush1.msra.mxu0 0.0
    %990 = vmatprep.subr.mxu0 0.0
    %991 = vmatpush1.msra.mxu0 0.0
    %992 = vmatprep.subr.mxu0 0.0
    %993 = vmatpush1.msra.mxu0 0.0
    %994 = vmatprep.subr.mxu0 0.0
    %995 = vmatpush1.msra.mxu0 0.0
    %996 = vmatprep.subr.mxu0 0.0
    %997 = vmatpush1.msra.mxu0 0.0
    %998 = vmatprep.subr.mxu0 0.0
    %999 = vmatpush1.msra.mxu0 0.0
    %1000 = vmatprep.subr.mxu0 0.0
    %1001 = vmatpush1.msra.mxu0 0.0
    %1002 = vmatprep.subr.mxu0 0.0
    %1003 = vmatpush1.msra.mxu0 0.0
    %1004 = vmatprep.subr.mxu0 0.0
    %1005 = vmatpush1.msra.mxu0 0.0
    %1006 = vmatprep.subr.mxu0 0.0
    %1007 = vmatpush1.msra.mxu0 0.0
    %1008 = vmatprep.subr.mxu0 0.0
    %1009 = vmatpush1.msra.mxu0 0.0
    %1010 = vmatprep.subr.mxu0 0.0
    %1011 = vmatpush1.msra.mxu0 0.0
    %1012 = vmatprep.subr.mxu0 0.0
    %1013 = vmatpush1.msra.mxu0 0.0
    %1014 = vmatprep.subr.mxu0 0.0
    %1015 = vmatpush1.msra.mxu0 0.0
    %1016 = vmatprep.subr.mxu0 0.0
    %1017 = vmatpush1.msra.mxu0 0.0
    %1018 = vmatprep.subr.mxu0 0.0
    %1019 = vmatpush1.msra.mxu0 0.0
    %1020 = vmatprep.subr.mxu0 0.0
    %1021 = vmatpush1.msra.mxu0 0.0
    %1022 = vmatprep.subr.mxu0 0.0
    %1023 = vmatpush1.msra.mxu0 0.0
    %1024 = vmatprep.subr.mxu0 0.0
    %1025 = vmatpush1.msra.mxu0 0.0
    %1026 = vmatprep.subr.mxu0 0.0
    %1027 = vmatpush1.msra.mxu0 0.0
    %1028 = vmatprep.subr.mxu0 0.0
    %1029 = vmatpush1.msra.mxu0 0.0
    %1030 = vmatprep.subr.mxu0 0.0
    %1031 = vmatpush1.msra.mxu0 0.0
    %1032 = vmatprep.mubr.f32.mxu0 0.0
    %v1033 = vand.u32 %v579, 4294901760
    %1034 = vmatmul.mubr.f32.gmra.mrb[0].mxu0 %v1033
    %v1035 = vpop.f32.mrb[0].mxu0
    %v1036 = vadd.f32 %v941, %v1035
    %v1037 = vpop.f32.mrb[0].mxu0
    %1038 = vdwg.mxu0
    %1039 = vmatprep.subr.mxu0 0.0
    %v1040 = vand.u32 %v13, 4294901760
    %1041 = vmatpush1.msra.mxu0 %v1040
    %1042 = vmatprep.subr.mxu0 0.0
    %v1043 = vand.u32 %v14, 4294901760
    %1044 = vmatpush1.msra.mxu0 %v1043
    %1045 = vmatprep.subr.mxu0 0.0
    %v1046 = vand.u32 %v15, 4294901760
    %1047 = vmatpush1.msra.mxu0 %v1046
    %1048 = vmatprep.subr.mxu0 0.0
    %v1049 = vand.u32 %v16, 4294901760
    %1050 = vmatpush1.msra.mxu0 %v1049
    %1051 = vmatprep.subr.mxu0 0.0
    %v1052 = vand.u32 %v17, 4294901760
    %1053 = vmatpush1.msra.mxu0 %v1052
    %1054 = vmatprep.subr.mxu0 0.0
    %v1055 = vand.u32 %v18, 4294901760
    %1056 = vmatpush1.msra.mxu0 %v1055
    %1057 = vmatprep.subr.mxu0 0.0
    %v1058 = vand.u32 %v19, 4294901760
    %1059 = vmatpush1.msra.mxu0 %v1058
    %1060 = vmatprep.subr.mxu0 0.0
    %v1061 = vand.u32 %v20, 4294901760
    %1062 = vmatpush1.msra.mxu0 %v1061
    %1063 = vmatprep.subr.mxu0 0.0
    %1064 = vmatpush1.msra.mxu0 0.0
    %1065 = vmatprep.subr.mxu0 0.0
    %1066 = vmatpush1.msra.mxu0 0.0
    %1067 = vmatprep.subr.mxu0 0.0
    %1068 = vmatpush1.msra.mxu0 0.0
    %1069 = vmatprep.subr.mxu0 0.0
    %1070 = vmatpush1.msra.mxu0 0.0
    %1071 = vmatprep.subr.mxu0 0.0
    %1072 = vmatpush1.msra.mxu0 0.0
    %1073 = vmatprep.subr.mxu0 0.0
    %1074 = vmatpush1.msra.mxu0 0.0
    %1075 = vmatprep.subr.mxu0 0.0
    %1076 = vmatpush1.msra.mxu0 0.0
    %1077 = vmatprep.subr.mxu0 0.0
    %1078 = vmatpush1.msra.mxu0 0.0
    %1079 = vmatprep.subr.mxu0 0.0
    %1080 = vmatpush1.msra.mxu0 0.0
    %1081 = vmatprep.subr.mxu0 0.0
    %1082 = vmatpush1.msra.mxu0 0.0
    %1083 = vmatprep.subr.mxu0 0.0
    %1084 = vmatpush1.msra.mxu0 0.0
    %1085 = vmatprep.subr.mxu0 0.0
    %1086 = vmatpush1.msra.mxu0 0.0
    %1087 = vmatprep.subr.mxu0 0.0
    %1088 = vmatpush1.msra.mxu0 0.0
    %1089 = vmatprep.subr.mxu0 0.0
    %1090 = vmatpush1.msra.mxu0 0.0
    %1091 = vmatprep.subr.mxu0 0.0
    %1092 = vmatpush1.msra.mxu0 0.0
    %1093 = vmatprep.subr.mxu0 0.0
    %1094 = vmatpush1.msra.mxu0 0.0
    %1095 = vmatprep.subr.mxu0 0.0
    %1096 = vmatpush1.msra.mxu0 0.0
    %1097 = vmatprep.subr.mxu0 0.0
    %1098 = vmatpush1.msra.mxu0 0.0
    %1099 = vmatprep.subr.mxu0 0.0
    %1100 = vmatpush1.msra.mxu0 0.0
    %1101 = vmatprep.subr.mxu0 0.0
    %1102 = vmatpush1.msra.mxu0 0.0
    %1103 = vmatprep.subr.mxu0 0.0
    %1104 = vmatpush1.msra.mxu0 0.0
    %1105 = vmatprep.subr.mxu0 0.0
    %1106 = vmatpush1.msra.mxu0 0.0
    %1107 = vmatprep.subr.mxu0 0.0
    %1108 = vmatpush1.msra.mxu0 0.0
    %1109 = vmatprep.subr.mxu0 0.0
    %1110 = vmatpush1.msra.mxu0 0.0
    %1111 = vmatprep.mubr.f32.mxu0 0.0
    %v1112 = vand.u32 %v579, 4294901760
    %1113 = vmatmul.mubr.f32.gmra.mrb[0].mxu0 %v1112
    %v1114 = vpop.f32.mrb[0].mxu0
    %v1115 = vadd.f32 %v1036, %v1114
    %v1116 = vpop.f32.mrb[0].mxu0
    %1117 = vdwg.mxu0
    %1119 = vrot.lane.b32.xlu0 %v1115, 32
    %v1120 = vpop.permute.xlu0 %1119
    %vm1122 = vcmask 523520
    %1123 = vst.msk [vmem:[#allocation2] sm:$0xff] %vm1122, %v1120
    %1124 = vset.pattern.permute.xlu0 2
    %1125 = vperm.xlu0 %1124, %v12
    %v1126 = vpop.permute.xlu0 %1125
    %vm1127 = vcmp.eq.s32.totalorder %v1126, %v22
    %v1128 = vsel %vm1127, 1, 0
    %v1129 = vcvt.s32.f32 %v1128
    %v1131 = vsel %vm29, %v1129, 0
    %1133 = vmatprep.subr.mxu0 0.0
    %v1134 = vand.u32 %v13, 4294901760
    %1135 = vmatpush1.msra.mxu0 %v1134
    %1136 = vmatprep.subr.mxu0 0.0
    %v1137 = vand.u32 %v14, 4294901760
    %1138 = vmatpush1.msra.mxu0 %v1137
    %1139 = vmatprep.subr.mxu0 0.0
    %v1140 = vand.u32 %v15, 4294901760
    %1141 = vmatpush1.msra.mxu0 %v1140
    %1142 = vmatprep.subr.mxu0 0.0
    %v1143 = vand.u32 %v16, 4294901760
    %1144 = vmatpush1.msra.mxu0 %v1143
    %1145 = vmatprep.subr.mxu0 0.0
    %v1146 = vand.u32 %v17, 4294901760
    %1147 = vmatpush1.msra.mxu0 %v1146
    %1148 = vmatprep.subr.mxu0 0.0
    %v1149 = vand.u32 %v18, 4294901760
    %1150 = vmatpush1.msra.mxu0 %v1149
    %1151 = vmatprep.subr.mxu0 0.0
    %v1152 = vand.u32 %v19, 4294901760
    %1153 = vmatpush1.msra.mxu0 %v1152
    %1154 = vmatprep.subr.mxu0 0.0
    %v1155 = vand.u32 %v20, 4294901760
    %1156 = vmatpush1.msra.mxu0 %v1155
    %1157 = vmatprep.subr.mxu0 0.0
    %1158 = vmatpush1.msra.mxu0 0.0
    %1159 = vmatprep.subr.mxu0 0.0
    %1160 = vmatpush1.msra.mxu0 0.0
    %1161 = vmatprep.subr.mxu0 0.0
    %1162 = vmatpush1.msra.mxu0 0.0
    %1163 = vmatprep.subr.mxu0 0.0
    %1164 = vmatpush1.msra.mxu0 0.0
    %1165 = vmatprep.subr.mxu0 0.0
    %1166 = vmatpush1.msra.mxu0 0.0
    %1167 = vmatprep.subr.mxu0 0.0
    %1168 = vmatpush1.msra.mxu0 0.0
    %1169 = vmatprep.subr.mxu0 0.0
    %1170 = vmatpush1.msra.mxu0 0.0
    %1171 = vmatprep.subr.mxu0 0.0
    %1172 = vmatpush1.msra.mxu0 0.0
    %1173 = vmatprep.subr.mxu0 0.0
    %1174 = vmatpush1.msra.mxu0 0.0
    %1175 = vmatprep.subr.mxu0 0.0
    %1176 = vmatpush1.msra.mxu0 0.0
    %1177 = vmatprep.subr.mxu0 0.0
    %1178 = vmatpush1.msra.mxu0 0.0
    %1179 = vmatprep.subr.mxu0 0.0
    %1180 = vmatpush1.msra.mxu0 0.0
    %1181 = vmatprep.subr.mxu0 0.0
    %1182 = vmatpush1.msra.mxu0 0.0
    %1183 = vmatprep.subr.mxu0 0.0
    %1184 = vmatpush1.msra.mxu0 0.0
    %1185 = vmatprep.subr.mxu0 0.0
    %1186 = vmatpush1.msra.mxu0 0.0
    %1187 = vmatprep.subr.mxu0 0.0
    %1188 = vmatpush1.msra.mxu0 0.0
    %1189 = vmatprep.subr.mxu0 0.0
    %1190 = vmatpush1.msra.mxu0 0.0
    %1191 = vmatprep.subr.mxu0 0.0
    %1192 = vmatpush1.msra.mxu0 0.0
    %1193 = vmatprep.subr.mxu0 0.0
    %1194 = vmatpush1.msra.mxu0 0.0
    %1195 = vmatprep.subr.mxu0 0.0
    %1196 = vmatpush1.msra.mxu0 0.0
    %1197 = vmatprep.subr.mxu0 0.0
    %1198 = vmatpush1.msra.mxu0 0.0
    %1199 = vmatprep.subr.mxu0 0.0
    %1200 = vmatpush1.msra.mxu0 0.0
    %1201 = vmatprep.subr.mxu0 0.0
    %1202 = vmatpush1.msra.mxu0 0.0
    %1203 = vmatprep.subr.mxu0 0.0
    %1204 = vmatpush1.msra.mxu0 0.0
    %1205 = vmatprep.mubr.f32.mxu0 0.0
    %v1206 = vand.u32 %v1131, 4294901760
    %v1207 = vsub.f32 %v1131, %v1206
    %v1208 = vand.u32 %v1207, 4294901760
    %v1209 = vsub.f32 %v1207, %v1208
    %v1210 = vand.u32 %v1209, 4294901760
    %1211 = vmatmul.mubr.f32.gmra.mrb[0].mxu0 %v1210
    %v1212 = vpop.f32.mrb[0].mxu0
    %v1213 = vadd.f32 0.0, %v1212
    %v1214 = vpop.f32.mrb[0].mxu0
    %1215 = vdwg.mxu0
    %1216 = vmatprep.subr.mxu0 0.0
    %v1217 = vand.u32 %v13, 4294901760
    %v1218 = vsub.f32 %v13, %v1217
    %v1219 = vand.u32 %v1218, 4294901760
    %v1220 = vsub.f32 %v1218, %v1219
    %v1221 = vand.u32 %v1220, 4294901760
    %1222 = vmatpush1.msra.mxu0 %v1221
    %1223 = vmatprep.subr.mxu0 0.0
    %v1224 = vand.u32 %v14, 4294901760
    %v1225 = vsub.f32 %v14, %v1224
    %v1226 = vand.u32 %v1225, 4294901760
    %v1227 = vsub.f32 %v1225, %v1226
    %v1228 = vand.u32 %v1227, 4294901760
    %1229 = vmatpush1.msra.mxu0 %v1228
    %1230 = vmatprep.subr.mxu0 0.0
    %v1231 = vand.u32 %v15, 4294901760
    %v1232 = vsub.f32 %v15, %v1231
    %v1233 = vand.u32 %v1232, 4294901760
    %v1234 = vsub.f32 %v1232, %v1233
    %v1235 = vand.u32 %v1234, 4294901760
    %1236 = vmatpush1.msra.mxu0 %v1235
    %1237 = vmatprep.subr.mxu0 0.0
    %v1238 = vand.u32 %v16, 4294901760
    %v1239 = vsub.f32 %v16, %v1238
    %v1240 = vand.u32 %v1239, 4294901760
    %v1241 = vsub.f32 %v1239, %v1240
    %v1242 = vand.u32 %v1241, 4294901760
    %1243 = vmatpush1.msra.mxu0 %v1242
    %1244 = vmatprep.subr.mxu0 0.0
    %v1245 = vand.u32 %v17, 4294901760
    %v1246 = vsub.f32 %v17, %v1245
    %v1247 = vand.u32 %v1246, 4294901760
    %v1248 = vsub.f32 %v1246, %v1247
    %v1249 = vand.u32 %v1248, 4294901760
    %1250 = vmatpush1.msra.mxu0 %v1249
    %1251 = vmatprep.subr.mxu0 0.0
    %v1252 = vand.u32 %v18, 4294901760
    %v1253 = vsub.f32 %v18, %v1252
    %v1254 = vand.u32 %v1253, 4294901760
    %v1255 = vsub.f32 %v1253, %v1254
    %v1256 = vand.u32 %v1255, 4294901760
    %1257 = vmatpush1.msra.mxu0 %v1256
    %1258 = vmatprep.subr.mxu0 0.0
    %v1259 = vand.u32 %v19, 4294901760
    %v1260 = vsub.f32 %v19, %v1259
    %v1261 = vand.u32 %v1260, 4294901760
    %v1262 = vsub.f32 %v1260, %v1261
    %v1263 = vand.u32 %v1262, 4294901760
    %1264 = vmatpush1.msra.mxu0 %v1263
    %1265 = vmatprep.subr.mxu0 0.0
    %v1266 = vand.u32 %v20, 4294901760
    %v1267 = vsub.f32 %v20, %v1266
    %v1268 = vand.u32 %v1267, 4294901760
    %v1269 = vsub.f32 %v1267, %v1268
    %v1270 = vand.u32 %v1269, 4294901760
    %1271 = vmatpush1.msra.mxu0 %v1270
    %1272 = vmatprep.subr.mxu0 0.0
    %1273 = vmatpush1.msra.mxu0 0.0
    %1274 = vmatprep.subr.mxu0 0.0
    %1275 = vmatpush1.msra.mxu0 0.0
    %1276 = vmatprep.subr.mxu0 0.0
    %1277 = vmatpush1.msra.mxu0 0.0
    %1278 = vmatprep.subr.mxu0 0.0
    %1279 = vmatpush1.msra.mxu0 0.0
    %1280 = vmatprep.subr.mxu0 0.0
    %1281 = vmatpush1.msra.mxu0 0.0
    %1282 = vmatprep.subr.mxu0 0.0
    %1283 = vmatpush1.msra.mxu0 0.0
    %1284 = vmatprep.subr.mxu0 0.0
    %1285 = vmatpush1.msra.mxu0 0.0
    %1286 = vmatprep.subr.mxu0 0.0
    %1287 = vmatpush1.msra.mxu0 0.0
    %1288 = vmatprep.subr.mxu0 0.0
    %1289 = vmatpush1.msra.mxu0 0.0
    %1290 = vmatprep.subr.mxu0 0.0
    %1291 = vmatpush1.msra.mxu0 0.0
    %1292 = vmatprep.subr.mxu0 0.0
    %1293 = vmatpush1.msra.mxu0 0.0
    %1294 = vmatprep.subr.mxu0 0.0
    %1295 = vmatpush1.msra.mxu0 0.0
    %1296 = vmatprep.subr.mxu0 0.0
    %1297 = vmatpush1.msra.mxu0 0.0
    %1298 = vmatprep.subr.mxu0 0.0
    %1299 = vmatpush1.msra.mxu0 0.0
    %1300 = vmatprep.subr.mxu0 0.0
    %1301 = vmatpush1.msra.mxu0 0.0
    %1302 = vmatprep.subr.mxu0 0.0
    %1303 = vmatpush1.msra.mxu0 0.0
    %1304 = vmatprep.subr.mxu0 0.0
    %1305 = vmatpush1.msra.mxu0 0.0
    %1306 = vmatprep.subr.mxu0 0.0
    %1307 = vmatpush1.msra.mxu0 0.0
    %1308 = vmatprep.subr.mxu0 0.0
    %1309 = vmatpush1.msra.mxu0 0.0
    %1310 = vmatprep.subr.mxu0 0.0
    %1311 = vmatpush1.msra.mxu0 0.0
    %1312 = vmatprep.subr.mxu0 0.0
    %1313 = vmatpush1.msra.mxu0 0.0
    %1314 = vmatprep.subr.mxu0 0.0
    %1315 = vmatpush1.msra.mxu0 0.0
    %1316 = vmatprep.subr.mxu0 0.0
    %1317 = vmatpush1.msra.mxu0 0.0
    %1318 = vmatprep.subr.mxu0 0.0
    %1319 = vmatpush1.msra.mxu0 0.0
    %1320 = vmatprep.mubr.f32.mxu0 0.0
    %v1321 = vand.u32 %v1131, 4294901760
    %1322 = vmatmul.mubr.f32.gmra.mrb[0].mxu0 %v1321
    %v1323 = vpop.f32.mrb[0].mxu0
    %v1324 = vadd.f32 %v1213, %v1323
    %v1325 = vpop.f32.mrb[0].mxu0
    %1326 = vdwg.mxu0
    %1327 = vmatprep.subr.mxu0 0.0
    %v1328 = vand.u32 %v13, 4294901760
    %v1329 = vsub.f32 %v13, %v1328
    %1330 = vmatpush1.msra.mxu0 %v1329
    %1331 = vmatprep.subr.mxu0 0.0
    %v1332 = vand.u32 %v14, 4294901760
    %v1333 = vsub.f32 %v14, %v1332
    %1334 = vmatpush1.msra.mxu0 %v1333
    %1335 = vmatprep.subr.mxu0 0.0
    %v1336 = vand.u32 %v15, 4294901760
    %v1337 = vsub.f32 %v15, %v1336
    %1338 = vmatpush1.msra.mxu0 %v1337
    %1339 = vmatprep.subr.mxu0 0.0
    %v1340 = vand.u32 %v16, 4294901760
    %v1341 = vsub.f32 %v16, %v1340
    %1342 = vmatpush1.msra.mxu0 %v1341
    %1343 = vmatprep.subr.mxu0 0.0
    %v1344 = vand.u32 %v17, 4294901760
    %v1345 = vsub.f32 %v17, %v1344
    %1346 = vmatpush1.msra.mxu0 %v1345
    %1347 = vmatprep.subr.mxu0 0.0
    %v1348 = vand.u32 %v18, 4294901760
    %v1349 = vsub.f32 %v18, %v1348
    %1350 = vmatpush1.msra.mxu0 %v1349
    %1351 = vmatprep.subr.mxu0 0.0
    %v1352 = vand.u32 %v19, 4294901760
    %v1353 = vsub.f32 %v19, %v1352
    %1354 = vmatpush1.msra.mxu0 %v1353
    %1355 = vmatprep.subr.mxu0 0.0
    %v1356 = vand.u32 %v20, 4294901760
    %v1357 = vsub.f32 %v20, %v1356
    %1358 = vmatpush1.msra.mxu0 %v1357
    %1359 = vmatprep.subr.mxu0 0.0
    %1360 = vmatpush1.msra.mxu0 0.0
    %1361 = vmatprep.subr.mxu0 0.0
    %1362 = vmatpush1.msra.mxu0 0.0
    %1363 = vmatprep.subr.mxu0 0.0
    %1364 = vmatpush1.msra.mxu0 0.0
    %1365 = vmatprep.subr.mxu0 0.0
    %1366 = vmatpush1.msra.mxu0 0.0
    %1367 = vmatprep.subr.mxu0 0.0
    %1368 = vmatpush1.msra.mxu0 0.0
    %1369 = vmatprep.subr.mxu0 0.0
    %1370 = vmatpush1.msra.mxu0 0.0
    %1371 = vmatprep.subr.mxu0 0.0
    %1372 = vmatpush1.msra.mxu0 0.0
    %1373 = vmatprep.subr.mxu0 0.0
    %1374 = vmatpush1.msra.mxu0 0.0
    %1375 = vmatprep.subr.mxu0 0.0
    %1376 = vmatpush1.msra.mxu0 0.0
    %1377 = vmatprep.subr.mxu0 0.0
    %1378 = vmatpush1.msra.mxu0 0.0
    %1379 = vmatprep.subr.mxu0 0.0
    %1380 = vmatpush1.msra.mxu0 0.0
    %1381 = vmatprep.subr.mxu0 0.0
    %1382 = vmatpush1.msra.mxu0 0.0
    %1383 = vmatprep.subr.mxu0 0.0
    %1384 = vmatpush1.msra.mxu0 0.0
    %1385 = vmatprep.subr.mxu0 0.0
    %1386 = vmatpush1.msra.mxu0 0.0
    %1387 = vmatprep.subr.mxu0 0.0
    %1388 = vmatpush1.msra.mxu0 0.0
    %1389 = vmatprep.subr.mxu0 0.0
    %1390 = vmatpush1.msra.mxu0 0.0
    %1391 = vmatprep.subr.mxu0 0.0
    %1392 = vmatpush1.msra.mxu0 0.0
    %1393 = vmatprep.subr.mxu0 0.0
    %1394 = vmatpush1.msra.mxu0 0.0
    %1395 = vmatprep.subr.mxu0 0.0
    %1396 = vmatpush1.msra.mxu0 0.0
    %1397 = vmatprep.subr.mxu0 0.0
    %1398 = vmatpush1.msra.mxu0 0.0
    %1399 = vmatprep.subr.mxu0 0.0
    %1400 = vmatpush1.msra.mxu0 0.0
    %1401 = vmatprep.subr.mxu0 0.0
    %1402 = vmatpush1.msra.mxu0 0.0
    %1403 = vmatprep.subr.mxu0 0.0
    %1404 = vmatpush1.msra.mxu0 0.0
    %1405 = vmatprep.subr.mxu0 0.0
    %1406 = vmatpush1.msra.mxu0 0.0
    %1407 = vmatprep.mubr.f32.mxu0 0.0
    %v1408 = vand.u32 %v1131, 4294901760
    %v1409 = vsub.f32 %v1131, %v1408
    %1410 = vmatmul.mubr.f32.gmra.mrb[0].mxu0 %v1409
    %v1411 = vpop.f32.mrb[0].mxu0
    %v1412 = vadd.f32 %v1324, %v1411
    %v1413 = vpop.f32.mrb[0].mxu0
    %1414 = vdwg.mxu0
    %1415 = vmatprep.subr.mxu0 0.0
    %v1416 = vand.u32 %v13, 4294901760
    %1417 = vmatpush1.msra.mxu0 %v1416
    %1418 = vmatprep.subr.mxu0 0.0
    %v1419 = vand.u32 %v14, 4294901760
    %1420 = vmatpush1.msra.mxu0 %v1419
    %1421 = vmatprep.subr.mxu0 0.0
    %v1422 = vand.u32 %v15, 4294901760
    %1423 = vmatpush1.msra.mxu0 %v1422
    %1424 = vmatprep.subr.mxu0 0.0
    %v1425 = vand.u32 %v16, 4294901760
    %1426 = vmatpush1.msra.mxu0 %v1425
    %1427 = vmatprep.subr.mxu0 0.0
    %v1428 = vand.u32 %v17, 4294901760
    %1429 = vmatpush1.msra.mxu0 %v1428
    %1430 = vmatprep.subr.mxu0 0.0
    %v1431 = vand.u32 %v18, 4294901760
    %1432 = vmatpush1.msra.mxu0 %v1431
    %1433 = vmatprep.subr.mxu0 0.0
    %v1434 = vand.u32 %v19, 4294901760
    %1435 = vmatpush1.msra.mxu0 %v1434
    %1436 = vmatprep.subr.mxu0 0.0
    %v1437 = vand.u32 %v20, 4294901760
    %1438 = vmatpush1.msra.mxu0 %v1437
    %1439 = vmatprep.subr.mxu0 0.0
    %1440 = vmatpush1.msra.mxu0 0.0
    %1441 = vmatprep.subr.mxu0 0.0
    %1442 = vmatpush1.msra.mxu0 0.0
    %1443 = vmatprep.subr.mxu0 0.0
    %1444 = vmatpush1.msra.mxu0 0.0
    %1445 = vmatprep.subr.mxu0 0.0
    %1446 = vmatpush1.msra.mxu0 0.0
    %1447 = vmatprep.subr.mxu0 0.0
    %1448 = vmatpush1.msra.mxu0 0.0
    %1449 = vmatprep.subr.mxu0 0.0
    %1450 = vmatpush1.msra.mxu0 0.0
    %1451 = vmatprep.subr.mxu0 0.0
    %1452 = vmatpush1.msra.mxu0 0.0
    %1453 = vmatprep.subr.mxu0 0.0
    %1454 = vmatpush1.msra.mxu0 0.0
    %1455 = vmatprep.subr.mxu0 0.0
    %1456 = vmatpush1.msra.mxu0 0.0
    %1457 = vmatprep.subr.mxu0 0.0
    %1458 = vmatpush1.msra.mxu0 0.0
    %1459 = vmatprep.subr.mxu0 0.0
    %1460 = vmatpush1.msra.mxu0 0.0
    %1461 = vmatprep.subr.mxu0 0.0
    %1462 = vmatpush1.msra.mxu0 0.0
    %1463 = vmatprep.subr.mxu0 0.0
    %1464 = vmatpush1.msra.mxu0 0.0
    %1465 = vmatprep.subr.mxu0 0.0
    %1466 = vmatpush1.msra.mxu0 0.0
    %1467 = vmatprep.subr.mxu0 0.0
    %1468 = vmatpush1.msra.mxu0 0.0
    %1469 = vmatprep.subr.mxu0 0.0
    %1470 = vmatpush1.msra.mxu0 0.0
    %1471 = vmatprep.subr.mxu0 0.0
    %1472 = vmatpush1.msra.mxu0 0.0
    %1473 = vmatprep.subr.mxu0 0.0
    %1474 = vmatpush1.msra.mxu0 0.0
    %1475 = vmatprep.subr.mxu0 0.0
    %1476 = vmatpush1.msra.mxu0 0.0
    %1477 = vmatprep.subr.mxu0 0.0
    %1478 = vmatpush1.msra.mxu0 0.0
    %1479 = vmatprep.subr.mxu0 0.0
    %1480 = vmatpush1.msra.mxu0 0.0
    %1481 = vmatprep.subr.mxu0 0.0
    %1482 = vmatpush1.msra.mxu0 0.0
    %1483 = vmatprep.subr.mxu0 0.0
    %1484 = vmatpush1.msra.mxu0 0.0
    %1485 = vmatprep.subr.mxu0 0.0
    %1486 = vmatpush1.msra.mxu0 0.0
    %1487 = vmatprep.mubr.f32.mxu0 0.0
    %v1488 = vand.u32 %v1131, 4294901760
    %v1489 = vsub.f32 %v1131, %v1488
    %v1490 = vand.u32 %v1489, 4294901760
    %1491 = vmatmul.mubr.f32.gmra.mrb[0].mxu0 %v1490
    %v1492 = vpop.f32.mrb[0].mxu0
    %v1493 = vadd.f32 %v1412, %v1492
    %v1494 = vpop.f32.mrb[0].mxu0
    %1495 = vdwg.mxu0
    %1496 = vmatprep.subr.mxu0 0.0
    %v1497 = vand.u32 %v13, 4294901760
    %v1498 = vsub.f32 %v13, %v1497
    %v1499 = vand.u32 %v1498, 4294901760
    %1500 = vmatpush1.msra.mxu0 %v1499
    %1501 = vmatprep.subr.mxu0 0.0
    %v1502 = vand.u32 %v14, 4294901760
    %v1503 = vsub.f32 %v14, %v1502
    %v1504 = vand.u32 %v1503, 4294901760
    %1505 = vmatpush1.msra.mxu0 %v1504
    %1506 = vmatprep.subr.mxu0 0.0
    %v1507 = vand.u32 %v15, 4294901760
    %v1508 = vsub.f32 %v15, %v1507
    %v1509 = vand.u32 %v1508, 4294901760
    %1510 = vmatpush1.msra.mxu0 %v1509
    %1511 = vmatprep.subr.mxu0 0.0
    %v1512 = vand.u32 %v16, 4294901760
    %v1513 = vsub.f32 %v16, %v1512
    %v1514 = vand.u32 %v1513, 4294901760
    %1515 = vmatpush1.msra.mxu0 %v1514
    %1516 = vmatprep.subr.mxu0 0.0
    %v1517 = vand.u32 %v17, 4294901760
    %v1518 = vsub.f32 %v17, %v1517
    %v1519 = vand.u32 %v1518, 4294901760
    %1520 = vmatpush1.msra.mxu0 %v1519
    %1521 = vmatprep.subr.mxu0 0.0
    %v1522 = vand.u32 %v18, 4294901760
    %v1523 = vsub.f32 %v18, %v1522
    %v1524 = vand.u32 %v1523, 4294901760
    %1525 = vmatpush1.msra.mxu0 %v1524
    %1526 = vmatprep.subr.mxu0 0.0
    %v1527 = vand.u32 %v19, 4294901760
    %v1528 = vsub.f32 %v19, %v1527
    %v1529 = vand.u32 %v1528, 4294901760
    %1530 = vmatpush1.msra.mxu0 %v1529
    %1531 = vmatprep.subr.mxu0 0.0
    %v1532 = vand.u32 %v20, 4294901760
    %v1533 = vsub.f32 %v20, %v1532
    %v1534 = vand.u32 %v1533, 4294901760
    %1535 = vmatpush1.msra.mxu0 %v1534
    %1536 = vmatprep.subr.mxu0 0.0
    %1537 = vmatpush1.msra.mxu0 0.0
    %1538 = vmatprep.subr.mxu0 0.0
    %1539 = vmatpush1.msra.mxu0 0.0
    %1540 = vmatprep.subr.mxu0 0.0
    %1541 = vmatpush1.msra.mxu0 0.0
    %1542 = vmatprep.subr.mxu0 0.0
    %1543 = vmatpush1.msra.mxu0 0.0
    %1544 = vmatprep.subr.mxu0 0.0
    %1545 = vmatpush1.msra.mxu0 0.0
    %1546 = vmatprep.subr.mxu0 0.0
    %1547 = vmatpush1.msra.mxu0 0.0
    %1548 = vmatprep.subr.mxu0 0.0
    %1549 = vmatpush1.msra.mxu0 0.0
    %1550 = vmatprep.subr.mxu0 0.0
    %1551 = vmatpush1.msra.mxu0 0.0
    %1552 = vmatprep.subr.mxu0 0.0
    %1553 = vmatpush1.msra.mxu0 0.0
    %1554 = vmatprep.subr.mxu0 0.0
    %1555 = vmatpush1.msra.mxu0 0.0
    %1556 = vmatprep.subr.mxu0 0.0
    %1557 = vmatpush1.msra.mxu0 0.0
    %1558 = vmatprep.subr.mxu0 0.0
    %1559 = vmatpush1.msra.mxu0 0.0
    %1560 = vmatprep.subr.mxu0 0.0
    %1561 = vmatpush1.msra.mxu0 0.0
    %1562 = vmatprep.subr.mxu0 0.0
    %1563 = vmatpush1.msra.mxu0 0.0
    %1564 = vmatprep.subr.mxu0 0.0
    %1565 = vmatpush1.msra.mxu0 0.0
    %1566 = vmatprep.subr.mxu0 0.0
    %1567 = vmatpush1.msra.mxu0 0.0
    %1568 = vmatprep.subr.mxu0 0.0
    %1569 = vmatpush1.msra.mxu0 0.0
    %1570 = vmatprep.subr.mxu0 0.0
    %1571 = vmatpush1.msra.mxu0 0.0
    %1572 = vmatprep.subr.mxu0 0.0
    %1573 = vmatpush1.msra.mxu0 0.0
    %1574 = vmatprep.subr.mxu0 0.0
    %1575 = vmatpush1.msra.mxu0 0.0
    %1576 = vmatprep.subr.mxu0 0.0
    %1577 = vmatpush1.msra.mxu0 0.0
    %1578 = vmatprep.subr.mxu0 0.0
    %1579 = vmatpush1.msra.mxu0 0.0
    %1580 = vmatprep.subr.mxu0 0.0
    %1581 = vmatpush1.msra.mxu0 0.0
    %1582 = vmatprep.subr.mxu0 0.0
    %1583 = vmatpush1.msra.mxu0 0.0
    %1584 = vmatprep.mubr.f32.mxu0 0.0
    %v1585 = vand.u32 %v1131, 4294901760
    %1586 = vmatmul.mubr.f32.gmra.mrb[0].mxu0 %v1585
    %v1587 = vpop.f32.mrb[0].mxu0
    %v1588 = vadd.f32 %v1493, %v1587
    %v1589 = vpop.f32.mrb[0].mxu0
    %1590 = vdwg.mxu0
    %1591 = vmatprep.subr.mxu0 0.0
    %v1592 = vand.u32 %v13, 4294901760
    %1593 = vmatpush1.msra.mxu0 %v1592
    %1594 = vmatprep.subr.mxu0 0.0
    %v1595 = vand.u32 %v14, 4294901760
    %1596 = vmatpush1.msra.mxu0 %v1595
    %1597 = vmatprep.subr.mxu0 0.0
    %v1598 = vand.u32 %v15, 4294901760
    %1599 = vmatpush1.msra.mxu0 %v1598
    %1600 = vmatprep.subr.mxu0 0.0
    %v1601 = vand.u32 %v16, 4294901760
    %1602 = vmatpush1.msra.mxu0 %v1601
    %1603 = vmatprep.subr.mxu0 0.0
    %v1604 = vand.u32 %v17, 4294901760
    %1605 = vmatpush1.msra.mxu0 %v1604
    %1606 = vmatprep.subr.mxu0 0.0
    %v1607 = vand.u32 %v18, 4294901760
    %1608 = vmatpush1.msra.mxu0 %v1607
    %1609 = vmatprep.subr.mxu0 0.0
    %v1610 = vand.u32 %v19, 4294901760
    %1611 = vmatpush1.msra.mxu0 %v1610
    %1612 = vmatprep.subr.mxu0 0.0
    %v1613 = vand.u32 %v20, 4294901760
    %1614 = vmatpush1.msra.mxu0 %v1613
    %1615 = vmatprep.subr.mxu0 0.0
    %1616 = vmatpush1.msra.mxu0 0.0
    %1617 = vmatprep.subr.mxu0 0.0
    %1618 = vmatpush1.msra.mxu0 0.0
    %1619 = vmatprep.subr.mxu0 0.0
    %1620 = vmatpush1.msra.mxu0 0.0
    %1621 = vmatprep.subr.mxu0 0.0
    %1622 = vmatpush1.msra.mxu0 0.0
    %1623 = vmatprep.subr.mxu0 0.0
    %1624 = vmatpush1.msra.mxu0 0.0
    %1625 = vmatprep.subr.mxu0 0.0
    %1626 = vmatpush1.msra.mxu0 0.0
    %1627 = vmatprep.subr.mxu0 0.0
    %1628 = vmatpush1.msra.mxu0 0.0
    %1629 = vmatprep.subr.mxu0 0.0
    %1630 = vmatpush1.msra.mxu0 0.0
    %1631 = vmatprep.subr.mxu0 0.0
    %1632 = vmatpush1.msra.mxu0 0.0
    %1633 = vmatprep.subr.mxu0 0.0
    %1634 = vmatpush1.msra.mxu0 0.0
    %1635 = vmatprep.subr.mxu0 0.0
    %1636 = vmatpush1.msra.mxu0 0.0
    %1637 = vmatprep.subr.mxu0 0.0
    %1638 = vmatpush1.msra.mxu0 0.0
    %1639 = vmatprep.subr.mxu0 0.0
    %1640 = vmatpush1.msra.mxu0 0.0
    %1641 = vmatprep.subr.mxu0 0.0
    %1642 = vmatpush1.msra.mxu0 0.0
    %1643 = vmatprep.subr.mxu0 0.0
    %1644 = vmatpush1.msra.mxu0 0.0
    %1645 = vmatprep.subr.mxu0 0.0
    %1646 = vmatpush1.msra.mxu0 0.0
    %1647 = vmatprep.subr.mxu0 0.0
    %1648 = vmatpush1.msra.mxu0 0.0
    %1649 = vmatprep.subr.mxu0 0.0
    %1650 = vmatpush1.msra.mxu0 0.0
    %1651 = vmatprep.subr.mxu0 0.0
    %1652 = vmatpush1.msra.mxu0 0.0
    %1653 = vmatprep.subr.mxu0 0.0
    %1654 = vmatpush1.msra.mxu0 0.0
    %1655 = vmatprep.subr.mxu0 0.0
    %1656 = vmatpush1.msra.mxu0 0.0
    %1657 = vmatprep.subr.mxu0 0.0
    %1658 = vmatpush1.msra.mxu0 0.0
    %1659 = vmatprep.subr.mxu0 0.0
    %1660 = vmatpush1.msra.mxu0 0.0
    %1661 = vmatprep.subr.mxu0 0.0
    %1662 = vmatpush1.msra.mxu0 0.0
    %1663 = vmatprep.mubr.f32.mxu0 0.0
    %v1664 = vand.u32 %v1131, 4294901760
    %1665 = vmatmul.mubr.f32.gmra.mrb[0].mxu0 %v1664
    %v1666 = vpop.f32.mrb[0].mxu0
    %v1667 = vadd.f32 %v1588, %v1666
    %v1668 = vpop.f32.mrb[0].mxu0
    %1669 = vdwg.mxu0
    %1671 = vrot.lane.b32.xlu0 %v1667, 64
    %v1672 = vpop.permute.xlu0 %1671
    %vm1674 = vcmask 785920
    %1675 = vst.msk [vmem:[#allocation2] sm:$0xff] %vm1674, %v1672
    %1676 = vset.pattern.permute.xlu0 3
    %1677 = vperm.xlu0 %1676, %v12
    %v1678 = vpop.permute.xlu0 %1677
    %vm1679 = vcmp.eq.s32.totalorder %v1678, %v22
    %v1680 = vsel %vm1679, 1, 0
    %v1681 = vcvt.s32.f32 %v1680
    %v1683 = vsel %vm29, %v1681, 0
    %1685 = vmatprep.subr.mxu0 0.0
    %v1686 = vand.u32 %v13, 4294901760
    %1687 = vmatpush1.msra.mxu0 %v1686
    %1688 = vmatprep.subr.mxu0 0.0
    %v1689 = vand.u32 %v14, 4294901760
    %1690 = vmatpush1.msra.mxu0 %v1689
    %1691 = vmatprep.subr.mxu0 0.0
    %v1692 = vand.u32 %v15, 4294901760
    %1693 = vmatpush1.msra.mxu0 %v1692
    %1694 = vmatprep.subr.mxu0 0.0
    %v1695 = vand.u32 %v16, 4294901760
    %1696 = vmatpush1.msra.mxu0 %v1695
    %1697 = vmatprep.subr.mxu0 0.0
    %v1698 = vand.u32 %v17, 4294901760
    %1699 = vmatpush1.msra.mxu0 %v1698
    %1700 = vmatprep.subr.mxu0 0.0
    %v1701 = vand.u32 %v18, 4294901760
    %1702 = vmatpush1.msra.mxu0 %v1701
    %1703 = vmatprep.subr.mxu0 0.0
    %v1704 = vand.u32 %v19, 4294901760
    %1705 = vmatpush1.msra.mxu0 %v1704
    %1706 = vmatprep.subr.mxu0 0.0
    %v1707 = vand.u32 %v20, 4294901760
    %1708 = vmatpush1.msra.mxu0 %v1707
    %1709 = vmatprep.subr.mxu0 0.0
    %1710 = vmatpush1.msra.mxu0 0.0
    %1711 = vmatprep.subr.mxu0 0.0
    %1712 = vmatpush1.msra.mxu0 0.0
    %1713 = vmatprep.subr.mxu0 0.0
    %1714 = vmatpush1.msra.mxu0 0.0
    %1715 = vmatprep.subr.mxu0 0.0
    %1716 = vmatpush1.msra.mxu0 0.0
    %1717 = vmatprep.subr.mxu0 0.0
    %1718 = vmatpush1.msra.mxu0 0.0
    %1719 = vmatprep.subr.mxu0 0.0
    %1720 = vmatpush1.msra.mxu0 0.0
    %1721 = vmatprep.subr.mxu0 0.0
    %1722 = vmatpush1.msra.mxu0 0.0
    %1723 = vmatprep.subr.mxu0 0.0
    %1724 = vmatpush1.msra.mxu0 0.0
    %1725 = vmatprep.subr.mxu0 0.0
    %1726 = vmatpush1.msra.mxu0 0.0
    %1727 = vmatprep.subr.mxu0 0.0
    %1728 = vmatpush1.msra.mxu0 0.0
    %1729 = vmatprep.subr.mxu0 0.0
    %1730 = vmatpush1.msra.mxu0 0.0
    %1731 = vmatprep.subr.mxu0 0.0
    %1732 = vmatpush1.msra.mxu0 0.0
    %1733 = vmatprep.subr.mxu0 0.0
    %1734 = vmatpush1.msra.mxu0 0.0
    %1735 = vmatprep.subr.mxu0 0.0
    %1736 = vmatpush1.msra.mxu0 0.0
    %1737 = vmatprep.subr.mxu0 0.0
    %1738 = vmatpush1.msra.mxu0 0.0
    %1739 = vmatprep.subr.mxu0 0.0
    %1740 = vmatpush1.msra.mxu0 0.0
    %1741 = vmatprep.subr.mxu0 0.0
    %1742 = vmatpush1.msra.mxu0 0.0
    %1743 = vmatprep.subr.mxu0 0.0
    %1744 = vmatpush1.msra.mxu0 0.0
    %1745 = vmatprep.subr.mxu0 0.0
    %1746 = vmatpush1.msra.mxu0 0.0
    %1747 = vmatprep.subr.mxu0 0.0
    %1748 = vmatpush1.msra.mxu0 0.0
    %1749 = vmatprep.subr.mxu0 0.0
    %1750 = vmatpush1.msra.mxu0 0.0
    %1751 = vmatprep.subr.mxu0 0.0
    %1752 = vmatpush1.msra.mxu0 0.0
    %1753 = vmatprep.subr.mxu0 0.0
    %1754 = vmatpush1.msra.mxu0 0.0
    %1755 = vmatprep.subr.mxu0 0.0
    %1756 = vmatpush1.msra.mxu0 0.0
    %1757 = vmatprep.mubr.f32.mxu0 0.0
    %v1758 = vand.u32 %v1683, 4294901760
    %v1759 = vsub.f32 %v1683, %v1758
    %v1760 = vand.u32 %v1759, 4294901760
    %v1761 = vsub.f32 %v1759, %v1760
    %v1762 = vand.u32 %v1761, 4294901760
    %1763 = vmatmul.mubr.f32.gmra.mrb[0].mxu0 %v1762
    %v1764 = vpop.f32.mrb[0].mxu0
    %v1765 = vadd.f32 0.0, %v1764
    %v1766 = vpop.f32.mrb[0].mxu0
    %1767 = vdwg.mxu0
    %1768 = vmatprep.subr.mxu0 0.0
    %v1769 = vand.u32 %v13, 4294901760
    %v1770 = vsub.f32 %v13, %v1769
    %v1771 = vand.u32 %v1770, 4294901760
    %v1772 = vsub.f32 %v1770, %v1771
    %v1773 = vand.u32 %v1772, 4294901760
    %1774 = vmatpush1.msra.mxu0 %v1773
    %1775 = vmatprep.subr.mxu0 0.0
    %v1776 = vand.u32 %v14, 4294901760
    %v1777 = vsub.f32 %v14, %v1776
    %v1778 = vand.u32 %v1777, 4294901760
    %v1779 = vsub.f32 %v1777, %v1778
    %v1780 = vand.u32 %v1779, 4294901760
    %1781 = vmatpush1.msra.mxu0 %v1780
    %1782 = vmatprep.subr.mxu0 0.0
    %v1783 = vand.u32 %v15, 4294901760
    %v1784 = vsub.f32 %v15, %v1783
    %v1785 = vand.u32 %v1784, 4294901760
    %v1786 = vsub.f32 %v1784, %v1785
    %v1787 = vand.u32 %v1786, 4294901760
    %1788 = vmatpush1.msra.mxu0 %v1787
    %1789 = vmatprep.subr.mxu0 0.0
    %v1790 = vand.u32 %v16, 4294901760
    %v1791 = vsub.f32 %v16, %v1790
    %v1792 = vand.u32 %v1791, 4294901760
    %v1793 = vsub.f32 %v1791, %v1792
    %v1794 = vand.u32 %v1793, 4294901760
    %1795 = vmatpush1.msra.mxu0 %v1794
    %1796 = vmatprep.subr.mxu0 0.0
    %v1797 = vand.u32 %v17, 4294901760
    %v1798 = vsub.f32 %v17, %v1797
    %v1799 = vand.u32 %v1798, 4294901760
    %v1800 = vsub.f32 %v1798, %v1799
    %v1801 = vand.u32 %v1800, 4294901760
    %1802 = vmatpush1.msra.mxu0 %v1801
    %1803 = vmatprep.subr.mxu0 0.0
    %v1804 = vand.u32 %v18, 4294901760
    %v1805 = vsub.f32 %v18, %v1804
    %v1806 = vand.u32 %v1805, 4294901760
    %v1807 = vsub.f32 %v1805, %v1806
    %v1808 = vand.u32 %v1807, 4294901760
    %1809 = vmatpush1.msra.mxu0 %v1808
    %1810 = vmatprep.subr.mxu0 0.0
    %v1811 = vand.u32 %v19, 4294901760
    %v1812 = vsub.f32 %v19, %v1811
    %v1813 = vand.u32 %v1812, 4294901760
    %v1814 = vsub.f32 %v1812, %v1813
    %v1815 = vand.u32 %v1814, 4294901760
    %1816 = vmatpush1.msra.mxu0 %v1815
    %1817 = vmatprep.subr.mxu0 0.0
    %v1818 = vand.u32 %v20, 4294901760
    %v1819 = vsub.f32 %v20, %v1818
    %v1820 = vand.u32 %v1819, 4294901760
    %v1821 = vsub.f32 %v1819, %v1820
    %v1822 = vand.u32 %v1821, 4294901760
    %1823 = vmatpush1.msra.mxu0 %v1822
    %1824 = vmatprep.subr.mxu0 0.0
    %1825 = vmatpush1.msra.mxu0 0.0
    %1826 = vmatprep.subr.mxu0 0.0
    %1827 = vmatpush1.msra.mxu0 0.0
    %1828 = vmatprep.subr.mxu0 0.0
    %1829 = vmatpush1.msra.mxu0 0.0
    %1830 = vmatprep.subr.mxu0 0.0
    %1831 = vmatpush1.msra.mxu0 0.0
    %1832 = vmatprep.subr.mxu0 0.0
    %1833 = vmatpush1.msra.mxu0 0.0
    %1834 = vmatprep.subr.mxu0 0.0
    %1835 = vmatpush1.msra.mxu0 0.0
    %1836 = vmatprep.subr.mxu0 0.0
    %1837 = vmatpush1.msra.mxu0 0.0
    %1838 = vmatprep.subr.mxu0 0.0
    %1839 = vmatpush1.msra.mxu0 0.0
    %1840 = vmatprep.subr.mxu0 0.0
    %1841 = vmatpush1.msra.mxu0 0.0
    %1842 = vmatprep.subr.mxu0 0.0
    %1843 = vmatpush1.msra.mxu0 0.0
    %1844 = vmatprep.subr.mxu0 0.0
    %1845 = vmatpush1.msra.mxu0 0.0
    %1846 = vmatprep.subr.mxu0 0.0
    %1847 = vmatpush1.msra.mxu0 0.0
    %1848 = vmatprep.subr.mxu0 0.0
    %1849 = vmatpush1.msra.mxu0 0.0
    %1850 = vmatprep.subr.mxu0 0.0
    %1851 = vmatpush1.msra.mxu0 0.0
    %1852 = vmatprep.subr.mxu0 0.0
    %1853 = vmatpush1.msra.mxu0 0.0
    %1854 = vmatprep.subr.mxu0 0.0
    %1855 = vmatpush1.msra.mxu0 0.0
    %1856 = vmatprep.subr.mxu0 0.0
    %1857 = vmatpush1.msra.mxu0 0.0
    %1858 = vmatprep.subr.mxu0 0.0
    %1859 = vmatpush1.msra.mxu0 0.0
    %1860 = vmatprep.subr.mxu0 0.0
    %1861 = vmatpush1.msra.mxu0 0.0
    %1862 = vmatprep.subr.mxu0 0.0
    %1863 = vmatpush1.msra.mxu0 0.0
    %1864 = vmatprep.subr.mxu0 0.0
    %1865 = vmatpush1.msra.mxu0 0.0
    %1866 = vmatprep.subr.mxu0 0.0
    %1867 = vmatpush1.msra.mxu0 0.0
    %1868 = vmatprep.subr.mxu0 0.0
    %1869 = vmatpush1.msra.mxu0 0.0
    %1870 = vmatprep.subr.mxu0 0.0
    %1871 = vmatpush1.msra.mxu0 0.0
    %1872 = vmatprep.mubr.f32.mxu0 0.0
    %v1873 = vand.u32 %v1683, 4294901760
    %1874 = vmatmul.mubr.f32.gmra.mrb[0].mxu0 %v1873
    %v1875 = vpop.f32.mrb[0].mxu0
    %v1876 = vadd.f32 %v1765, %v1875
    %v1877 = vpop.f32.mrb[0].mxu0
    %1878 = vdwg.mxu0
    %1879 = vmatprep.subr.mxu0 0.0
    %v1880 = vand.u32 %v13, 4294901760
    %v1881 = vsub.f32 %v13, %v1880
    %1882 = vmatpush1.msra.mxu0 %v1881
    %1883 = vmatprep.subr.mxu0 0.0
    %v1884 = vand.u32 %v14, 4294901760
    %v1885 = vsub.f32 %v14, %v1884
    %1886 = vmatpush1.msra.mxu0 %v1885
    %1887 = vmatprep.subr.mxu0 0.0
    %v1888 = vand.u32 %v15, 4294901760
    %v1889 = vsub.f32 %v15, %v1888
    %1890 = vmatpush1.msra.mxu0 %v1889
    %1891 = vmatprep.subr.mxu0 0.0
    %v1892 = vand.u32 %v16, 4294901760
    %v1893 = vsub.f32 %v16, %v1892
    %1894 = vmatpush1.msra.mxu0 %v1893
    %1895 = vmatprep.subr.mxu0 0.0
    %v1896 = vand.u32 %v17, 4294901760
    %v1897 = vsub.f32 %v17, %v1896
    %1898 = vmatpush1.msra.mxu0 %v1897
    %1899 = vmatprep.subr.mxu0 0.0
    %v1900 = vand.u32 %v18, 4294901760
    %v1901 = vsub.f32 %v18, %v1900
    %1902 = vmatpush1.msra.mxu0 %v1901
    %1903 = vmatprep.subr.mxu0 0.0
    %v1904 = vand.u32 %v19, 4294901760
    %v1905 = vsub.f32 %v19, %v1904
    %1906 = vmatpush1.msra.mxu0 %v1905
    %1907 = vmatprep.subr.mxu0 0.0
    %v1908 = vand.u32 %v20, 4294901760
    %v1909 = vsub.f32 %v20, %v1908
    %1910 = vmatpush1.msra.mxu0 %v1909
    %1911 = vmatprep.subr.mxu0 0.0
    %1912 = vmatpush1.msra.mxu0 0.0
    %1913 = vmatprep.subr.mxu0 0.0
    %1914 = vmatpush1.msra.mxu0 0.0
    %1915 = vmatprep.subr.mxu0 0.0
    %1916 = vmatpush1.msra.mxu0 0.0
    %1917 = vmatprep.subr.mxu0 0.0
    %1918 = vmatpush1.msra.mxu0 0.0
    %1919 = vmatprep.subr.mxu0 0.0
    %1920 = vmatpush1.msra.mxu0 0.0
    %1921 = vmatprep.subr.mxu0 0.0
    %1922 = vmatpush1.msra.mxu0 0.0
    %1923 = vmatprep.subr.mxu0 0.0
    %1924 = vmatpush1.msra.mxu0 0.0
    %1925 = vmatprep.subr.mxu0 0.0
    %1926 = vmatpush1.msra.mxu0 0.0
    %1927 = vmatprep.subr.mxu0 0.0
    %1928 = vmatpush1.msra.mxu0 0.0
    %1929 = vmatprep.subr.mxu0 0.0
    %1930 = vmatpush1.msra.mxu0 0.0
    %1931 = vmatprep.subr.mxu0 0.0
    %1932 = vmatpush1.msra.mxu0 0.0
    %1933 = vmatprep.subr.mxu0 0.0
    %1934 = vmatpush1.msra.mxu0 0.0
    %1935 = vmatprep.subr.mxu0 0.0
    %1936 = vmatpush1.msra.mxu0 0.0
    %1937 = vmatprep.subr.mxu0 0.0
    %1938 = vmatpush1.msra.mxu0 0.0
    %1939 = vmatprep.subr.mxu0 0.0
    %1940 = vmatpush1.msra.mxu0 0.0
    %1941 = vmatprep.subr.mxu0 0.0
    %1942 = vmatpush1.msra.mxu0 0.0
    %1943 = vmatprep.subr.mxu0 0.0
    %1944 = vmatpush1.msra.mxu0 0.0
    %1945 = vmatprep.subr.mxu0 0.0
    %1946 = vmatpush1.msra.mxu0 0.0
    %1947 = vmatprep.subr.mxu0 0.0
    %1948 = vmatpush1.msra.mxu0 0.0
    %1949 = vmatprep.subr.mxu0 0.0
    %1950 = vmatpush1.msra.mxu0 0.0
    %1951 = vmatprep.subr.mxu0 0.0
    %1952 = vmatpush1.msra.mxu0 0.0
    %1953 = vmatprep.subr.mxu0 0.0
    %1954 = vmatpush1.msra.mxu0 0.0
    %1955 = vmatprep.subr.mxu0 0.0
    %1956 = vmatpush1.msra.mxu0 0.0
    %1957 = vmatprep.subr.mxu0 0.0
    %1958 = vmatpush1.msra.mxu0 0.0
    %1959 = vmatprep.mubr.f32.mxu0 0.0
    %v1960 = vand.u32 %v1683, 4294901760
    %v1961 = vsub.f32 %v1683, %v1960
    %1962 = vmatmul.mubr.f32.gmra.mrb[0].mxu0 %v1961
    %v1963 = vpop.f32.mrb[0].mxu0
    %v1964 = vadd.f32 %v1876, %v1963
    %v1965 = vpop.f32.mrb[0].mxu0
    %1966 = vdwg.mxu0
    %1967 = vmatprep.subr.mxu0 0.0
    %v1968 = vand.u32 %v13, 4294901760
    %1969 = vmatpush1.msra.mxu0 %v1968
    %1970 = vmatprep.subr.mxu0 0.0
    %v1971 = vand.u32 %v14, 4294901760
    %1972 = vmatpush1.msra.mxu0 %v1971
    %1973 = vmatprep.subr.mxu0 0.0
    %v1974 = vand.u32 %v15, 4294901760
    %1975 = vmatpush1.msra.mxu0 %v1974
    %1976 = vmatprep.subr.mxu0 0.0
    %v1977 = vand.u32 %v16, 4294901760
    %1978 = vmatpush1.msra.mxu0 %v1977
    %1979 = vmatprep.subr.mxu0 0.0
    %v1980 = vand.u32 %v17, 4294901760
    %1981 = vmatpush1.msra.mxu0 %v1980
    %1982 = vmatprep.subr.mxu0 0.0
    %v1983 = vand.u32 %v18, 4294901760
    %1984 = vmatpush1.msra.mxu0 %v1983
    %1985 = vmatprep.subr.mxu0 0.0
    %v1986 = vand.u32 %v19, 4294901760
    %1987 = vmatpush1.msra.mxu0 %v1986
    %1988 = vmatprep.subr.mxu0 0.0
    %v1989 = vand.u32 %v20, 4294901760
    %1990 = vmatpush1.msra.mxu0 %v1989
    %1991 = vmatprep.subr.mxu0 0.0
    %1992 = vmatpush1.msra.mxu0 0.0
    %1993 = vmatprep.subr.mxu0 0.0
    %1994 = vmatpush1.msra.mxu0 0.0
    %1995 = vmatprep.subr.mxu0 0.0
    %1996 = vmatpush1.msra.mxu0 0.0
    %1997 = vmatprep.subr.mxu0 0.0
    %1998 = vmatpush1.msra.mxu0 0.0
    %1999 = vmatprep.subr.mxu0 0.0
    %2000 = vmatpush1.msra.mxu0 0.0
    %2001 = vmatprep.subr.mxu0 0.0
    %2002 = vmatpush1.msra.mxu0 0.0
    %2003 = vmatprep.subr.mxu0 0.0
    %2004 = vmatpush1.msra.mxu0 0.0
    %2005 = vmatprep.subr.mxu0 0.0
    %2006 = vmatpush1.msra.mxu0 0.0
    %2007 = vmatprep.subr.mxu0 0.0
    %2008 = vmatpush1.msra.mxu0 0.0
    %2009 = vmatprep.subr.mxu0 0.0
    %2010 = vmatpush1.msra.mxu0 0.0
    %2011 = vmatprep.subr.mxu0 0.0
    %2012 = vmatpush1.msra.mxu0 0.0
    %2013 = vmatprep.subr.mxu0 0.0
    %2014 = vmatpush1.msra.mxu0 0.0
    %2015 = vmatprep.subr.mxu0 0.0
    %2016 = vmatpush1.msra.mxu0 0.0
    %2017 = vmatprep.subr.mxu0 0.0
    %2018 = vmatpush1.msra.mxu0 0.0
    %2019 = vmatprep.subr.mxu0 0.0
    %2020 = vmatpush1.msra.mxu0 0.0
    %2021 = vmatprep.subr.mxu0 0.0
    %2022 = vmatpush1.msra.mxu0 0.0
    %2023 = vmatprep.subr.mxu0 0.0
    %2024 = vmatpush1.msra.mxu0 0.0
    %2025 = vmatprep.subr.mxu0 0.0
    %2026 = vmatpush1.msra.mxu0 0.0
    %2027 = vmatprep.subr.mxu0 0.0
    %2028 = vmatpush1.msra.mxu0 0.0
    %2029 = vmatprep.subr.mxu0 0.0
    %2030 = vmatpush1.msra.mxu0 0.0
    %2031 = vmatprep.subr.mxu0 0.0
    %2032 = vmatpush1.msra.mxu0 0.0
    %2033 = vmatprep.subr.mxu0 0.0
    %2034 = vmatpush1.msra.mxu0 0.0
    %2035 = vmatprep.subr.mxu0 0.0
    %2036 = vmatpush1.msra.mxu0 0.0
    %2037 = vmatprep.subr.mxu0 0.0
    %2038 = vmatpush1.msra.mxu0 0.0
    %2039 = vmatprep.mubr.f32.mxu0 0.0
    %v2040 = vand.u32 %v1683, 4294901760
    %v2041 = vsub.f32 %v1683, %v2040
    %v2042 = vand.u32 %v2041, 4294901760
    %2043 = vmatmul.mubr.f32.gmra.mrb[0].mxu0 %v2042
    %v2044 = vpop.f32.mrb[0].mxu0
    %v2045 = vadd.f32 %v1964, %v2044
    %v2046 = vpop.f32.mrb[0].mxu0
    %2047 = vdwg.mxu0
    %2048 = vmatprep.subr.mxu0 0.0
    %v2049 = vand.u32 %v13, 4294901760
    %v2050 = vsub.f32 %v13, %v2049
    %v2051 = vand.u32 %v2050, 4294901760
    %2052 = vmatpush1.msra.mxu0 %v2051
    %2053 = vmatprep.subr.mxu0 0.0
    %v2054 = vand.u32 %v14, 4294901760
    %v2055 = vsub.f32 %v14, %v2054
    %v2056 = vand.u32 %v2055, 4294901760
    %2057 = vmatpush1.msra.mxu0 %v2056
    %2058 = vmatprep.subr.mxu0 0.0
    %v2059 = vand.u32 %v15, 4294901760
    %v2060 = vsub.f32 %v15, %v2059
    %v2061 = vand.u32 %v2060, 4294901760
    %2062 = vmatpush1.msra.mxu0 %v2061
    %2063 = vmatprep.subr.mxu0 0.0
    %v2064 = vand.u32 %v16, 4294901760
    %v2065 = vsub.f32 %v16, %v2064
    %v2066 = vand.u32 %v2065, 4294901760
    %2067 = vmatpush1.msra.mxu0 %v2066
    %2068 = vmatprep.subr.mxu0 0.0
    %v2069 = vand.u32 %v17, 4294901760
    %v2070 = vsub.f32 %v17, %v2069
    %v2071 = vand.u32 %v2070, 4294901760
    %2072 = vmatpush1.msra.mxu0 %v2071
    %2073 = vmatprep.subr.mxu0 0.0
    %v2074 = vand.u32 %v18, 4294901760
    %v2075 = vsub.f32 %v18, %v2074
    %v2076 = vand.u32 %v2075, 4294901760
    %2077 = vmatpush1.msra.mxu0 %v2076
    %2078 = vmatprep.subr.mxu0 0.0
    %v2079 = vand.u32 %v19, 4294901760
    %v2080 = vsub.f32 %v19, %v2079
    %v2081 = vand.u32 %v2080, 4294901760
    %2082 = vmatpush1.msra.mxu0 %v2081
    %2083 = vmatprep.subr.mxu0 0.0
    %v2084 = vand.u32 %v20, 4294901760
    %v2085 = vsub.f32 %v20, %v2084
    %v2086 = vand.u32 %v2085, 4294901760
    %2087 = vmatpush1.msra.mxu0 %v2086
    %2088 = vmatprep.subr.mxu0 0.0
    %2089 = vmatpush1.msra.mxu0 0.0
    %2090 = vmatprep.subr.mxu0 0.0
    %2091 = vmatpush1.msra.mxu0 0.0
    %2092 = vmatprep.subr.mxu0 0.0
    %2093 = vmatpush1.msra.mxu0 0.0
    %2094 = vmatprep.subr.mxu0 0.0
    %2095 = vmatpush1.msra.mxu0 0.0
    %2096 = vmatprep.subr.mxu0 0.0
    %2097 = vmatpush1.msra.mxu0 0.0
    %2098 = vmatprep.subr.mxu0 0.0
    %2099 = vmatpush1.msra.mxu0 0.0
    %2100 = vmatprep.subr.mxu0 0.0
    %2101 = vmatpush1.msra.mxu0 0.0
    %2102 = vmatprep.subr.mxu0 0.0
    %2103 = vmatpush1.msra.mxu0 0.0
    %2104 = vmatprep.subr.mxu0 0.0
    %2105 = vmatpush1.msra.mxu0 0.0
    %2106 = vmatprep.subr.mxu0 0.0
    %2107 = vmatpush1.msra.mxu0 0.0
    %2108 = vmatprep.subr.mxu0 0.0
    %2109 = vmatpush1.msra.mxu0 0.0
    %2110 = vmatprep.subr.mxu0 0.0
    %2111 = vmatpush1.msra.mxu0 0.0
    %2112 = vmatprep.subr.mxu0 0.0
    %2113 = vmatpush1.msra.mxu0 0.0
    %2114 = vmatprep.subr.mxu0 0.0
    %2115 = vmatpush1.msra.mxu0 0.0
    %2116 = vmatprep.subr.mxu0 0.0
    %2117 = vmatpush1.msra.mxu0 0.0
    %2118 = vmatprep.subr.mxu0 0.0
    %2119 = vmatpush1.msra.mxu0 0.0
    %2120 = vmatprep.subr.mxu0 0.0
    %2121 = vmatpush1.msra.mxu0 0.0
    %2122 = vmatprep.subr.mxu0 0.0
    %2123 = vmatpush1.msra.mxu0 0.0
    %2124 = vmatprep.subr.mxu0 0.0
    %2125 = vmatpush1.msra.mxu0 0.0
    %2126 = vmatprep.subr.mxu0 0.0
    %2127 = vmatpush1.msra.mxu0 0.0
    %2128 = vmatprep.subr.mxu0 0.0
    %2129 = vmatpush1.msra.mxu0 0.0
    %2130 = vmatprep.subr.mxu0 0.0
    %2131 = vmatpush1.msra.mxu0 0.0
    %2132 = vmatprep.subr.mxu0 0.0
    %2133 = vmatpush1.msra.mxu0 0.0
    %2134 = vmatprep.subr.mxu0 0.0
    %2135 = vmatpush1.msra.mxu0 0.0
    %2136 = vmatprep.mubr.f32.mxu0 0.0
    %v2137 = vand.u32 %v1683, 4294901760
    %2138 = vmatmul.mubr.f32.gmra.mrb[0].mxu0 %v2137
    %v2139 = vpop.f32.mrb[0].mxu0
    %v2140 = vadd.f32 %v2045, %v2139
    %v2141 = vpop.f32.mrb[0].mxu0
    %2142 = vdwg.mxu0
    %2143 = vmatprep.subr.mxu0 0.0
    %v2144 = vand.u32 %v13, 4294901760
    %2145 = vmatpush1.msra.mxu0 %v2144
    %2146 = vmatprep.subr.mxu0 0.0
    %v2147 = vand.u32 %v14, 4294901760
    %2148 = vmatpush1.msra.mxu0 %v2147
    %2149 = vmatprep.subr.mxu0 0.0
    %v2150 = vand.u32 %v15, 4294901760
    %2151 = vmatpush1.msra.mxu0 %v2150
    %2152 = vmatprep.subr.mxu0 0.0
    %v2153 = vand.u32 %v16, 4294901760
    %2154 = vmatpush1.msra.mxu0 %v2153
    %2155 = vmatprep.subr.mxu0 0.0
    %v2156 = vand.u32 %v17, 4294901760
    %2157 = vmatpush1.msra.mxu0 %v2156
    %2158 = vmatprep.subr.mxu0 0.0
    %v2159 = vand.u32 %v18, 4294901760
    %2160 = vmatpush1.msra.mxu0 %v2159
    %2161 = vmatprep.subr.mxu0 0.0
    %v2162 = vand.u32 %v19, 4294901760
    %2163 = vmatpush1.msra.mxu0 %v2162
    %2164 = vmatprep.subr.mxu0 0.0
    %v2165 = vand.u32 %v20, 4294901760
    %2166 = vmatpush1.msra.mxu0 %v2165
    %2167 = vmatprep.subr.mxu0 0.0
    %2168 = vmatpush1.msra.mxu0 0.0
    %2169 = vmatprep.subr.mxu0 0.0
    %2170 = vmatpush1.msra.mxu0 0.0
    %2171 = vmatprep.subr.mxu0 0.0
    %2172 = vmatpush1.msra.mxu0 0.0
    %2173 = vmatprep.subr.mxu0 0.0
    %2174 = vmatpush1.msra.mxu0 0.0
    %2175 = vmatprep.subr.mxu0 0.0
    %2176 = vmatpush1.msra.mxu0 0.0
    %2177 = vmatprep.subr.mxu0 0.0
    %2178 = vmatpush1.msra.mxu0 0.0
    %2179 = vmatprep.subr.mxu0 0.0
    %2180 = vmatpush1.msra.mxu0 0.0
    %2181 = vmatprep.subr.mxu0 0.0
    %2182 = vmatpush1.msra.mxu0 0.0
    %2183 = vmatprep.subr.mxu0 0.0
    %2184 = vmatpush1.msra.mxu0 0.0
    %2185 = vmatprep.subr.mxu0 0.0
    %2186 = vmatpush1.msra.mxu0 0.0
    %2187 = vmatprep.subr.mxu0 0.0
    %2188 = vmatpush1.msra.mxu0 0.0
    %2189 = vmatprep.subr.mxu0 0.0
    %2190 = vmatpush1.msra.mxu0 0.0
    %2191 = vmatprep.subr.mxu0 0.0
    %2192 = vmatpush1.msra.mxu0 0.0
    %2193 = vmatprep.subr.mxu0 0.0
    %2194 = vmatpush1.msra.mxu0 0.0
    %2195 = vmatprep.subr.mxu0 0.0
    %2196 = vmatpush1.msra.mxu0 0.0
    %2197 = vmatprep.subr.mxu0 0.0
    %2198 = vmatpush1.msra.mxu0 0.0
    %2199 = vmatprep.subr.mxu0 0.0
    %2200 = vmatpush1.msra.mxu0 0.0
    %2201 = vmatprep.subr.mxu0 0.0
    %2202 = vmatpush1.msra.mxu0 0.0
    %2203 = vmatprep.subr.mxu0 0.0
    %2204 = vmatpush1.msra.mxu0 0.0
    %2205 = vmatprep.subr.mxu0 0.0
    %2206 = vmatpush1.msra.mxu0 0.0
    %2207 = vmatprep.subr.mxu0 0.0
    %2208 = vmatpush1.msra.mxu0 0.0
    %2209 = vmatprep.subr.mxu0 0.0
    %2210 = vmatpush1.msra.mxu0 0.0
    %2211 = vmatprep.subr.mxu0 0.0
    %2212 = vmatpush1.msra.mxu0 0.0
    %2213 = vmatprep.subr.mxu0 0.0
    %2214 = vmatpush1.msra.mxu0 0.0
    %2215 = vmatprep.mubr.f32.mxu0 0.0
    %v2216 = vand.u32 %v1683, 4294901760
    %2217 = vmatmul.mubr.f32.gmra.mrb[0].mxu0 %v2216
    %v2218 = vpop.f32.mrb[0].mxu0
    %v2219 = vadd.f32 %v2140, %v2218
    %v2220 = vpop.f32.mrb[0].mxu0
    %2221 = vdwg.mxu0
    %2223 = vrot.lane.b32.xlu0 %v2219, 96
    %v2224 = vpop.permute.xlu0 %2223
    %vm2226 = vcmask 1048320
    %2227 = vst.msk [vmem:[#allocation2] sm:$0xff] %vm2226, %v2224
    // Predicated region
    $region10: #{tpu_custom_call.1} parent=1 // pred_check
      _
    $region11: #{tpu_custom_call.1} parent=1 // pred_check_branch
      %2229 = sbr.rel (0) target = $region13
    $region12: #{tpu_custom_call.1} parent=1 // pred_region
      %s2231 = ssub.s32 128, 128
      %2232 = vsyncadd [#allocation3], %s2231
      %s2234 = sshll.u32 [#allocation2], 4
      %s2235 = int_to_ptr.vmem [resolvable:$true] %s2234
      %2237 = dma.vmem_to_hbm [thread:$0]  %s2235, 128, %s2, [#allocation3]
    $region13: #{tpu_custom_call.1} parent=1 // pred_fallthru
      _
    // Predicated region
    $region14: #{tpu_custom_call.1} parent=1 // pred_check
      _
    $region15: #{tpu_custom_call.1} parent=1 // pred_check_branch
      %2239 = sbr.rel (0) target = $region17
    $region16: #{tpu_custom_call.1} parent=1 // pred_region
      %2240 = dma.done [#allocation3], 128
    $region17: #{tpu_custom_call.1} parent=1 // pred_fallthru
      _
    %2241 = vsyncpa [#allocation3], 1

</llo_original>
